<compile_context>
chip_gen: v5e
topology: v5e:2x2
jax: 0.10.0
libtpu: 0.0.40
codegen_flags: <defaults>
</compile_context>

<pallas_src>
import math
import functools

import jax
import jax.numpy as jnp
from jax import lax
from jax.experimental import pallas as pl
from jax.experimental.pallas import tpu as pltpu

_SQUARINGS = 4
_LANES = 128
_SUB = 8          # sub-row height processed per inner-loop iteration (1 vreg)
_TARGET_ROWS = 64 # target block height (rows of 128 voxels) per grid step


def _rot_y(radians):
    c = math.cos(radians)
    s = math.sin(radians)
    # matches src/Polyrigid.py::rotY (including the ~6e-17 cos term)
    return ((c, 0.0, -s, 0.0),
            (0.0, 1.0, 0.0, 0.0),
            (-s, 0.0, c, 0.0),
            (0.0, 0.0, 0.0, 1.0))


def _affine_mm(A, B, b_corner=0.0):
    """Product of 4x4 matrices held as 12 (8,128) arrays (top 3 rows,
    row-major).  B's implicit bottom row is [0, 0, 0, b_corner].
    Only the top 3 rows of the product are returned."""
    C = []
    for i in range(3):
        a0, a1, a2, a3 = A[4 * i], A[4 * i + 1], A[4 * i + 2], A[4 * i + 3]
        for j in range(4):
            acc = a0 * B[j] + a1 * B[4 + j] + a2 * B[8 + j]
            if j == 3 and b_corner != 0.0:
                acc = acc + (a3 if b_corner == 1.0 else b_corner * a3)
            C.append(acc)
    return C


def _lept_kernel(l_ref, w_ref, sp_ref, out_ref, *, num_components, block_rows,
                 fold):
    """Per-block LEPT.  Inputs: scaled log transforms (K,12) in SMEM, weights
    (K,S,128), sample points (3,S,128).  Output: pixel-space sample coords
    (ix,iy,iz) as (3,S,128).  The block is processed in (8,128) sub-rows."""
    K = num_components
    n_sub = block_rows // _SUB
    cxs, cxo, cys, cyo, czs, czo = fold

    # Hoist the K*12 SMEM scalar reads (log transforms already scaled by 2^-s).
    lvals = [[l_ref[k, r] for r in range(12)] for k in range(K)]

    def sub_body(j, carry):
        r0 = pl.multiple_of(j * _SUB, _SUB)

        # (1) X = sum_k w_k * L_k : top 3 rows only (bottom row is zero),
        #     K*12 scalar-broadcast FMAs on the VPU (no MXU needed for K ~ 8).
        X = [None] * 12
        for k in range(K):
            wk = w_ref[k, pl.ds(r0, _SUB), :]          # (8,128)
            for r in range(12):
                t = lvals[k][r] * wk
                X[r] = t if X[r] is None else X[r] + t

        # (2) expm(X): order-8 Paterson-Stockmeyer (4 affine products) plus
        #     _SQUARINGS squarings; 2^-s scaling already folded into l_ref.
        #     e^X ~= (I + X + X2/2 + X3/6) + X4 @ (I/24 + X/120 + X2/720
        #                                           + X3/5040 + X4/40320)
        X2 = _affine_mm(X, X)
        X3 = _affine_mm(X2, X)
        P0, Q = [], []
        for r in range(12):
            p = X[r] + (1.0 / 2.0) * X2[r] + (1.0 / 6.0) * X3[r]
            q = ((1.0 / 120.0) * X[r] + (1.0 / 720.0) * X2[r]
                 + (1.0 / 5040.0) * X3[r])
            if (r // 4) == (r % 4):
                p = p + 1.0
                q = q + (1.0 / 24.0)
            P0.append(p)
            Q.append(q)
        X4 = _affine_mm(X2, X2)
        Q = [Q[r] + (1.0 / 40320.0) * X4[r] for r in range(12)]
        R8 = _affine_mm(X4, Q, b_corner=1.0 / 24.0)   # Q's bottom row = [0,0,0,1/24]
        E = [P0[r] + R8[r] for r in range(12)]
        for _ in range(_SQUARINGS):
            E = _affine_mm(E, E, b_corner=1.0)        # E's bottom row = [0,0,0,1]

        # (3)+(4) fused: y = E @ (d,h,w,1); rotY(-pi/2) is (up to ~6e-17) a
        # swap of components 0<->2; the grid_sample unnormalization
        # ((g+1)*size-1)/2 is folded into compile-time constants, so we emit
        # pixel-space coordinates directly.  Homogeneous coord is exactly 1.
        d = sp_ref[0, pl.ds(r0, _SUB), :]
        h = sp_ref[1, pl.ds(r0, _SUB), :]
        w = sp_ref[2, pl.ds(r0, _SUB), :]
        y0 = E[0] * d + E[1] * h + E[2] * w + E[3]
        y1 = E[4] * d + E[5] * h + E[6] * w + E[7]
        y2 = E[8] * d + E[9] * h + E[10] * w + E[11]
        out_ref[0, pl.ds(r0, _SUB), :] = cxs * y2 + cxo   # ix  (x -> W)
        out_ref[1, pl.ds(r0, _SUB), :] = cys * y1 + cyo   # iy  (y -> H)
        out_ref[2, pl.ds(r0, _SUB), :] = czs * y0 + czo   # iz  (z -> D)
        return carry

    lax.fori_loop(0, n_sub, sub_body, 0, unroll=True)


def _choose_block_rows(R):
    """Block height (rows of 128 voxels).  Multiple of _SUB, capped at
    _TARGET_ROWS, and small enough that the (padded) grid has >= 2 steps when
    possible (v7x megacore load balance)."""
    if R < 2 * _SUB:
        return _SUB
    return max(_SUB, min(_TARGET_ROWS, (R // 2) // _SUB * _SUB))


def _trilinear_sample(img_flat, ix, iy, iz, D, H, W):
    """F.grid_sample semantics: trilinear, padding_mode='zeros',
    align_corners=False, with pixel-space coords (unnormalization already
    folded into the Pallas kernel).  img_flat: (C, P); ix/iy/iz: (P,)."""
    C, P = img_flat.shape
    x0 = jnp.floor(ix).astype(jnp.int32)
    y0 = jnp.floor(iy).astype(jnp.int32)
    z0 = jnp.floor(iz).astype(jnp.int32)
    tx = ix - x0.astype(jnp.float32)
    ty = iy - y0.astype(jnp.float32)
    tz = iz - z0.astype(jnp.float32)
    out = jnp.zeros((C, P), jnp.float32)
    for cz in (0, 1):
        zc = z0 + cz
        wz = tz if cz else 1.0 - tz
        vz = (zc >= 0) & (zc < D)
        for cy in (0, 1):
            yc = y0 + cy
            wy = ty if cy else 1.0 - ty
            vy = (yc >= 0) & (yc < H)
            for cx in (0, 1):
                xc = x0 + cx
                wx = tx if cx else 1.0 - tx
                vx = (xc >= 0) & (xc < W)
                wgt = wz * wy * wx * (vz & vy & vx).astype(jnp.float32)
                flat = jnp.clip((zc * H + yc) * W + xc, 0, P - 1)
                out = out + wgt[None, :] * img_flat[:, flat]
    return out


@jax.jit
def polyrigid_forward(img, weight_vol, rotations, translations):
    """img: (1, C, D, H, W) f32 (N*C must be 1 for exact torch-module semantics),
    weight_vol: (D, H, W, K) f32, rotations: (K, 9) f32, translations: (K, 3) f32."""
    N, C, D, H, W = img.shape
    K = rotations.shape[0]
    P = D * H * W
    assert N * C == 1, "Polyrigid's reshape requires N*C == 1"

    R = -(-P // _LANES)                 # rows of 128 voxels
    S = _choose_block_rows(R)           # block rows per grid step
    Rp = -(-R // S) * S                 # padded row count (even grid split)
    Pp = Rp * _LANES

    # scaled log-transform table [rot(9) | trans(3)] * 2^-s -> (K, 12) in SMEM.
    # (bottom row of every 4x4 log transform is zero and never materialized.)
    scale = 1.0 / float(2 ** _SQUARINGS)
    logx12 = (jnp.concatenate([rotations, translations], axis=1)
              .astype(jnp.float32) * scale)                       # (K, 12)

    # weight volume (D,H,W,K) -> (K, Rp, 128), zero-padded voxels are discarded.
    wflat = jnp.pad(weight_vol.reshape(P, K).astype(jnp.float32),
                    ((0, Pp - P), (0, 0)))
    wT = jnp.transpose(wflat).reshape(K, Rp, _LANES)

    # sample points (cartesian_prod of D,H,W linspaces) -> (3, Rp, 128)
    d = jnp.linspace(-1.0, 1.0, D, dtype=jnp.float32)
    h = jnp.linspace(-1.0, 1.0, H, dtype=jnp.float32)
    w = jnp.linspace(-1.0, 1.0, W, dtype=jnp.float32)
    dd, hh, ww = jnp.meshgrid(d, h, w, indexing="ij")
    sp = jnp.stack([dd.reshape(-1), hh.reshape(-1), ww.reshape(-1)], axis=0)
    sp = jnp.pad(sp, ((0, 0), (0, Pp - P))).reshape(3, Rp, _LANES)

    # grid_sample unnormalization constants folded into the kernel output:
    # ix = ((gx+1)*W - 1)/2 = 0.5*W*gx + 0.5*(W-1), etc.
    fold = (0.5 * W, 0.5 * (W - 1), 0.5 * H, 0.5 * (H - 1),
            0.5 * D, 0.5 * (D - 1))

    kernel = functools.partial(_lept_kernel, num_components=K, block_rows=S,
                               fold=fold)

    coords = pl.pallas_call(
        kernel,
        out_shape=jax.ShapeDtypeStruct((3, Rp, _LANES), jnp.float32),
        grid_spec=pltpu.PrefetchScalarGridSpec(
            num_scalar_prefetch=0,
            grid=(Rp // S,),
            in_specs=[
                # scaled log transforms: small scalar table, resident in SMEM
                pl.BlockSpec(memory_space=pltpu.MemorySpace.SMEM),
                # per-component weights, (S,128)-dense voxel tiles
                pl.BlockSpec((K, S, _LANES), lambda i: (0, i, 0)),
                # sample points (d, h, w)
                pl.BlockSpec((3, S, _LANES), lambda i: (0, i, 0)),
            ],
            out_specs=pl.BlockSpec((3, S, _LANES), lambda i: (0, i, 0)),
        ),
        compiler_params=pltpu.CompilerParams(
            dimension_semantics=("parallel",),
            vmem_limit_bytes=32 * 1024 * 1024),
    )(logx12, wT, sp)

    g = coords.reshape(3, Pp)[:, :P]
    ix, iy, iz = g[0], g[1], g[2]   # torch grid_sample: x->W, y->H, z->D

    # TODO(synk): the data-dependent per-voxel trilinear gather of grid_sample
    # has no robust Pallas TPU lowering (would need data-dependent DMA); it is
    # an O(P) XLA gather here, fused with the interpolation weights.
    img_flat = img.reshape(C, P).astype(jnp.float32)
    out = _trilinear_sample(img_flat, ix, iy, iz, D, H, W)
    return out.reshape(N, C, D, H, W)


# ---------------- plain-JAX reference (for correctness check only) ----------------

def _batched_expm(M, order=18, squarings=8):
    n = M.shape[-1]
    A = M / float(2 ** squarings)
    E = jnp.broadcast_to(jnp.eye(n, dtype=M.dtype), M.shape) + A
    term = A
    for k in range(2, order + 1):
        term = jnp.matmul(term, A) / float(k)
        E = E + term
    for _ in range(squarings):
        E = jnp.matmul(E, E)
    return E


def _reference_forward(img, weight_vol, rotations, translations):
    N, C, D, H, W = img.shape
    K = rotations.shape[0]
    P = D * H * W
    logx = jnp.concatenate(
        [rotations, translations, jnp.zeros((K, 4), jnp.float32)], axis=1)
    M = (weight_vol.reshape(P, K) @ logx).reshape(P, 4, 4)
    E = _batched_expm(M)
    view = jnp.array(_rot_y(-math.pi / 2.0), jnp.float32)
    Tm = jnp.einsum("ij,pjk->pik", view, E)
    d = jnp.linspace(-1.0, 1.0, D, dtype=jnp.float32)
    h = jnp.linspace(-1.0, 1.0, H, dtype=jnp.float32)
    w = jnp.linspace(-1.0, 1.0, W, dtype=jnp.float32)
    dd, hh, ww = jnp.meshgrid(d, h, w, indexing="ij")
    sp = jnp.stack([dd.reshape(-1), hh.reshape(-1), ww.reshape(-1),
                    jnp.ones((P,), jnp.float32)], axis=1)
    y = jnp.einsum("pij,pj->pi", Tm, sp)
    g = (y / y[:, 3:4])[:, :3]
    gx, gy, gz = g[:, 0], g[:, 1], g[:, 2]
    ix = ((gx + 1.0) * W - 1.0) / 2.0
    iy = ((gy + 1.0) * H - 1.0) / 2.0
    iz = ((gz + 1.0) * D - 1.0) / 2.0
    x0 = jnp.floor(ix).astype(jnp.int32)
    y0 = jnp.floor(iy).astype(jnp.int32)
    z0 = jnp.floor(iz).astype(jnp.int32)
    tx, ty, tz = ix - x0, iy - y0, iz - z0
    img_flat = img.reshape(C, P)
    out = jnp.zeros((C, P), jnp.float32)
    for cz in (0, 1):
        for cy in (0, 1):
            for cx in (0, 1):
                xc, yc, zc = x0 + cx, y0 + cy, z0 + cz
                valid = ((xc >= 0) & (xc < W) & (yc >= 0) & (yc < H)
                         & (zc >= 0) & (zc < D))
                wgt = ((tx if cx else 1.0 - tx) * (ty if cy else 1.0 - ty)
                       * (tz if cz else 1.0 - tz) * valid.astype(jnp.float32))
                flat = jnp.clip((zc * H + yc) * W + xc, 0, P - 1)
                out = out + wgt[None, :] * img_flat[:, flat]
    return out.reshape(N, C, D, H, W)


if __name__ == "__main__":
    key = jax.random.PRNGKey(0)
    N, C, D, H, W, K = 1, 1, 16, 16, 16, 8  # small (N,C,D,H,W) volume, K components
    k1, k2, k3, k4 = jax.random.split(key, 4)

    img = jax.random.uniform(k1, (N, C, D, H, W), jnp.float32)

    # TODO(synk): Commowick distance-transform weights (scipy.ndimage EDT) are
    # host-side __init__ preprocessing; a synthetic normalized weight volume is
    # used instead (component 0 left zero, as in _getWeightVolume).
    logits = jax.random.normal(k2, (D, H, W, K), jnp.float32)
    wvol = jax.nn.softmax(logits, axis=-1)
    wvol = wvol.at[..., 0].set(0.0)

    # nn.Parameter shapes from __init__ ((K, 9) and (K, 3)); deterministic init.
    rotations = 0.1 * jax.random.normal(k3, (K, 9), jnp.float32)
    translations = 0.1 * jax.random.normal(k4, (K, 3), jnp.float32)

    out = polyrigid_forward(img, wvol, rotations, translations)
    out = jax.block_until_ready(out)

    ref = _reference_forward(img, wvol, rotations, translations)
    err = float(jnp.max(jnp.abs(out - ref)))
    assert out.shape == (N, C, D, H, W)
    assert err < 1e-3, f"max abs err {err}"
    print("KERNEL_OK")
</pallas_src>

<mosaic_0001>
module attributes {stable_mosaic.version = 11 : i64} {
  func.func @_lept_kernel(%arg0: i32, %arg1: memref<8x12xf32, #tpu.memory_space<smem>>, %arg2: memref<8x16x128xf32, #tpu.memory_space<vmem>>, %arg3: memref<3x16x128xf32, #tpu.memory_space<vmem>>, %arg4: memref<3x16x128xf32, #tpu.memory_space<vmem>>) attributes {dimension_semantics = [#tpu.dimension_semantics<parallel>], iteration_bounds = array<i64: 2>, scalar_prefetch = 0 : i64, scratch_operands = 0 : i64, tpu.core_type = #tpu.core_type<tc>, window_params = [{transform_indices = @transform_0, window_bounds = array<i64: 8, 12>}, {transform_indices = @transform_1, window_bounds = array<i64: 8, 16, 128>}, {transform_indices = @transform_2, window_bounds = array<i64: 3, 16, 128>}, {transform_indices = @transform_3, window_bounds = array<i64: 3, 16, 128>}]} {
    %c0 = arith.constant 0 : index
    %c0_0 = arith.constant 0 : index
    %0 = memref.load %arg1[%c0, %c0_0] : memref<8x12xf32, #tpu.memory_space<smem>>
    %c0_1 = arith.constant 0 : index
    %c1 = arith.constant 1 : index
    %1 = memref.load %arg1[%c0_1, %c1] : memref<8x12xf32, #tpu.memory_space<smem>>
    %c0_2 = arith.constant 0 : index
    %c2 = arith.constant 2 : index
    %2 = memref.load %arg1[%c0_2, %c2] : memref<8x12xf32, #tpu.memory_space<smem>>
    %c0_3 = arith.constant 0 : index
    %c3 = arith.constant 3 : index
    %3 = memref.load %arg1[%c0_3, %c3] : memref<8x12xf32, #tpu.memory_space<smem>>
    %c0_4 = arith.constant 0 : index
    %c4 = arith.constant 4 : index
    %4 = memref.load %arg1[%c0_4, %c4] : memref<8x12xf32, #tpu.memory_space<smem>>
    %c0_5 = arith.constant 0 : index
    %c5 = arith.constant 5 : index
    %5 = memref.load %arg1[%c0_5, %c5] : memref<8x12xf32, #tpu.memory_space<smem>>
    %c0_6 = arith.constant 0 : index
    %c6 = arith.constant 6 : index
    %6 = memref.load %arg1[%c0_6, %c6] : memref<8x12xf32, #tpu.memory_space<smem>>
    %c0_7 = arith.constant 0 : index
    %c7 = arith.constant 7 : index
    %7 = memref.load %arg1[%c0_7, %c7] : memref<8x12xf32, #tpu.memory_space<smem>>
    %c0_8 = arith.constant 0 : index
    %c8 = arith.constant 8 : index
    %8 = memref.load %arg1[%c0_8, %c8] : memref<8x12xf32, #tpu.memory_space<smem>>
    %c0_9 = arith.constant 0 : index
    %c9 = arith.constant 9 : index
    %9 = memref.load %arg1[%c0_9, %c9] : memref<8x12xf32, #tpu.memory_space<smem>>
    %c0_10 = arith.constant 0 : index
    %c10 = arith.constant 10 : index
    %10 = memref.load %arg1[%c0_10, %c10] : memref<8x12xf32, #tpu.memory_space<smem>>
    %c0_11 = arith.constant 0 : index
    %c11 = arith.constant 11 : index
    %11 = memref.load %arg1[%c0_11, %c11] : memref<8x12xf32, #tpu.memory_space<smem>>
    %c1_12 = arith.constant 1 : index
    %c0_13 = arith.constant 0 : index
    %12 = memref.load %arg1[%c1_12, %c0_13] : memref<8x12xf32, #tpu.memory_space<smem>>
    %c1_14 = arith.constant 1 : index
    %c1_15 = arith.constant 1 : index
    %13 = memref.load %arg1[%c1_14, %c1_15] : memref<8x12xf32, #tpu.memory_space<smem>>
    %c1_16 = arith.constant 1 : index
    %c2_17 = arith.constant 2 : index
    %14 = memref.load %arg1[%c1_16, %c2_17] : memref<8x12xf32, #tpu.memory_space<smem>>
    %c1_18 = arith.constant 1 : index
    %c3_19 = arith.constant 3 : index
    %15 = memref.load %arg1[%c1_18, %c3_19] : memref<8x12xf32, #tpu.memory_space<smem>>
    %c1_20 = arith.constant 1 : index
    %c4_21 = arith.constant 4 : index
    %16 = memref.load %arg1[%c1_20, %c4_21] : memref<8x12xf32, #tpu.memory_space<smem>>
    %c1_22 = arith.constant 1 : index
    %c5_23 = arith.constant 5 : index
    %17 = memref.load %arg1[%c1_22, %c5_23] : memref<8x12xf32, #tpu.memory_space<smem>>
    %c1_24 = arith.constant 1 : index
    %c6_25 = arith.constant 6 : index
    %18 = memref.load %arg1[%c1_24, %c6_25] : memref<8x12xf32, #tpu.memory_space<smem>>
    %c1_26 = arith.constant 1 : index
    %c7_27 = arith.constant 7 : index
    %19 = memref.load %arg1[%c1_26, %c7_27] : memref<8x12xf32, #tpu.memory_space<smem>>
    %c1_28 = arith.constant 1 : index
    %c8_29 = arith.constant 8 : index
    %20 = memref.load %arg1[%c1_28, %c8_29] : memref<8x12xf32, #tpu.memory_space<smem>>
    %c1_30 = arith.constant 1 : index
    %c9_31 = arith.constant 9 : index
    %21 = memref.load %arg1[%c1_30, %c9_31] : memref<8x12xf32, #tpu.memory_space<smem>>
    %c1_32 = arith.constant 1 : index
    %c10_33 = arith.constant 10 : index
    %22 = memref.load %arg1[%c1_32, %c10_33] : memref<8x12xf32, #tpu.memory_space<smem>>
    %c1_34 = arith.constant 1 : index
    %c11_35 = arith.constant 11 : index
    %23 = memref.load %arg1[%c1_34, %c11_35] : memref<8x12xf32, #tpu.memory_space<smem>>
    %c2_36 = arith.constant 2 : index
    %c0_37 = arith.constant 0 : index
    %24 = memref.load %arg1[%c2_36, %c0_37] : memref<8x12xf32, #tpu.memory_space<smem>>
    %c2_38 = arith.constant 2 : index
    %c1_39 = arith.constant 1 : index
    %25 = memref.load %arg1[%c2_38, %c1_39] : memref<8x12xf32, #tpu.memory_space<smem>>
    %c2_40 = arith.constant 2 : index
    %c2_41 = arith.constant 2 : index
    %26 = memref.load %arg1[%c2_40, %c2_41] : memref<8x12xf32, #tpu.memory_space<smem>>
    %c2_42 = arith.constant 2 : index
    %c3_43 = arith.constant 3 : index
    %27 = memref.load %arg1[%c2_42, %c3_43] : memref<8x12xf32, #tpu.memory_space<smem>>
    %c2_44 = arith.constant 2 : index
    %c4_45 = arith.constant 4 : index
    %28 = memref.load %arg1[%c2_44, %c4_45] : memref<8x12xf32, #tpu.memory_space<smem>>
    %c2_46 = arith.constant 2 : index
    %c5_47 = arith.constant 5 : index
    %29 = memref.load %arg1[%c2_46, %c5_47] : memref<8x12xf32, #tpu.memory_space<smem>>
    %c2_48 = arith.constant 2 : index
    %c6_49 = arith.constant 6 : index
    %30 = memref.load %arg1[%c2_48, %c6_49] : memref<8x12xf32, #tpu.memory_space<smem>>
    %c2_50 = arith.constant 2 : index
    %c7_51 = arith.constant 7 : index
    %31 = memref.load %arg1[%c2_50, %c7_51] : memref<8x12xf32, #tpu.memory_space<smem>>
    %c2_52 = arith.constant 2 : index
    %c8_53 = arith.constant 8 : index
    %32 = memref.load %arg1[%c2_52, %c8_53] : memref<8x12xf32, #tpu.memory_space<smem>>
    %c2_54 = arith.constant 2 : index
    %c9_55 = arith.constant 9 : index
    %33 = memref.load %arg1[%c2_54, %c9_55] : memref<8x12xf32, #tpu.memory_space<smem>>
    %c2_56 = arith.constant 2 : index
    %c10_57 = arith.constant 10 : index
    %34 = memref.load %arg1[%c2_56, %c10_57] : memref<8x12xf32, #tpu.memory_space<smem>>
    %c2_58 = arith.constant 2 : index
    %c11_59 = arith.constant 11 : index
    %35 = memref.load %arg1[%c2_58, %c11_59] : memref<8x12xf32, #tpu.memory_space<smem>>
    %c3_60 = arith.constant 3 : index
    %c0_61 = arith.constant 0 : index
    %36 = memref.load %arg1[%c3_60, %c0_61] : memref<8x12xf32, #tpu.memory_space<smem>>
    %c3_62 = arith.constant 3 : index
    %c1_63 = arith.constant 1 : index
    %37 = memref.load %arg1[%c3_62, %c1_63] : memref<8x12xf32, #tpu.memory_space<smem>>
    %c3_64 = arith.constant 3 : index
    %c2_65 = arith.constant 2 : index
    %38 = memref.load %arg1[%c3_64, %c2_65] : memref<8x12xf32, #tpu.memory_space<smem>>
    %c3_66 = arith.constant 3 : index
    %c3_67 = arith.constant 3 : index
    %39 = memref.load %arg1[%c3_66, %c3_67] : memref<8x12xf32, #tpu.memory_space<smem>>
    %c3_68 = arith.constant 3 : index
    %c4_69 = arith.constant 4 : index
    %40 = memref.load %arg1[%c3_68, %c4_69] : memref<8x12xf32, #tpu.memory_space<smem>>
    %c3_70 = arith.constant 3 : index
    %c5_71 = arith.constant 5 : index
    %41 = memref.load %arg1[%c3_70, %c5_71] : memref<8x12xf32, #tpu.memory_space<smem>>
    %c3_72 = arith.constant 3 : index
    %c6_73 = arith.constant 6 : index
    %42 = memref.load %arg1[%c3_72, %c6_73] : memref<8x12xf32, #tpu.memory_space<smem>>
    %c3_74 = arith.constant 3 : index
    %c7_75 = arith.constant 7 : index
    %43 = memref.load %arg1[%c3_74, %c7_75] : memref<8x12xf32, #tpu.memory_space<smem>>
    %c3_76 = arith.constant 3 : index
    %c8_77 = arith.constant 8 : index
    %44 = memref.load %arg1[%c3_76, %c8_77] : memref<8x12xf32, #tpu.memory_space<smem>>
    %c3_78 = arith.constant 3 : index
    %c9_79 = arith.constant 9 : index
    %45 = memref.load %arg1[%c3_78, %c9_79] : memref<8x12xf32, #tpu.memory_space<smem>>
    %c3_80 = arith.constant 3 : index
    %c10_81 = arith.constant 10 : index
    %46 = memref.load %arg1[%c3_80, %c10_81] : memref<8x12xf32, #tpu.memory_space<smem>>
    %c3_82 = arith.constant 3 : index
    %c11_83 = arith.constant 11 : index
    %47 = memref.load %arg1[%c3_82, %c11_83] : memref<8x12xf32, #tpu.memory_space<smem>>
    %c4_84 = arith.constant 4 : index
    %c0_85 = arith.constant 0 : index
    %48 = memref.load %arg1[%c4_84, %c0_85] : memref<8x12xf32, #tpu.memory_space<smem>>
    %c4_86 = arith.constant 4 : index
    %c1_87 = arith.constant 1 : index
    %49 = memref.load %arg1[%c4_86, %c1_87] : memref<8x12xf32, #tpu.memory_space<smem>>
    %c4_88 = arith.constant 4 : index
    %c2_89 = arith.constant 2 : index
    %50 = memref.load %arg1[%c4_88, %c2_89] : memref<8x12xf32, #tpu.memory_space<smem>>
    %c4_90 = arith.constant 4 : index
    %c3_91 = arith.constant 3 : index
    %51 = memref.load %arg1[%c4_90, %c3_91] : memref<8x12xf32, #tpu.memory_space<smem>>
    %c4_92 = arith.constant 4 : index
    %c4_93 = arith.constant 4 : index
    %52 = memref.load %arg1[%c4_92, %c4_93] : memref<8x12xf32, #tpu.memory_space<smem>>
    %c4_94 = arith.constant 4 : index
    %c5_95 = arith.constant 5 : index
    %53 = memref.load %arg1[%c4_94, %c5_95] : memref<8x12xf32, #tpu.memory_space<smem>>
    %c4_96 = arith.constant 4 : index
    %c6_97 = arith.constant 6 : index
    %54 = memref.load %arg1[%c4_96, %c6_97] : memref<8x12xf32, #tpu.memory_space<smem>>
    %c4_98 = arith.constant 4 : index
    %c7_99 = arith.constant 7 : index
    %55 = memref.load %arg1[%c4_98, %c7_99] : memref<8x12xf32, #tpu.memory_space<smem>>
    %c4_100 = arith.constant 4 : index
    %c8_101 = arith.constant 8 : index
    %56 = memref.load %arg1[%c4_100, %c8_101] : memref<8x12xf32, #tpu.memory_space<smem>>
    %c4_102 = arith.constant 4 : index
    %c9_103 = arith.constant 9 : index
    %57 = memref.load %arg1[%c4_102, %c9_103] : memref<8x12xf32, #tpu.memory_space<smem>>
    %c4_104 = arith.constant 4 : index
    %c10_105 = arith.constant 10 : index
    %58 = memref.load %arg1[%c4_104, %c10_105] : memref<8x12xf32, #tpu.memory_space<smem>>
    %c4_106 = arith.constant 4 : index
    %c11_107 = arith.constant 11 : index
    %59 = memref.load %arg1[%c4_106, %c11_107] : memref<8x12xf32, #tpu.memory_space<smem>>
    %c5_108 = arith.constant 5 : index
    %c0_109 = arith.constant 0 : index
    %60 = memref.load %arg1[%c5_108, %c0_109] : memref<8x12xf32, #tpu.memory_space<smem>>
    %c5_110 = arith.constant 5 : index
    %c1_111 = arith.constant 1 : index
    %61 = memref.load %arg1[%c5_110, %c1_111] : memref<8x12xf32, #tpu.memory_space<smem>>
    %c5_112 = arith.constant 5 : index
    %c2_113 = arith.constant 2 : index
    %62 = memref.load %arg1[%c5_112, %c2_113] : memref<8x12xf32, #tpu.memory_space<smem>>
    %c5_114 = arith.constant 5 : index
    %c3_115 = arith.constant 3 : index
    %63 = memref.load %arg1[%c5_114, %c3_115] : memref<8x12xf32, #tpu.memory_space<smem>>
    %c5_116 = arith.constant 5 : index
    %c4_117 = arith.constant 4 : index
    %64 = memref.load %arg1[%c5_116, %c4_117] : memref<8x12xf32, #tpu.memory_space<smem>>
    %c5_118 = arith.constant 5 : index
    %c5_119 = arith.constant 5 : index
    %65 = memref.load %arg1[%c5_118, %c5_119] : memref<8x12xf32, #tpu.memory_space<smem>>
    %c5_120 = arith.constant 5 : index
    %c6_121 = arith.constant 6 : index
    %66 = memref.load %arg1[%c5_120, %c6_121] : memref<8x12xf32, #tpu.memory_space<smem>>
    %c5_122 = arith.constant 5 : index
    %c7_123 = arith.constant 7 : index
    %67 = memref.load %arg1[%c5_122, %c7_123] : memref<8x12xf32, #tpu.memory_space<smem>>
    %c5_124 = arith.constant 5 : index
    %c8_125 = arith.constant 8 : index
    %68 = memref.load %arg1[%c5_124, %c8_125] : memref<8x12xf32, #tpu.memory_space<smem>>
    %c5_126 = arith.constant 5 : index
    %c9_127 = arith.constant 9 : index
    %69 = memref.load %arg1[%c5_126, %c9_127] : memref<8x12xf32, #tpu.memory_space<smem>>
    %c5_128 = arith.constant 5 : index
    %c10_129 = arith.constant 10 : index
    %70 = memref.load %arg1[%c5_128, %c10_129] : memref<8x12xf32, #tpu.memory_space<smem>>
    %c5_130 = arith.constant 5 : index
    %c11_131 = arith.constant 11 : index
    %71 = memref.load %arg1[%c5_130, %c11_131] : memref<8x12xf32, #tpu.memory_space<smem>>
    %c6_132 = arith.constant 6 : index
    %c0_133 = arith.constant 0 : index
    %72 = memref.load %arg1[%c6_132, %c0_133] : memref<8x12xf32, #tpu.memory_space<smem>>
    %c6_134 = arith.constant 6 : index
    %c1_135 = arith.constant 1 : index
    %73 = memref.load %arg1[%c6_134, %c1_135] : memref<8x12xf32, #tpu.memory_space<smem>>
    %c6_136 = arith.constant 6 : index
    %c2_137 = arith.constant 2 : index
    %74 = memref.load %arg1[%c6_136, %c2_137] : memref<8x12xf32, #tpu.memory_space<smem>>
    %c6_138 = arith.constant 6 : index
    %c3_139 = arith.constant 3 : index
    %75 = memref.load %arg1[%c6_138, %c3_139] : memref<8x12xf32, #tpu.memory_space<smem>>
    %c6_140 = arith.constant 6 : index
    %c4_141 = arith.constant 4 : index
    %76 = memref.load %arg1[%c6_140, %c4_141] : memref<8x12xf32, #tpu.memory_space<smem>>
    %c6_142 = arith.constant 6 : index
    %c5_143 = arith.constant 5 : index
    %77 = memref.load %arg1[%c6_142, %c5_143] : memref<8x12xf32, #tpu.memory_space<smem>>
    %c6_144 = arith.constant 6 : index
    %c6_145 = arith.constant 6 : index
    %78 = memref.load %arg1[%c6_144, %c6_145] : memref<8x12xf32, #tpu.memory_space<smem>>
    %c6_146 = arith.constant 6 : index
    %c7_147 = arith.constant 7 : index
    %79 = memref.load %arg1[%c6_146, %c7_147] : memref<8x12xf32, #tpu.memory_space<smem>>
    %c6_148 = arith.constant 6 : index
    %c8_149 = arith.constant 8 : index
    %80 = memref.load %arg1[%c6_148, %c8_149] : memref<8x12xf32, #tpu.memory_space<smem>>
    %c6_150 = arith.constant 6 : index
    %c9_151 = arith.constant 9 : index
    %81 = memref.load %arg1[%c6_150, %c9_151] : memref<8x12xf32, #tpu.memory_space<smem>>
    %c6_152 = arith.constant 6 : index
    %c10_153 = arith.constant 10 : index
    %82 = memref.load %arg1[%c6_152, %c10_153] : memref<8x12xf32, #tpu.memory_space<smem>>
    %c6_154 = arith.constant 6 : index
    %c11_155 = arith.constant 11 : index
    %83 = memref.load %arg1[%c6_154, %c11_155] : memref<8x12xf32, #tpu.memory_space<smem>>
    %c7_156 = arith.constant 7 : index
    %c0_157 = arith.constant 0 : index
    %84 = memref.load %arg1[%c7_156, %c0_157] : memref<8x12xf32, #tpu.memory_space<smem>>
    %c7_158 = arith.constant 7 : index
    %c1_159 = arith.constant 1 : index
    %85 = memref.load %arg1[%c7_158, %c1_159] : memref<8x12xf32, #tpu.memory_space<smem>>
    %c7_160 = arith.constant 7 : index
    %c2_161 = arith.constant 2 : index
    %86 = memref.load %arg1[%c7_160, %c2_161] : memref<8x12xf32, #tpu.memory_space<smem>>
    %c7_162 = arith.constant 7 : index
    %c3_163 = arith.constant 3 : index
    %87 = memref.load %arg1[%c7_162, %c3_163] : memref<8x12xf32, #tpu.memory_space<smem>>
    %c7_164 = arith.constant 7 : index
    %c4_165 = arith.constant 4 : index
    %88 = memref.load %arg1[%c7_164, %c4_165] : memref<8x12xf32, #tpu.memory_space<smem>>
    %c7_166 = arith.constant 7 : index
    %c5_167 = arith.constant 5 : index
    %89 = memref.load %arg1[%c7_166, %c5_167] : memref<8x12xf32, #tpu.memory_space<smem>>
    %c7_168 = arith.constant 7 : index
    %c6_169 = arith.constant 6 : index
    %90 = memref.load %arg1[%c7_168, %c6_169] : memref<8x12xf32, #tpu.memory_space<smem>>
    %c7_170 = arith.constant 7 : index
    %c7_171 = arith.constant 7 : index
    %91 = memref.load %arg1[%c7_170, %c7_171] : memref<8x12xf32, #tpu.memory_space<smem>>
    %c7_172 = arith.constant 7 : index
    %c8_173 = arith.constant 8 : index
    %92 = memref.load %arg1[%c7_172, %c8_173] : memref<8x12xf32, #tpu.memory_space<smem>>
    %c7_174 = arith.constant 7 : index
    %c9_175 = arith.constant 9 : index
    %93 = memref.load %arg1[%c7_174, %c9_175] : memref<8x12xf32, #tpu.memory_space<smem>>
    %c7_176 = arith.constant 7 : index
    %c10_177 = arith.constant 10 : index
    %94 = memref.load %arg1[%c7_176, %c10_177] : memref<8x12xf32, #tpu.memory_space<smem>>
    %c7_178 = arith.constant 7 : index
    %c11_179 = arith.constant 11 : index
    %95 = memref.load %arg1[%c7_178, %c11_179] : memref<8x12xf32, #tpu.memory_space<smem>>
    %c0_i32 = arith.constant 0 : i32
    %c8_i32 = arith.constant 8 : i32
    %96 = arith.muli %c0_i32, %c8_i32 : i32
    %97 = tpu.assume_multiple %96, 8 : i32
    %c0_180 = arith.constant 0 : index
    %98 = arith.index_cast %97 : i32 to index
    %c0_181 = arith.constant 0 : index
    %99 = vector.load %arg2[%c0_180, %98, %c0_181] : memref<8x16x128xf32, #tpu.memory_space<vmem>>, vector<1x8x128xf32>
    %100 = vector.shape_cast %99 : vector<1x8x128xf32> to vector<8x128xf32>
    %101 = vector.broadcast %0 : f32 to vector<8x128xf32>
    %102 = arith.mulf %101, %100 : vector<8x128xf32>
    %103 = vector.broadcast %1 : f32 to vector<8x128xf32>
    %104 = arith.mulf %103, %100 : vector<8x128xf32>
    %105 = vector.broadcast %2 : f32 to vector<8x128xf32>
    %106 = arith.mulf %105, %100 : vector<8x128xf32>
    %107 = vector.broadcast %3 : f32 to vector<8x128xf32>
    %108 = arith.mulf %107, %100 : vector<8x128xf32>
    %109 = vector.broadcast %4 : f32 to vector<8x128xf32>
    %110 = arith.mulf %109, %100 : vector<8x128xf32>
    %111 = vector.broadcast %5 : f32 to vector<8x128xf32>
    %112 = arith.mulf %111, %100 : vector<8x128xf32>
    %113 = vector.broadcast %6 : f32 to vector<8x128xf32>
    %114 = arith.mulf %113, %100 : vector<8x128xf32>
    %115 = vector.broadcast %7 : f32 to vector<8x128xf32>
    %116 = arith.mulf %115, %100 : vector<8x128xf32>
    %117 = vector.broadcast %8 : f32 to vector<8x128xf32>
    %118 = arith.mulf %117, %100 : vector<8x128xf32>
    %119 = vector.broadcast %9 : f32 to vector<8x128xf32>
    %120 = arith.mulf %119, %100 : vector<8x128xf32>
    %121 = vector.broadcast %10 : f32 to vector<8x128xf32>
    %122 = arith.mulf %121, %100 : vector<8x128xf32>
    %123 = vector.broadcast %11 : f32 to vector<8x128xf32>
    %124 = arith.mulf %123, %100 : vector<8x128xf32>
    %c1_182 = arith.constant 1 : index
    %125 = arith.index_cast %97 : i32 to index
    %c0_183 = arith.constant 0 : index
    %126 = vector.load %arg2[%c1_182, %125, %c0_183] : memref<8x16x128xf32, #tpu.memory_space<vmem>>, vector<1x8x128xf32>
    %127 = vector.shape_cast %126 : vector<1x8x128xf32> to vector<8x128xf32>
    %128 = vector.broadcast %12 : f32 to vector<8x128xf32>
    %129 = arith.mulf %128, %127 : vector<8x128xf32>
    %130 = arith.addf %102, %129 : vector<8x128xf32>
    %131 = vector.broadcast %13 : f32 to vector<8x128xf32>
    %132 = arith.mulf %131, %127 : vector<8x128xf32>
    %133 = arith.addf %104, %132 : vector<8x128xf32>
    %134 = vector.broadcast %14 : f32 to vector<8x128xf32>
    %135 = arith.mulf %134, %127 : vector<8x128xf32>
    %136 = arith.addf %106, %135 : vector<8x128xf32>
    %137 = vector.broadcast %15 : f32 to vector<8x128xf32>
    %138 = arith.mulf %137, %127 : vector<8x128xf32>
    %139 = arith.addf %108, %138 : vector<8x128xf32>
    %140 = vector.broadcast %16 : f32 to vector<8x128xf32>
    %141 = arith.mulf %140, %127 : vector<8x128xf32>
    %142 = arith.addf %110, %141 : vector<8x128xf32>
    %143 = vector.broadcast %17 : f32 to vector<8x128xf32>
    %144 = arith.mulf %143, %127 : vector<8x128xf32>
    %145 = arith.addf %112, %144 : vector<8x128xf32>
    %146 = vector.broadcast %18 : f32 to vector<8x128xf32>
    %147 = arith.mulf %146, %127 : vector<8x128xf32>
    %148 = arith.addf %114, %147 : vector<8x128xf32>
    %149 = vector.broadcast %19 : f32 to vector<8x128xf32>
    %150 = arith.mulf %149, %127 : vector<8x128xf32>
    %151 = arith.addf %116, %150 : vector<8x128xf32>
    %152 = vector.broadcast %20 : f32 to vector<8x128xf32>
    %153 = arith.mulf %152, %127 : vector<8x128xf32>
    %154 = arith.addf %118, %153 : vector<8x128xf32>
    %155 = vector.broadcast %21 : f32 to vector<8x128xf32>
    %156 = arith.mulf %155, %127 : vector<8x128xf32>
    %157 = arith.addf %120, %156 : vector<8x128xf32>
    %158 = vector.broadcast %22 : f32 to vector<8x128xf32>
    %159 = arith.mulf %158, %127 : vector<8x128xf32>
    %160 = arith.addf %122, %159 : vector<8x128xf32>
    %161 = vector.broadcast %23 : f32 to vector<8x128xf32>
    %162 = arith.mulf %161, %127 : vector<8x128xf32>
    %163 = arith.addf %124, %162 : vector<8x128xf32>
    %c2_184 = arith.constant 2 : index
    %164 = arith.index_cast %97 : i32 to index
    %c0_185 = arith.constant 0 : index
    %165 = vector.load %arg2[%c2_184, %164, %c0_185] : memref<8x16x128xf32, #tpu.memory_space<vmem>>, vector<1x8x128xf32>
    %166 = vector.shape_cast %165 : vector<1x8x128xf32> to vector<8x128xf32>
    %167 = vector.broadcast %24 : f32 to vector<8x128xf32>
    %168 = arith.mulf %167, %166 : vector<8x128xf32>
    %169 = arith.addf %130, %168 : vector<8x128xf32>
    %170 = vector.broadcast %25 : f32 to vector<8x128xf32>
    %171 = arith.mulf %170, %166 : vector<8x128xf32>
    %172 = arith.addf %133, %171 : vector<8x128xf32>
    %173 = vector.broadcast %26 : f32 to vector<8x128xf32>
    %174 = arith.mulf %173, %166 : vector<8x128xf32>
    %175 = arith.addf %136, %174 : vector<8x128xf32>
    %176 = vector.broadcast %27 : f32 to vector<8x128xf32>
    %177 = arith.mulf %176, %166 : vector<8x128xf32>
    %178 = arith.addf %139, %177 : vector<8x128xf32>
    %179 = vector.broadcast %28 : f32 to vector<8x128xf32>
    %180 = arith.mulf %179, %166 : vector<8x128xf32>
    %181 = arith.addf %142, %180 : vector<8x128xf32>
    %182 = vector.broadcast %29 : f32 to vector<8x128xf32>
    %183 = arith.mulf %182, %166 : vector<8x128xf32>
    %184 = arith.addf %145, %183 : vector<8x128xf32>
    %185 = vector.broadcast %30 : f32 to vector<8x128xf32>
    %186 = arith.mulf %185, %166 : vector<8x128xf32>
    %187 = arith.addf %148, %186 : vector<8x128xf32>
    %188 = vector.broadcast %31 : f32 to vector<8x128xf32>
    %189 = arith.mulf %188, %166 : vector<8x128xf32>
    %190 = arith.addf %151, %189 : vector<8x128xf32>
    %191 = vector.broadcast %32 : f32 to vector<8x128xf32>
    %192 = arith.mulf %191, %166 : vector<8x128xf32>
    %193 = arith.addf %154, %192 : vector<8x128xf32>
    %194 = vector.broadcast %33 : f32 to vector<8x128xf32>
    %195 = arith.mulf %194, %166 : vector<8x128xf32>
    %196 = arith.addf %157, %195 : vector<8x128xf32>
    %197 = vector.broadcast %34 : f32 to vector<8x128xf32>
    %198 = arith.mulf %197, %166 : vector<8x128xf32>
    %199 = arith.addf %160, %198 : vector<8x128xf32>
    %200 = vector.broadcast %35 : f32 to vector<8x128xf32>
    %201 = arith.mulf %200, %166 : vector<8x128xf32>
    %202 = arith.addf %163, %201 : vector<8x128xf32>
    %c3_186 = arith.constant 3 : index
    %203 = arith.index_cast %97 : i32 to index
    %c0_187 = arith.constant 0 : index
    %204 = vector.load %arg2[%c3_186, %203, %c0_187] : memref<8x16x128xf32, #tpu.memory_space<vmem>>, vector<1x8x128xf32>
    %205 = vector.shape_cast %204 : vector<1x8x128xf32> to vector<8x128xf32>
    %206 = vector.broadcast %36 : f32 to vector<8x128xf32>
    %207 = arith.mulf %206, %205 : vector<8x128xf32>
    %208 = arith.addf %169, %207 : vector<8x128xf32>
    %209 = vector.broadcast %37 : f32 to vector<8x128xf32>
    %210 = arith.mulf %209, %205 : vector<8x128xf32>
    %211 = arith.addf %172, %210 : vector<8x128xf32>
    %212 = vector.broadcast %38 : f32 to vector<8x128xf32>
    %213 = arith.mulf %212, %205 : vector<8x128xf32>
    %214 = arith.addf %175, %213 : vector<8x128xf32>
    %215 = vector.broadcast %39 : f32 to vector<8x128xf32>
    %216 = arith.mulf %215, %205 : vector<8x128xf32>
    %217 = arith.addf %178, %216 : vector<8x128xf32>
    %218 = vector.broadcast %40 : f32 to vector<8x128xf32>
    %219 = arith.mulf %218, %205 : vector<8x128xf32>
    %220 = arith.addf %181, %219 : vector<8x128xf32>
    %221 = vector.broadcast %41 : f32 to vector<8x128xf32>
    %222 = arith.mulf %221, %205 : vector<8x128xf32>
    %223 = arith.addf %184, %222 : vector<8x128xf32>
    %224 = vector.broadcast %42 : f32 to vector<8x128xf32>
    %225 = arith.mulf %224, %205 : vector<8x128xf32>
    %226 = arith.addf %187, %225 : vector<8x128xf32>
    %227 = vector.broadcast %43 : f32 to vector<8x128xf32>
    %228 = arith.mulf %227, %205 : vector<8x128xf32>
    %229 = arith.addf %190, %228 : vector<8x128xf32>
    %230 = vector.broadcast %44 : f32 to vector<8x128xf32>
    %231 = arith.mulf %230, %205 : vector<8x128xf32>
    %232 = arith.addf %193, %231 : vector<8x128xf32>
    %233 = vector.broadcast %45 : f32 to vector<8x128xf32>
    %234 = arith.mulf %233, %205 : vector<8x128xf32>
    %235 = arith.addf %196, %234 : vector<8x128xf32>
    %236 = vector.broadcast %46 : f32 to vector<8x128xf32>
    %237 = arith.mulf %236, %205 : vector<8x128xf32>
    %238 = arith.addf %199, %237 : vector<8x128xf32>
    %239 = vector.broadcast %47 : f32 to vector<8x128xf32>
    %240 = arith.mulf %239, %205 : vector<8x128xf32>
    %241 = arith.addf %202, %240 : vector<8x128xf32>
    %c4_188 = arith.constant 4 : index
    %242 = arith.index_cast %97 : i32 to index
    %c0_189 = arith.constant 0 : index
    %243 = vector.load %arg2[%c4_188, %242, %c0_189] : memref<8x16x128xf32, #tpu.memory_space<vmem>>, vector<1x8x128xf32>
    %244 = vector.shape_cast %243 : vector<1x8x128xf32> to vector<8x128xf32>
    %245 = vector.broadcast %48 : f32 to vector<8x128xf32>
    %246 = arith.mulf %245, %244 : vector<8x128xf32>
    %247 = arith.addf %208, %246 : vector<8x128xf32>
    %248 = vector.broadcast %49 : f32 to vector<8x128xf32>
    %249 = arith.mulf %248, %244 : vector<8x128xf32>
    %250 = arith.addf %211, %249 : vector<8x128xf32>
    %251 = vector.broadcast %50 : f32 to vector<8x128xf32>
    %252 = arith.mulf %251, %244 : vector<8x128xf32>
    %253 = arith.addf %214, %252 : vector<8x128xf32>
    %254 = vector.broadcast %51 : f32 to vector<8x128xf32>
    %255 = arith.mulf %254, %244 : vector<8x128xf32>
    %256 = arith.addf %217, %255 : vector<8x128xf32>
    %257 = vector.broadcast %52 : f32 to vector<8x128xf32>
    %258 = arith.mulf %257, %244 : vector<8x128xf32>
    %259 = arith.addf %220, %258 : vector<8x128xf32>
    %260 = vector.broadcast %53 : f32 to vector<8x128xf32>
    %261 = arith.mulf %260, %244 : vector<8x128xf32>
    %262 = arith.addf %223, %261 : vector<8x128xf32>
    %263 = vector.broadcast %54 : f32 to vector<8x128xf32>
    %264 = arith.mulf %263, %244 : vector<8x128xf32>
    %265 = arith.addf %226, %264 : vector<8x128xf32>
    %266 = vector.broadcast %55 : f32 to vector<8x128xf32>
    %267 = arith.mulf %266, %244 : vector<8x128xf32>
    %268 = arith.addf %229, %267 : vector<8x128xf32>
    %269 = vector.broadcast %56 : f32 to vector<8x128xf32>
    %270 = arith.mulf %269, %244 : vector<8x128xf32>
    %271 = arith.addf %232, %270 : vector<8x128xf32>
    %272 = vector.broadcast %57 : f32 to vector<8x128xf32>
    %273 = arith.mulf %272, %244 : vector<8x128xf32>
    %274 = arith.addf %235, %273 : vector<8x128xf32>
    %275 = vector.broadcast %58 : f32 to vector<8x128xf32>
    %276 = arith.mulf %275, %244 : vector<8x128xf32>
    %277 = arith.addf %238, %276 : vector<8x128xf32>
    %278 = vector.broadcast %59 : f32 to vector<8x128xf32>
    %279 = arith.mulf %278, %244 : vector<8x128xf32>
    %280 = arith.addf %241, %279 : vector<8x128xf32>
    %c5_190 = arith.constant 5 : index
    %281 = arith.index_cast %97 : i32 to index
    %c0_191 = arith.constant 0 : index
    %282 = vector.load %arg2[%c5_190, %281, %c0_191] : memref<8x16x128xf32, #tpu.memory_space<vmem>>, vector<1x8x128xf32>
    %283 = vector.shape_cast %282 : vector<1x8x128xf32> to vector<8x128xf32>
    %284 = vector.broadcast %60 : f32 to vector<8x128xf32>
    %285 = arith.mulf %284, %283 : vector<8x128xf32>
    %286 = arith.addf %247, %285 : vector<8x128xf32>
    %287 = vector.broadcast %61 : f32 to vector<8x128xf32>
    %288 = arith.mulf %287, %283 : vector<8x128xf32>
    %289 = arith.addf %250, %288 : vector<8x128xf32>
    %290 = vector.broadcast %62 : f32 to vector<8x128xf32>
    %291 = arith.mulf %290, %283 : vector<8x128xf32>
    %292 = arith.addf %253, %291 : vector<8x128xf32>
    %293 = vector.broadcast %63 : f32 to vector<8x128xf32>
    %294 = arith.mulf %293, %283 : vector<8x128xf32>
    %295 = arith.addf %256, %294 : vector<8x128xf32>
    %296 = vector.broadcast %64 : f32 to vector<8x128xf32>
    %297 = arith.mulf %296, %283 : vector<8x128xf32>
    %298 = arith.addf %259, %297 : vector<8x128xf32>
    %299 = vector.broadcast %65 : f32 to vector<8x128xf32>
    %300 = arith.mulf %299, %283 : vector<8x128xf32>
    %301 = arith.addf %262, %300 : vector<8x128xf32>
    %302 = vector.broadcast %66 : f32 to vector<8x128xf32>
    %303 = arith.mulf %302, %283 : vector<8x128xf32>
    %304 = arith.addf %265, %303 : vector<8x128xf32>
    %305 = vector.broadcast %67 : f32 to vector<8x128xf32>
    %306 = arith.mulf %305, %283 : vector<8x128xf32>
    %307 = arith.addf %268, %306 : vector<8x128xf32>
    %308 = vector.broadcast %68 : f32 to vector<8x128xf32>
    %309 = arith.mulf %308, %283 : vector<8x128xf32>
    %310 = arith.addf %271, %309 : vector<8x128xf32>
    %311 = vector.broadcast %69 : f32 to vector<8x128xf32>
    %312 = arith.mulf %311, %283 : vector<8x128xf32>
    %313 = arith.addf %274, %312 : vector<8x128xf32>
    %314 = vector.broadcast %70 : f32 to vector<8x128xf32>
    %315 = arith.mulf %314, %283 : vector<8x128xf32>
    %316 = arith.addf %277, %315 : vector<8x128xf32>
    %317 = vector.broadcast %71 : f32 to vector<8x128xf32>
    %318 = arith.mulf %317, %283 : vector<8x128xf32>
    %319 = arith.addf %280, %318 : vector<8x128xf32>
    %c6_192 = arith.constant 6 : index
    %320 = arith.index_cast %97 : i32 to index
    %c0_193 = arith.constant 0 : index
    %321 = vector.load %arg2[%c6_192, %320, %c0_193] : memref<8x16x128xf32, #tpu.memory_space<vmem>>, vector<1x8x128xf32>
    %322 = vector.shape_cast %321 : vector<1x8x128xf32> to vector<8x128xf32>
    %323 = vector.broadcast %72 : f32 to vector<8x128xf32>
    %324 = arith.mulf %323, %322 : vector<8x128xf32>
    %325 = arith.addf %286, %324 : vector<8x128xf32>
    %326 = vector.broadcast %73 : f32 to vector<8x128xf32>
    %327 = arith.mulf %326, %322 : vector<8x128xf32>
    %328 = arith.addf %289, %327 : vector<8x128xf32>
    %329 = vector.broadcast %74 : f32 to vector<8x128xf32>
    %330 = arith.mulf %329, %322 : vector<8x128xf32>
    %331 = arith.addf %292, %330 : vector<8x128xf32>
    %332 = vector.broadcast %75 : f32 to vector<8x128xf32>
    %333 = arith.mulf %332, %322 : vector<8x128xf32>
    %334 = arith.addf %295, %333 : vector<8x128xf32>
    %335 = vector.broadcast %76 : f32 to vector<8x128xf32>
    %336 = arith.mulf %335, %322 : vector<8x128xf32>
    %337 = arith.addf %298, %336 : vector<8x128xf32>
    %338 = vector.broadcast %77 : f32 to vector<8x128xf32>
    %339 = arith.mulf %338, %322 : vector<8x128xf32>
    %340 = arith.addf %301, %339 : vector<8x128xf32>
    %341 = vector.broadcast %78 : f32 to vector<8x128xf32>
    %342 = arith.mulf %341, %322 : vector<8x128xf32>
    %343 = arith.addf %304, %342 : vector<8x128xf32>
    %344 = vector.broadcast %79 : f32 to vector<8x128xf32>
    %345 = arith.mulf %344, %322 : vector<8x128xf32>
    %346 = arith.addf %307, %345 : vector<8x128xf32>
    %347 = vector.broadcast %80 : f32 to vector<8x128xf32>
    %348 = arith.mulf %347, %322 : vector<8x128xf32>
    %349 = arith.addf %310, %348 : vector<8x128xf32>
    %350 = vector.broadcast %81 : f32 to vector<8x128xf32>
    %351 = arith.mulf %350, %322 : vector<8x128xf32>
    %352 = arith.addf %313, %351 : vector<8x128xf32>
    %353 = vector.broadcast %82 : f32 to vector<8x128xf32>
    %354 = arith.mulf %353, %322 : vector<8x128xf32>
    %355 = arith.addf %316, %354 : vector<8x128xf32>
    %356 = vector.broadcast %83 : f32 to vector<8x128xf32>
    %357 = arith.mulf %356, %322 : vector<8x128xf32>
    %358 = arith.addf %319, %357 : vector<8x128xf32>
    %c7_194 = arith.constant 7 : index
    %359 = arith.index_cast %97 : i32 to index
    %c0_195 = arith.constant 0 : index
    %360 = vector.load %arg2[%c7_194, %359, %c0_195] : memref<8x16x128xf32, #tpu.memory_space<vmem>>, vector<1x8x128xf32>
    %361 = vector.shape_cast %360 : vector<1x8x128xf32> to vector<8x128xf32>
    %362 = vector.broadcast %84 : f32 to vector<8x128xf32>
    %363 = arith.mulf %362, %361 : vector<8x128xf32>
    %364 = arith.addf %325, %363 : vector<8x128xf32>
    %365 = vector.broadcast %85 : f32 to vector<8x128xf32>
    %366 = arith.mulf %365, %361 : vector<8x128xf32>
    %367 = arith.addf %328, %366 : vector<8x128xf32>
    %368 = vector.broadcast %86 : f32 to vector<8x128xf32>
    %369 = arith.mulf %368, %361 : vector<8x128xf32>
    %370 = arith.addf %331, %369 : vector<8x128xf32>
    %371 = vector.broadcast %87 : f32 to vector<8x128xf32>
    %372 = arith.mulf %371, %361 : vector<8x128xf32>
    %373 = arith.addf %334, %372 : vector<8x128xf32>
    %374 = vector.broadcast %88 : f32 to vector<8x128xf32>
    %375 = arith.mulf %374, %361 : vector<8x128xf32>
    %376 = arith.addf %337, %375 : vector<8x128xf32>
    %377 = vector.broadcast %89 : f32 to vector<8x128xf32>
    %378 = arith.mulf %377, %361 : vector<8x128xf32>
    %379 = arith.addf %340, %378 : vector<8x128xf32>
    %380 = vector.broadcast %90 : f32 to vector<8x128xf32>
    %381 = arith.mulf %380, %361 : vector<8x128xf32>
    %382 = arith.addf %343, %381 : vector<8x128xf32>
    %383 = vector.broadcast %91 : f32 to vector<8x128xf32>
    %384 = arith.mulf %383, %361 : vector<8x128xf32>
    %385 = arith.addf %346, %384 : vector<8x128xf32>
    %386 = vector.broadcast %92 : f32 to vector<8x128xf32>
    %387 = arith.mulf %386, %361 : vector<8x128xf32>
    %388 = arith.addf %349, %387 : vector<8x128xf32>
    %389 = vector.broadcast %93 : f32 to vector<8x128xf32>
    %390 = arith.mulf %389, %361 : vector<8x128xf32>
    %391 = arith.addf %352, %390 : vector<8x128xf32>
    %392 = vector.broadcast %94 : f32 to vector<8x128xf32>
    %393 = arith.mulf %392, %361 : vector<8x128xf32>
    %394 = arith.addf %355, %393 : vector<8x128xf32>
    %395 = vector.broadcast %95 : f32 to vector<8x128xf32>
    %396 = arith.mulf %395, %361 : vector<8x128xf32>
    %397 = arith.addf %358, %396 : vector<8x128xf32>
    %398 = arith.mulf %364, %364 : vector<8x128xf32>
    %399 = arith.mulf %367, %376 : vector<8x128xf32>
    %400 = arith.addf %398, %399 : vector<8x128xf32>
    %401 = arith.mulf %370, %388 : vector<8x128xf32>
    %402 = arith.addf %400, %401 : vector<8x128xf32>
    %403 = arith.mulf %364, %367 : vector<8x128xf32>
    %404 = arith.mulf %367, %379 : vector<8x128xf32>
    %405 = arith.addf %403, %404 : vector<8x128xf32>
    %406 = arith.mulf %370, %391 : vector<8x128xf32>
    %407 = arith.addf %405, %406 : vector<8x128xf32>
    %408 = arith.mulf %364, %370 : vector<8x128xf32>
    %409 = arith.mulf %367, %382 : vector<8x128xf32>
    %410 = arith.addf %408, %409 : vector<8x128xf32>
    %411 = arith.mulf %370, %394 : vector<8x128xf32>
    %412 = arith.addf %410, %411 : vector<8x128xf32>
    %413 = arith.mulf %364, %373 : vector<8x128xf32>
    %414 = arith.mulf %367, %385 : vector<8x128xf32>
    %415 = arith.addf %413, %414 : vector<8x128xf32>
    %416 = arith.mulf %370, %397 : vector<8x128xf32>
    %417 = arith.addf %415, %416 : vector<8x128xf32>
    %418 = arith.mulf %376, %364 : vector<8x128xf32>
    %419 = arith.mulf %379, %376 : vector<8x128xf32>
    %420 = arith.addf %418, %419 : vector<8x128xf32>
    %421 = arith.mulf %382, %388 : vector<8x128xf32>
    %422 = arith.addf %420, %421 : vector<8x128xf32>
    %423 = arith.mulf %376, %367 : vector<8x128xf32>
    %424 = arith.mulf %379, %379 : vector<8x128xf32>
    %425 = arith.addf %423, %424 : vector<8x128xf32>
    %426 = arith.mulf %382, %391 : vector<8x128xf32>
    %427 = arith.addf %425, %426 : vector<8x128xf32>
    %428 = arith.mulf %376, %370 : vector<8x128xf32>
    %429 = arith.mulf %379, %382 : vector<8x128xf32>
    %430 = arith.addf %428, %429 : vector<8x128xf32>
    %431 = arith.mulf %382, %394 : vector<8x128xf32>
    %432 = arith.addf %430, %431 : vector<8x128xf32>
    %433 = arith.mulf %376, %373 : vector<8x128xf32>
    %434 = arith.mulf %379, %385 : vector<8x128xf32>
    %435 = arith.addf %433, %434 : vector<8x128xf32>
    %436 = arith.mulf %382, %397 : vector<8x128xf32>
    %437 = arith.addf %435, %436 : vector<8x128xf32>
    %438 = arith.mulf %388, %364 : vector<8x128xf32>
    %439 = arith.mulf %391, %376 : vector<8x128xf32>
    %440 = arith.addf %438, %439 : vector<8x128xf32>
    %441 = arith.mulf %394, %388 : vector<8x128xf32>
    %442 = arith.addf %440, %441 : vector<8x128xf32>
    %443 = arith.mulf %388, %367 : vector<8x128xf32>
    %444 = arith.mulf %391, %379 : vector<8x128xf32>
    %445 = arith.addf %443, %444 : vector<8x128xf32>
    %446 = arith.mulf %394, %391 : vector<8x128xf32>
    %447 = arith.addf %445, %446 : vector<8x128xf32>
    %448 = arith.mulf %388, %370 : vector<8x128xf32>
    %449 = arith.mulf %391, %382 : vector<8x128xf32>
    %450 = arith.addf %448, %449 : vector<8x128xf32>
    %451 = arith.mulf %394, %394 : vector<8x128xf32>
    %452 = arith.addf %450, %451 : vector<8x128xf32>
    %453 = arith.mulf %388, %373 : vector<8x128xf32>
    %454 = arith.mulf %391, %385 : vector<8x128xf32>
    %455 = arith.addf %453, %454 : vector<8x128xf32>
    %456 = arith.mulf %394, %397 : vector<8x128xf32>
    %457 = arith.addf %455, %456 : vector<8x128xf32>
    %458 = arith.mulf %402, %364 : vector<8x128xf32>
    %459 = arith.mulf %407, %376 : vector<8x128xf32>
    %460 = arith.addf %458, %459 : vector<8x128xf32>
    %461 = arith.mulf %412, %388 : vector<8x128xf32>
    %462 = arith.addf %460, %461 : vector<8x128xf32>
    %463 = arith.mulf %402, %367 : vector<8x128xf32>
    %464 = arith.mulf %407, %379 : vector<8x128xf32>
    %465 = arith.addf %463, %464 : vector<8x128xf32>
    %466 = arith.mulf %412, %391 : vector<8x128xf32>
    %467 = arith.addf %465, %466 : vector<8x128xf32>
    %468 = arith.mulf %402, %370 : vector<8x128xf32>
    %469 = arith.mulf %407, %382 : vector<8x128xf32>
    %470 = arith.addf %468, %469 : vector<8x128xf32>
    %471 = arith.mulf %412, %394 : vector<8x128xf32>
    %472 = arith.addf %470, %471 : vector<8x128xf32>
    %473 = arith.mulf %402, %373 : vector<8x128xf32>
    %474 = arith.mulf %407, %385 : vector<8x128xf32>
    %475 = arith.addf %473, %474 : vector<8x128xf32>
    %476 = arith.mulf %412, %397 : vector<8x128xf32>
    %477 = arith.addf %475, %476 : vector<8x128xf32>
    %478 = arith.mulf %422, %364 : vector<8x128xf32>
    %479 = arith.mulf %427, %376 : vector<8x128xf32>
    %480 = arith.addf %478, %479 : vector<8x128xf32>
    %481 = arith.mulf %432, %388 : vector<8x128xf32>
    %482 = arith.addf %480, %481 : vector<8x128xf32>
    %483 = arith.mulf %422, %367 : vector<8x128xf32>
    %484 = arith.mulf %427, %379 : vector<8x128xf32>
    %485 = arith.addf %483, %484 : vector<8x128xf32>
    %486 = arith.mulf %432, %391 : vector<8x128xf32>
    %487 = arith.addf %485, %486 : vector<8x128xf32>
    %488 = arith.mulf %422, %370 : vector<8x128xf32>
    %489 = arith.mulf %427, %382 : vector<8x128xf32>
    %490 = arith.addf %488, %489 : vector<8x128xf32>
    %491 = arith.mulf %432, %394 : vector<8x128xf32>
    %492 = arith.addf %490, %491 : vector<8x128xf32>
    %493 = arith.mulf %422, %373 : vector<8x128xf32>
    %494 = arith.mulf %427, %385 : vector<8x128xf32>
    %495 = arith.addf %493, %494 : vector<8x128xf32>
    %496 = arith.mulf %432, %397 : vector<8x128xf32>
    %497 = arith.addf %495, %496 : vector<8x128xf32>
    %498 = arith.mulf %442, %364 : vector<8x128xf32>
    %499 = arith.mulf %447, %376 : vector<8x128xf32>
    %500 = arith.addf %498, %499 : vector<8x128xf32>
    %501 = arith.mulf %452, %388 : vector<8x128xf32>
    %502 = arith.addf %500, %501 : vector<8x128xf32>
    %503 = arith.mulf %442, %367 : vector<8x128xf32>
    %504 = arith.mulf %447, %379 : vector<8x128xf32>
    %505 = arith.addf %503, %504 : vector<8x128xf32>
    %506 = arith.mulf %452, %391 : vector<8x128xf32>
    %507 = arith.addf %505, %506 : vector<8x128xf32>
    %508 = arith.mulf %442, %370 : vector<8x128xf32>
    %509 = arith.mulf %447, %382 : vector<8x128xf32>
    %510 = arith.addf %508, %509 : vector<8x128xf32>
    %511 = arith.mulf %452, %394 : vector<8x128xf32>
    %512 = arith.addf %510, %511 : vector<8x128xf32>
    %513 = arith.mulf %442, %373 : vector<8x128xf32>
    %514 = arith.mulf %447, %385 : vector<8x128xf32>
    %515 = arith.addf %513, %514 : vector<8x128xf32>
    %516 = arith.mulf %452, %397 : vector<8x128xf32>
    %517 = arith.addf %515, %516 : vector<8x128xf32>
    %cst = arith.constant 5.000000e-01 : f32
    %518 = vector.broadcast %cst : f32 to vector<8x128xf32>
    %519 = arith.mulf %518, %402 : vector<8x128xf32>
    %520 = arith.addf %364, %519 : vector<8x128xf32>
    %cst_196 = arith.constant 0.166666672 : f32
    %521 = vector.broadcast %cst_196 : f32 to vector<8x128xf32>
    %522 = arith.mulf %521, %462 : vector<8x128xf32>
    %523 = arith.addf %520, %522 : vector<8x128xf32>
    %cst_197 = arith.constant 0.00833333377 : f32
    %524 = vector.broadcast %cst_197 : f32 to vector<8x128xf32>
    %525 = arith.mulf %524, %364 : vector<8x128xf32>
    %cst_198 = arith.constant 0.00138888892 : f32
    %526 = vector.broadcast %cst_198 : f32 to vector<8x128xf32>
    %527 = arith.mulf %526, %402 : vector<8x128xf32>
    %528 = arith.addf %525, %527 : vector<8x128xf32>
    %cst_199 = arith.constant 1.98412701E-4 : f32
    %529 = vector.broadcast %cst_199 : f32 to vector<8x128xf32>
    %530 = arith.mulf %529, %462 : vector<8x128xf32>
    %531 = arith.addf %528, %530 : vector<8x128xf32>
    %cst_200 = arith.constant 1.000000e+00 : f32
    %532 = vector.broadcast %cst_200 : f32 to vector<8x128xf32>
    %533 = arith.addf %523, %532 : vector<8x128xf32>
    %cst_201 = arith.constant 0.0416666679 : f32
    %534 = vector.broadcast %cst_201 : f32 to vector<8x128xf32>
    %535 = arith.addf %531, %534 : vector<8x128xf32>
    %cst_202 = arith.constant 5.000000e-01 : f32
    %536 = vector.broadcast %cst_202 : f32 to vector<8x128xf32>
    %537 = arith.mulf %536, %407 : vector<8x128xf32>
    %538 = arith.addf %367, %537 : vector<8x128xf32>
    %cst_203 = arith.constant 0.166666672 : f32
    %539 = vector.broadcast %cst_203 : f32 to vector<8x128xf32>
    %540 = arith.mulf %539, %467 : vector<8x128xf32>
    %541 = arith.addf %538, %540 : vector<8x128xf32>
    %cst_204 = arith.constant 0.00833333377 : f32
    %542 = vector.broadcast %cst_204 : f32 to vector<8x128xf32>
    %543 = arith.mulf %542, %367 : vector<8x128xf32>
    %cst_205 = arith.constant 0.00138888892 : f32
    %544 = vector.broadcast %cst_205 : f32 to vector<8x128xf32>
    %545 = arith.mulf %544, %407 : vector<8x128xf32>
    %546 = arith.addf %543, %545 : vector<8x128xf32>
    %cst_206 = arith.constant 1.98412701E-4 : f32
    %547 = vector.broadcast %cst_206 : f32 to vector<8x128xf32>
    %548 = arith.mulf %547, %467 : vector<8x128xf32>
    %549 = arith.addf %546, %548 : vector<8x128xf32>
    %cst_207 = arith.constant 5.000000e-01 : f32
    %550 = vector.broadcast %cst_207 : f32 to vector<8x128xf32>
    %551 = arith.mulf %550, %412 : vector<8x128xf32>
    %552 = arith.addf %370, %551 : vector<8x128xf32>
    %cst_208 = arith.constant 0.166666672 : f32
    %553 = vector.broadcast %cst_208 : f32 to vector<8x128xf32>
    %554 = arith.mulf %553, %472 : vector<8x128xf32>
    %555 = arith.addf %552, %554 : vector<8x128xf32>
    %cst_209 = arith.constant 0.00833333377 : f32
    %556 = vector.broadcast %cst_209 : f32 to vector<8x128xf32>
    %557 = arith.mulf %556, %370 : vector<8x128xf32>
    %cst_210 = arith.constant 0.00138888892 : f32
    %558 = vector.broadcast %cst_210 : f32 to vector<8x128xf32>
    %559 = arith.mulf %558, %412 : vector<8x128xf32>
    %560 = arith.addf %557, %559 : vector<8x128xf32>
    %cst_211 = arith.constant 1.98412701E-4 : f32
    %561 = vector.broadcast %cst_211 : f32 to vector<8x128xf32>
    %562 = arith.mulf %561, %472 : vector<8x128xf32>
    %563 = arith.addf %560, %562 : vector<8x128xf32>
    %cst_212 = arith.constant 5.000000e-01 : f32
    %564 = vector.broadcast %cst_212 : f32 to vector<8x128xf32>
    %565 = arith.mulf %564, %417 : vector<8x128xf32>
    %566 = arith.addf %373, %565 : vector<8x128xf32>
    %cst_213 = arith.constant 0.166666672 : f32
    %567 = vector.broadcast %cst_213 : f32 to vector<8x128xf32>
    %568 = arith.mulf %567, %477 : vector<8x128xf32>
    %569 = arith.addf %566, %568 : vector<8x128xf32>
    %cst_214 = arith.constant 0.00833333377 : f32
    %570 = vector.broadcast %cst_214 : f32 to vector<8x128xf32>
    %571 = arith.mulf %570, %373 : vector<8x128xf32>
    %cst_215 = arith.constant 0.00138888892 : f32
    %572 = vector.broadcast %cst_215 : f32 to vector<8x128xf32>
    %573 = arith.mulf %572, %417 : vector<8x128xf32>
    %574 = arith.addf %571, %573 : vector<8x128xf32>
    %cst_216 = arith.constant 1.98412701E-4 : f32
    %575 = vector.broadcast %cst_216 : f32 to vector<8x128xf32>
    %576 = arith.mulf %575, %477 : vector<8x128xf32>
    %577 = arith.addf %574, %576 : vector<8x128xf32>
    %cst_217 = arith.constant 5.000000e-01 : f32
    %578 = vector.broadcast %cst_217 : f32 to vector<8x128xf32>
    %579 = arith.mulf %578, %422 : vector<8x128xf32>
    %580 = arith.addf %376, %579 : vector<8x128xf32>
    %cst_218 = arith.constant 0.166666672 : f32
    %581 = vector.broadcast %cst_218 : f32 to vector<8x128xf32>
    %582 = arith.mulf %581, %482 : vector<8x128xf32>
    %583 = arith.addf %580, %582 : vector<8x128xf32>
    %cst_219 = arith.constant 0.00833333377 : f32
    %584 = vector.broadcast %cst_219 : f32 to vector<8x128xf32>
    %585 = arith.mulf %584, %376 : vector<8x128xf32>
    %cst_220 = arith.constant 0.00138888892 : f32
    %586 = vector.broadcast %cst_220 : f32 to vector<8x128xf32>
    %587 = arith.mulf %586, %422 : vector<8x128xf32>
    %588 = arith.addf %585, %587 : vector<8x128xf32>
    %cst_221 = arith.constant 1.98412701E-4 : f32
    %589 = vector.broadcast %cst_221 : f32 to vector<8x128xf32>
    %590 = arith.mulf %589, %482 : vector<8x128xf32>
    %591 = arith.addf %588, %590 : vector<8x128xf32>
    %cst_222 = arith.constant 5.000000e-01 : f32
    %592 = vector.broadcast %cst_222 : f32 to vector<8x128xf32>
    %593 = arith.mulf %592, %427 : vector<8x128xf32>
    %594 = arith.addf %379, %593 : vector<8x128xf32>
    %cst_223 = arith.constant 0.166666672 : f32
    %595 = vector.broadcast %cst_223 : f32 to vector<8x128xf32>
    %596 = arith.mulf %595, %487 : vector<8x128xf32>
    %597 = arith.addf %594, %596 : vector<8x128xf32>
    %cst_224 = arith.constant 0.00833333377 : f32
    %598 = vector.broadcast %cst_224 : f32 to vector<8x128xf32>
    %599 = arith.mulf %598, %379 : vector<8x128xf32>
    %cst_225 = arith.constant 0.00138888892 : f32
    %600 = vector.broadcast %cst_225 : f32 to vector<8x128xf32>
    %601 = arith.mulf %600, %427 : vector<8x128xf32>
    %602 = arith.addf %599, %601 : vector<8x128xf32>
    %cst_226 = arith.constant 1.98412701E-4 : f32
    %603 = vector.broadcast %cst_226 : f32 to vector<8x128xf32>
    %604 = arith.mulf %603, %487 : vector<8x128xf32>
    %605 = arith.addf %602, %604 : vector<8x128xf32>
    %cst_227 = arith.constant 1.000000e+00 : f32
    %606 = vector.broadcast %cst_227 : f32 to vector<8x128xf32>
    %607 = arith.addf %597, %606 : vector<8x128xf32>
    %cst_228 = arith.constant 0.0416666679 : f32
    %608 = vector.broadcast %cst_228 : f32 to vector<8x128xf32>
    %609 = arith.addf %605, %608 : vector<8x128xf32>
    %cst_229 = arith.constant 5.000000e-01 : f32
    %610 = vector.broadcast %cst_229 : f32 to vector<8x128xf32>
    %611 = arith.mulf %610, %432 : vector<8x128xf32>
    %612 = arith.addf %382, %611 : vector<8x128xf32>
    %cst_230 = arith.constant 0.166666672 : f32
    %613 = vector.broadcast %cst_230 : f32 to vector<8x128xf32>
    %614 = arith.mulf %613, %492 : vector<8x128xf32>
    %615 = arith.addf %612, %614 : vector<8x128xf32>
    %cst_231 = arith.constant 0.00833333377 : f32
    %616 = vector.broadcast %cst_231 : f32 to vector<8x128xf32>
    %617 = arith.mulf %616, %382 : vector<8x128xf32>
    %cst_232 = arith.constant 0.00138888892 : f32
    %618 = vector.broadcast %cst_232 : f32 to vector<8x128xf32>
    %619 = arith.mulf %618, %432 : vector<8x128xf32>
    %620 = arith.addf %617, %619 : vector<8x128xf32>
    %cst_233 = arith.constant 1.98412701E-4 : f32
    %621 = vector.broadcast %cst_233 : f32 to vector<8x128xf32>
    %622 = arith.mulf %621, %492 : vector<8x128xf32>
    %623 = arith.addf %620, %622 : vector<8x128xf32>
    %cst_234 = arith.constant 5.000000e-01 : f32
    %624 = vector.broadcast %cst_234 : f32 to vector<8x128xf32>
    %625 = arith.mulf %624, %437 : vector<8x128xf32>
    %626 = arith.addf %385, %625 : vector<8x128xf32>
    %cst_235 = arith.constant 0.166666672 : f32
    %627 = vector.broadcast %cst_235 : f32 to vector<8x128xf32>
    %628 = arith.mulf %627, %497 : vector<8x128xf32>
    %629 = arith.addf %626, %628 : vector<8x128xf32>
    %cst_236 = arith.constant 0.00833333377 : f32
    %630 = vector.broadcast %cst_236 : f32 to vector<8x128xf32>
    %631 = arith.mulf %630, %385 : vector<8x128xf32>
    %cst_237 = arith.constant 0.00138888892 : f32
    %632 = vector.broadcast %cst_237 : f32 to vector<8x128xf32>
    %633 = arith.mulf %632, %437 : vector<8x128xf32>
    %634 = arith.addf %631, %633 : vector<8x128xf32>
    %cst_238 = arith.constant 1.98412701E-4 : f32
    %635 = vector.broadcast %cst_238 : f32 to vector<8x128xf32>
    %636 = arith.mulf %635, %497 : vector<8x128xf32>
    %637 = arith.addf %634, %636 : vector<8x128xf32>
    %cst_239 = arith.constant 5.000000e-01 : f32
    %638 = vector.broadcast %cst_239 : f32 to vector<8x128xf32>
    %639 = arith.mulf %638, %442 : vector<8x128xf32>
    %640 = arith.addf %388, %639 : vector<8x128xf32>
    %cst_240 = arith.constant 0.166666672 : f32
    %641 = vector.broadcast %cst_240 : f32 to vector<8x128xf32>
    %642 = arith.mulf %641, %502 : vector<8x128xf32>
    %643 = arith.addf %640, %642 : vector<8x128xf32>
    %cst_241 = arith.constant 0.00833333377 : f32
    %644 = vector.broadcast %cst_241 : f32 to vector<8x128xf32>
    %645 = arith.mulf %644, %388 : vector<8x128xf32>
    %cst_242 = arith.constant 0.00138888892 : f32
    %646 = vector.broadcast %cst_242 : f32 to vector<8x128xf32>
    %647 = arith.mulf %646, %442 : vector<8x128xf32>
    %648 = arith.addf %645, %647 : vector<8x128xf32>
    %cst_243 = arith.constant 1.98412701E-4 : f32
    %649 = vector.broadcast %cst_243 : f32 to vector<8x128xf32>
    %650 = arith.mulf %649, %502 : vector<8x128xf32>
    %651 = arith.addf %648, %650 : vector<8x128xf32>
    %cst_244 = arith.constant 5.000000e-01 : f32
    %652 = vector.broadcast %cst_244 : f32 to vector<8x128xf32>
    %653 = arith.mulf %652, %447 : vector<8x128xf32>
    %654 = arith.addf %391, %653 : vector<8x128xf32>
    %cst_245 = arith.constant 0.166666672 : f32
    %655 = vector.broadcast %cst_245 : f32 to vector<8x128xf32>
    %656 = arith.mulf %655, %507 : vector<8x128xf32>
    %657 = arith.addf %654, %656 : vector<8x128xf32>
    %cst_246 = arith.constant 0.00833333377 : f32
    %658 = vector.broadcast %cst_246 : f32 to vector<8x128xf32>
    %659 = arith.mulf %658, %391 : vector<8x128xf32>
    %cst_247 = arith.constant 0.00138888892 : f32
    %660 = vector.broadcast %cst_247 : f32 to vector<8x128xf32>
    %661 = arith.mulf %660, %447 : vector<8x128xf32>
    %662 = arith.addf %659, %661 : vector<8x128xf32>
    %cst_248 = arith.constant 1.98412701E-4 : f32
    %663 = vector.broadcast %cst_248 : f32 to vector<8x128xf32>
    %664 = arith.mulf %663, %507 : vector<8x128xf32>
    %665 = arith.addf %662, %664 : vector<8x128xf32>
    %cst_249 = arith.constant 5.000000e-01 : f32
    %666 = vector.broadcast %cst_249 : f32 to vector<8x128xf32>
    %667 = arith.mulf %666, %452 : vector<8x128xf32>
    %668 = arith.addf %394, %667 : vector<8x128xf32>
    %cst_250 = arith.constant 0.166666672 : f32
    %669 = vector.broadcast %cst_250 : f32 to vector<8x128xf32>
    %670 = arith.mulf %669, %512 : vector<8x128xf32>
    %671 = arith.addf %668, %670 : vector<8x128xf32>
    %cst_251 = arith.constant 0.00833333377 : f32
    %672 = vector.broadcast %cst_251 : f32 to vector<8x128xf32>
    %673 = arith.mulf %672, %394 : vector<8x128xf32>
    %cst_252 = arith.constant 0.00138888892 : f32
    %674 = vector.broadcast %cst_252 : f32 to vector<8x128xf32>
    %675 = arith.mulf %674, %452 : vector<8x128xf32>
    %676 = arith.addf %673, %675 : vector<8x128xf32>
    %cst_253 = arith.constant 1.98412701E-4 : f32
    %677 = vector.broadcast %cst_253 : f32 to vector<8x128xf32>
    %678 = arith.mulf %677, %512 : vector<8x128xf32>
    %679 = arith.addf %676, %678 : vector<8x128xf32>
    %cst_254 = arith.constant 1.000000e+00 : f32
    %680 = vector.broadcast %cst_254 : f32 to vector<8x128xf32>
    %681 = arith.addf %671, %680 : vector<8x128xf32>
    %cst_255 = arith.constant 0.0416666679 : f32
    %682 = vector.broadcast %cst_255 : f32 to vector<8x128xf32>
    %683 = arith.addf %679, %682 : vector<8x128xf32>
    %cst_256 = arith.constant 5.000000e-01 : f32
    %684 = vector.broadcast %cst_256 : f32 to vector<8x128xf32>
    %685 = arith.mulf %684, %457 : vector<8x128xf32>
    %686 = arith.addf %397, %685 : vector<8x128xf32>
    %cst_257 = arith.constant 0.166666672 : f32
    %687 = vector.broadcast %cst_257 : f32 to vector<8x128xf32>
    %688 = arith.mulf %687, %517 : vector<8x128xf32>
    %689 = arith.addf %686, %688 : vector<8x128xf32>
    %cst_258 = arith.constant 0.00833333377 : f32
    %690 = vector.broadcast %cst_258 : f32 to vector<8x128xf32>
    %691 = arith.mulf %690, %397 : vector<8x128xf32>
    %cst_259 = arith.constant 0.00138888892 : f32
    %692 = vector.broadcast %cst_259 : f32 to vector<8x128xf32>
    %693 = arith.mulf %692, %457 : vector<8x128xf32>
    %694 = arith.addf %691, %693 : vector<8x128xf32>
    %cst_260 = arith.constant 1.98412701E-4 : f32
    %695 = vector.broadcast %cst_260 : f32 to vector<8x128xf32>
    %696 = arith.mulf %695, %517 : vector<8x128xf32>
    %697 = arith.addf %694, %696 : vector<8x128xf32>
    %698 = arith.mulf %402, %402 : vector<8x128xf32>
    %699 = arith.mulf %407, %422 : vector<8x128xf32>
    %700 = arith.addf %698, %699 : vector<8x128xf32>
    %701 = arith.mulf %412, %442 : vector<8x128xf32>
    %702 = arith.addf %700, %701 : vector<8x128xf32>
    %703 = arith.mulf %402, %407 : vector<8x128xf32>
    %704 = arith.mulf %407, %427 : vector<8x128xf32>
    %705 = arith.addf %703, %704 : vector<8x128xf32>
    %706 = arith.mulf %412, %447 : vector<8x128xf32>
    %707 = arith.addf %705, %706 : vector<8x128xf32>
    %708 = arith.mulf %402, %412 : vector<8x128xf32>
    %709 = arith.mulf %407, %432 : vector<8x128xf32>
    %710 = arith.addf %708, %709 : vector<8x128xf32>
    %711 = arith.mulf %412, %452 : vector<8x128xf32>
    %712 = arith.addf %710, %711 : vector<8x128xf32>
    %713 = arith.mulf %402, %417 : vector<8x128xf32>
    %714 = arith.mulf %407, %437 : vector<8x128xf32>
    %715 = arith.addf %713, %714 : vector<8x128xf32>
    %716 = arith.mulf %412, %457 : vector<8x128xf32>
    %717 = arith.addf %715, %716 : vector<8x128xf32>
    %718 = arith.mulf %422, %402 : vector<8x128xf32>
    %719 = arith.mulf %427, %422 : vector<8x128xf32>
    %720 = arith.addf %718, %719 : vector<8x128xf32>
    %721 = arith.mulf %432, %442 : vector<8x128xf32>
    %722 = arith.addf %720, %721 : vector<8x128xf32>
    %723 = arith.mulf %422, %407 : vector<8x128xf32>
    %724 = arith.mulf %427, %427 : vector<8x128xf32>
    %725 = arith.addf %723, %724 : vector<8x128xf32>
    %726 = arith.mulf %432, %447 : vector<8x128xf32>
    %727 = arith.addf %725, %726 : vector<8x128xf32>
    %728 = arith.mulf %422, %412 : vector<8x128xf32>
    %729 = arith.mulf %427, %432 : vector<8x128xf32>
    %730 = arith.addf %728, %729 : vector<8x128xf32>
    %731 = arith.mulf %432, %452 : vector<8x128xf32>
    %732 = arith.addf %730, %731 : vector<8x128xf32>
    %733 = arith.mulf %422, %417 : vector<8x128xf32>
    %734 = arith.mulf %427, %437 : vector<8x128xf32>
    %735 = arith.addf %733, %734 : vector<8x128xf32>
    %736 = arith.mulf %432, %457 : vector<8x128xf32>
    %737 = arith.addf %735, %736 : vector<8x128xf32>
    %738 = arith.mulf %442, %402 : vector<8x128xf32>
    %739 = arith.mulf %447, %422 : vector<8x128xf32>
    %740 = arith.addf %738, %739 : vector<8x128xf32>
    %741 = arith.mulf %452, %442 : vector<8x128xf32>
    %742 = arith.addf %740, %741 : vector<8x128xf32>
    %743 = arith.mulf %442, %407 : vector<8x128xf32>
    %744 = arith.mulf %447, %427 : vector<8x128xf32>
    %745 = arith.addf %743, %744 : vector<8x128xf32>
    %746 = arith.mulf %452, %447 : vector<8x128xf32>
    %747 = arith.addf %745, %746 : vector<8x128xf32>
    %748 = arith.mulf %442, %412 : vector<8x128xf32>
    %749 = arith.mulf %447, %432 : vector<8x128xf32>
    %750 = arith.addf %748, %749 : vector<8x128xf32>
    %751 = arith.mulf %452, %452 : vector<8x128xf32>
    %752 = arith.addf %750, %751 : vector<8x128xf32>
    %753 = arith.mulf %442, %417 : vector<8x128xf32>
    %754 = arith.mulf %447, %437 : vector<8x128xf32>
    %755 = arith.addf %753, %754 : vector<8x128xf32>
    %756 = arith.mulf %452, %457 : vector<8x128xf32>
    %757 = arith.addf %755, %756 : vector<8x128xf32>
    %cst_261 = arith.constant 2.48015876E-5 : f32
    %758 = vector.broadcast %cst_261 : f32 to vector<8x128xf32>
    %759 = arith.mulf %758, %702 : vector<8x128xf32>
    %760 = arith.addf %535, %759 : vector<8x128xf32>
    %cst_262 = arith.constant 2.48015876E-5 : f32
    %761 = vector.broadcast %cst_262 : f32 to vector<8x128xf32>
    %762 = arith.mulf %761, %707 : vector<8x128xf32>
    %763 = arith.addf %549, %762 : vector<8x128xf32>
    %cst_263 = arith.constant 2.48015876E-5 : f32
    %764 = vector.broadcast %cst_263 : f32 to vector<8x128xf32>
    %765 = arith.mulf %764, %712 : vector<8x128xf32>
    %766 = arith.addf %563, %765 : vector<8x128xf32>
    %cst_264 = arith.constant 2.48015876E-5 : f32
    %767 = vector.broadcast %cst_264 : f32 to vector<8x128xf32>
    %768 = arith.mulf %767, %717 : vector<8x128xf32>
    %769 = arith.addf %577, %768 : vector<8x128xf32>
    %cst_265 = arith.constant 2.48015876E-5 : f32
    %770 = vector.broadcast %cst_265 : f32 to vector<8x128xf32>
    %771 = arith.mulf %770, %722 : vector<8x128xf32>
    %772 = arith.addf %591, %771 : vector<8x128xf32>
    %cst_266 = arith.constant 2.48015876E-5 : f32
    %773 = vector.broadcast %cst_266 : f32 to vector<8x128xf32>
    %774 = arith.mulf %773, %727 : vector<8x128xf32>
    %775 = arith.addf %609, %774 : vector<8x128xf32>
    %cst_267 = arith.constant 2.48015876E-5 : f32
    %776 = vector.broadcast %cst_267 : f32 to vector<8x128xf32>
    %777 = arith.mulf %776, %732 : vector<8x128xf32>
    %778 = arith.addf %623, %777 : vector<8x128xf32>
    %cst_268 = arith.constant 2.48015876E-5 : f32
    %779 = vector.broadcast %cst_268 : f32 to vector<8x128xf32>
    %780 = arith.mulf %779, %737 : vector<8x128xf32>
    %781 = arith.addf %637, %780 : vector<8x128xf32>
    %cst_269 = arith.constant 2.48015876E-5 : f32
    %782 = vector.broadcast %cst_269 : f32 to vector<8x128xf32>
    %783 = arith.mulf %782, %742 : vector<8x128xf32>
    %784 = arith.addf %651, %783 : vector<8x128xf32>
    %cst_270 = arith.constant 2.48015876E-5 : f32
    %785 = vector.broadcast %cst_270 : f32 to vector<8x128xf32>
    %786 = arith.mulf %785, %747 : vector<8x128xf32>
    %787 = arith.addf %665, %786 : vector<8x128xf32>
    %cst_271 = arith.constant 2.48015876E-5 : f32
    %788 = vector.broadcast %cst_271 : f32 to vector<8x128xf32>
    %789 = arith.mulf %788, %752 : vector<8x128xf32>
    %790 = arith.addf %683, %789 : vector<8x128xf32>
    %cst_272 = arith.constant 2.48015876E-5 : f32
    %791 = vector.broadcast %cst_272 : f32 to vector<8x128xf32>
    %792 = arith.mulf %791, %757 : vector<8x128xf32>
    %793 = arith.addf %697, %792 : vector<8x128xf32>
    %794 = arith.mulf %702, %760 : vector<8x128xf32>
    %795 = arith.mulf %707, %772 : vector<8x128xf32>
    %796 = arith.addf %794, %795 : vector<8x128xf32>
    %797 = arith.mulf %712, %784 : vector<8x128xf32>
    %798 = arith.addf %796, %797 : vector<8x128xf32>
    %799 = arith.mulf %702, %763 : vector<8x128xf32>
    %800 = arith.mulf %707, %775 : vector<8x128xf32>
    %801 = arith.addf %799, %800 : vector<8x128xf32>
    %802 = arith.mulf %712, %787 : vector<8x128xf32>
    %803 = arith.addf %801, %802 : vector<8x128xf32>
    %804 = arith.mulf %702, %766 : vector<8x128xf32>
    %805 = arith.mulf %707, %778 : vector<8x128xf32>
    %806 = arith.addf %804, %805 : vector<8x128xf32>
    %807 = arith.mulf %712, %790 : vector<8x128xf32>
    %808 = arith.addf %806, %807 : vector<8x128xf32>
    %809 = arith.mulf %702, %769 : vector<8x128xf32>
    %810 = arith.mulf %707, %781 : vector<8x128xf32>
    %811 = arith.addf %809, %810 : vector<8x128xf32>
    %812 = arith.mulf %712, %793 : vector<8x128xf32>
    %813 = arith.addf %811, %812 : vector<8x128xf32>
    %cst_273 = arith.constant 0.0416666679 : f32
    %814 = vector.broadcast %cst_273 : f32 to vector<8x128xf32>
    %815 = arith.mulf %814, %717 : vector<8x128xf32>
    %816 = arith.addf %813, %815 : vector<8x128xf32>
    %817 = arith.mulf %722, %760 : vector<8x128xf32>
    %818 = arith.mulf %727, %772 : vector<8x128xf32>
    %819 = arith.addf %817, %818 : vector<8x128xf32>
    %820 = arith.mulf %732, %784 : vector<8x128xf32>
    %821 = arith.addf %819, %820 : vector<8x128xf32>
    %822 = arith.mulf %722, %763 : vector<8x128xf32>
    %823 = arith.mulf %727, %775 : vector<8x128xf32>
    %824 = arith.addf %822, %823 : vector<8x128xf32>
    %825 = arith.mulf %732, %787 : vector<8x128xf32>
    %826 = arith.addf %824, %825 : vector<8x128xf32>
    %827 = arith.mulf %722, %766 : vector<8x128xf32>
    %828 = arith.mulf %727, %778 : vector<8x128xf32>
    %829 = arith.addf %827, %828 : vector<8x128xf32>
    %830 = arith.mulf %732, %790 : vector<8x128xf32>
    %831 = arith.addf %829, %830 : vector<8x128xf32>
    %832 = arith.mulf %722, %769 : vector<8x128xf32>
    %833 = arith.mulf %727, %781 : vector<8x128xf32>
    %834 = arith.addf %832, %833 : vector<8x128xf32>
    %835 = arith.mulf %732, %793 : vector<8x128xf32>
    %836 = arith.addf %834, %835 : vector<8x128xf32>
    %cst_274 = arith.constant 0.0416666679 : f32
    %837 = vector.broadcast %cst_274 : f32 to vector<8x128xf32>
    %838 = arith.mulf %837, %737 : vector<8x128xf32>
    %839 = arith.addf %836, %838 : vector<8x128xf32>
    %840 = arith.mulf %742, %760 : vector<8x128xf32>
    %841 = arith.mulf %747, %772 : vector<8x128xf32>
    %842 = arith.addf %840, %841 : vector<8x128xf32>
    %843 = arith.mulf %752, %784 : vector<8x128xf32>
    %844 = arith.addf %842, %843 : vector<8x128xf32>
    %845 = arith.mulf %742, %763 : vector<8x128xf32>
    %846 = arith.mulf %747, %775 : vector<8x128xf32>
    %847 = arith.addf %845, %846 : vector<8x128xf32>
    %848 = arith.mulf %752, %787 : vector<8x128xf32>
    %849 = arith.addf %847, %848 : vector<8x128xf32>
    %850 = arith.mulf %742, %766 : vector<8x128xf32>
    %851 = arith.mulf %747, %778 : vector<8x128xf32>
    %852 = arith.addf %850, %851 : vector<8x128xf32>
    %853 = arith.mulf %752, %790 : vector<8x128xf32>
    %854 = arith.addf %852, %853 : vector<8x128xf32>
    %855 = arith.mulf %742, %769 : vector<8x128xf32>
    %856 = arith.mulf %747, %781 : vector<8x128xf32>
    %857 = arith.addf %855, %856 : vector<8x128xf32>
    %858 = arith.mulf %752, %793 : vector<8x128xf32>
    %859 = arith.addf %857, %858 : vector<8x128xf32>
    %cst_275 = arith.constant 0.0416666679 : f32
    %860 = vector.broadcast %cst_275 : f32 to vector<8x128xf32>
    %861 = arith.mulf %860, %757 : vector<8x128xf32>
    %862 = arith.addf %859, %861 : vector<8x128xf32>
    %863 = arith.addf %533, %798 : vector<8x128xf32>
    %864 = arith.addf %541, %803 : vector<8x128xf32>
    %865 = arith.addf %555, %808 : vector<8x128xf32>
    %866 = arith.addf %569, %816 : vector<8x128xf32>
    %867 = arith.addf %583, %821 : vector<8x128xf32>
    %868 = arith.addf %607, %826 : vector<8x128xf32>
    %869 = arith.addf %615, %831 : vector<8x128xf32>
    %870 = arith.addf %629, %839 : vector<8x128xf32>
    %871 = arith.addf %643, %844 : vector<8x128xf32>
    %872 = arith.addf %657, %849 : vector<8x128xf32>
    %873 = arith.addf %681, %854 : vector<8x128xf32>
    %874 = arith.addf %689, %862 : vector<8x128xf32>
    %875 = arith.mulf %863, %863 : vector<8x128xf32>
    %876 = arith.mulf %864, %867 : vector<8x128xf32>
    %877 = arith.addf %875, %876 : vector<8x128xf32>
    %878 = arith.mulf %865, %871 : vector<8x128xf32>
    %879 = arith.addf %877, %878 : vector<8x128xf32>
    %880 = arith.mulf %863, %864 : vector<8x128xf32>
    %881 = arith.mulf %864, %868 : vector<8x128xf32>
    %882 = arith.addf %880, %881 : vector<8x128xf32>
    %883 = arith.mulf %865, %872 : vector<8x128xf32>
    %884 = arith.addf %882, %883 : vector<8x128xf32>
    %885 = arith.mulf %863, %865 : vector<8x128xf32>
    %886 = arith.mulf %864, %869 : vector<8x128xf32>
    %887 = arith.addf %885, %886 : vector<8x128xf32>
    %888 = arith.mulf %865, %873 : vector<8x128xf32>
    %889 = arith.addf %887, %888 : vector<8x128xf32>
    %890 = arith.mulf %863, %866 : vector<8x128xf32>
    %891 = arith.mulf %864, %870 : vector<8x128xf32>
    %892 = arith.addf %890, %891 : vector<8x128xf32>
    %893 = arith.mulf %865, %874 : vector<8x128xf32>
    %894 = arith.addf %892, %893 : vector<8x128xf32>
    %895 = arith.addf %894, %866 : vector<8x128xf32>
    %896 = arith.mulf %867, %863 : vector<8x128xf32>
    %897 = arith.mulf %868, %867 : vector<8x128xf32>
    %898 = arith.addf %896, %897 : vector<8x128xf32>
    %899 = arith.mulf %869, %871 : vector<8x128xf32>
    %900 = arith.addf %898, %899 : vector<8x128xf32>
    %901 = arith.mulf %867, %864 : vector<8x128xf32>
    %902 = arith.mulf %868, %868 : vector<8x128xf32>
    %903 = arith.addf %901, %902 : vector<8x128xf32>
    %904 = arith.mulf %869, %872 : vector<8x128xf32>
    %905 = arith.addf %903, %904 : vector<8x128xf32>
    %906 = arith.mulf %867, %865 : vector<8x128xf32>
    %907 = arith.mulf %868, %869 : vector<8x128xf32>
    %908 = arith.addf %906, %907 : vector<8x128xf32>
    %909 = arith.mulf %869, %873 : vector<8x128xf32>
    %910 = arith.addf %908, %909 : vector<8x128xf32>
    %911 = arith.mulf %867, %866 : vector<8x128xf32>
    %912 = arith.mulf %868, %870 : vector<8x128xf32>
    %913 = arith.addf %911, %912 : vector<8x128xf32>
    %914 = arith.mulf %869, %874 : vector<8x128xf32>
    %915 = arith.addf %913, %914 : vector<8x128xf32>
    %916 = arith.addf %915, %870 : vector<8x128xf32>
    %917 = arith.mulf %871, %863 : vector<8x128xf32>
    %918 = arith.mulf %872, %867 : vector<8x128xf32>
    %919 = arith.addf %917, %918 : vector<8x128xf32>
    %920 = arith.mulf %873, %871 : vector<8x128xf32>
    %921 = arith.addf %919, %920 : vector<8x128xf32>
    %922 = arith.mulf %871, %864 : vector<8x128xf32>
    %923 = arith.mulf %872, %868 : vector<8x128xf32>
    %924 = arith.addf %922, %923 : vector<8x128xf32>
    %925 = arith.mulf %873, %872 : vector<8x128xf32>
    %926 = arith.addf %924, %925 : vector<8x128xf32>
    %927 = arith.mulf %871, %865 : vector<8x128xf32>
    %928 = arith.mulf %872, %869 : vector<8x128xf32>
    %929 = arith.addf %927, %928 : vector<8x128xf32>
    %930 = arith.mulf %873, %873 : vector<8x128xf32>
    %931 = arith.addf %929, %930 : vector<8x128xf32>
    %932 = arith.mulf %871, %866 : vector<8x128xf32>
    %933 = arith.mulf %872, %870 : vector<8x128xf32>
    %934 = arith.addf %932, %933 : vector<8x128xf32>
    %935 = arith.mulf %873, %874 : vector<8x128xf32>
    %936 = arith.addf %934, %935 : vector<8x128xf32>
    %937 = arith.addf %936, %874 : vector<8x128xf32>
    %938 = arith.mulf %879, %879 : vector<8x128xf32>
    %939 = arith.mulf %884, %900 : vector<8x128xf32>
    %940 = arith.addf %938, %939 : vector<8x128xf32>
    %941 = arith.mulf %889, %921 : vector<8x128xf32>
    %942 = arith.addf %940, %941 : vector<8x128xf32>
    %943 = arith.mulf %879, %884 : vector<8x128xf32>
    %944 = arith.mulf %884, %905 : vector<8x128xf32>
    %945 = arith.addf %943, %944 : vector<8x128xf32>
    %946 = arith.mulf %889, %926 : vector<8x128xf32>
    %947 = arith.addf %945, %946 : vector<8x128xf32>
    %948 = arith.mulf %879, %889 : vector<8x128xf32>
    %949 = arith.mulf %884, %910 : vector<8x128xf32>
    %950 = arith.addf %948, %949 : vector<8x128xf32>
    %951 = arith.mulf %889, %931 : vector<8x128xf32>
    %952 = arith.addf %950, %951 : vector<8x128xf32>
    %953 = arith.mulf %879, %895 : vector<8x128xf32>
    %954 = arith.mulf %884, %916 : vector<8x128xf32>
    %955 = arith.addf %953, %954 : vector<8x128xf32>
    %956 = arith.mulf %889, %937 : vector<8x128xf32>
    %957 = arith.addf %955, %956 : vector<8x128xf32>
    %958 = arith.addf %957, %895 : vector<8x128xf32>
    %959 = arith.mulf %900, %879 : vector<8x128xf32>
    %960 = arith.mulf %905, %900 : vector<8x128xf32>
    %961 = arith.addf %959, %960 : vector<8x128xf32>
    %962 = arith.mulf %910, %921 : vector<8x128xf32>
    %963 = arith.addf %961, %962 : vector<8x128xf32>
    %964 = arith.mulf %900, %884 : vector<8x128xf32>
    %965 = arith.mulf %905, %905 : vector<8x128xf32>
    %966 = arith.addf %964, %965 : vector<8x128xf32>
    %967 = arith.mulf %910, %926 : vector<8x128xf32>
    %968 = arith.addf %966, %967 : vector<8x128xf32>
    %969 = arith.mulf %900, %889 : vector<8x128xf32>
    %970 = arith.mulf %905, %910 : vector<8x128xf32>
    %971 = arith.addf %969, %970 : vector<8x128xf32>
    %972 = arith.mulf %910, %931 : vector<8x128xf32>
    %973 = arith.addf %971, %972 : vector<8x128xf32>
    %974 = arith.mulf %900, %895 : vector<8x128xf32>
    %975 = arith.mulf %905, %916 : vector<8x128xf32>
    %976 = arith.addf %974, %975 : vector<8x128xf32>
    %977 = arith.mulf %910, %937 : vector<8x128xf32>
    %978 = arith.addf %976, %977 : vector<8x128xf32>
    %979 = arith.addf %978, %916 : vector<8x128xf32>
    %980 = arith.mulf %921, %879 : vector<8x128xf32>
    %981 = arith.mulf %926, %900 : vector<8x128xf32>
    %982 = arith.addf %980, %981 : vector<8x128xf32>
    %983 = arith.mulf %931, %921 : vector<8x128xf32>
    %984 = arith.addf %982, %983 : vector<8x128xf32>
    %985 = arith.mulf %921, %884 : vector<8x128xf32>
    %986 = arith.mulf %926, %905 : vector<8x128xf32>
    %987 = arith.addf %985, %986 : vector<8x128xf32>
    %988 = arith.mulf %931, %926 : vector<8x128xf32>
    %989 = arith.addf %987, %988 : vector<8x128xf32>
    %990 = arith.mulf %921, %889 : vector<8x128xf32>
    %991 = arith.mulf %926, %910 : vector<8x128xf32>
    %992 = arith.addf %990, %991 : vector<8x128xf32>
    %993 = arith.mulf %931, %931 : vector<8x128xf32>
    %994 = arith.addf %992, %993 : vector<8x128xf32>
    %995 = arith.mulf %921, %895 : vector<8x128xf32>
    %996 = arith.mulf %926, %916 : vector<8x128xf32>
    %997 = arith.addf %995, %996 : vector<8x128xf32>
    %998 = arith.mulf %931, %937 : vector<8x128xf32>
    %999 = arith.addf %997, %998 : vector<8x128xf32>
    %1000 = arith.addf %999, %937 : vector<8x128xf32>
    %1001 = arith.mulf %942, %942 : vector<8x128xf32>
    %1002 = arith.mulf %947, %963 : vector<8x128xf32>
    %1003 = arith.addf %1001, %1002 : vector<8x128xf32>
    %1004 = arith.mulf %952, %984 : vector<8x128xf32>
    %1005 = arith.addf %1003, %1004 : vector<8x128xf32>
    %1006 = arith.mulf %942, %947 : vector<8x128xf32>
    %1007 = arith.mulf %947, %968 : vector<8x128xf32>
    %1008 = arith.addf %1006, %1007 : vector<8x128xf32>
    %1009 = arith.mulf %952, %989 : vector<8x128xf32>
    %1010 = arith.addf %1008, %1009 : vector<8x128xf32>
    %1011 = arith.mulf %942, %952 : vector<8x128xf32>
    %1012 = arith.mulf %947, %973 : vector<8x128xf32>
    %1013 = arith.addf %1011, %1012 : vector<8x128xf32>
    %1014 = arith.mulf %952, %994 : vector<8x128xf32>
    %1015 = arith.addf %1013, %1014 : vector<8x128xf32>
    %1016 = arith.mulf %942, %958 : vector<8x128xf32>
    %1017 = arith.mulf %947, %979 : vector<8x128xf32>
    %1018 = arith.addf %1016, %1017 : vector<8x128xf32>
    %1019 = arith.mulf %952, %1000 : vector<8x128xf32>
    %1020 = arith.addf %1018, %1019 : vector<8x128xf32>
    %1021 = arith.addf %1020, %958 : vector<8x128xf32>
    %1022 = arith.mulf %963, %942 : vector<8x128xf32>
    %1023 = arith.mulf %968, %963 : vector<8x128xf32>
    %1024 = arith.addf %1022, %1023 : vector<8x128xf32>
    %1025 = arith.mulf %973, %984 : vector<8x128xf32>
    %1026 = arith.addf %1024, %1025 : vector<8x128xf32>
    %1027 = arith.mulf %963, %947 : vector<8x128xf32>
    %1028 = arith.mulf %968, %968 : vector<8x128xf32>
    %1029 = arith.addf %1027, %1028 : vector<8x128xf32>
    %1030 = arith.mulf %973, %989 : vector<8x128xf32>
    %1031 = arith.addf %1029, %1030 : vector<8x128xf32>
    %1032 = arith.mulf %963, %952 : vector<8x128xf32>
    %1033 = arith.mulf %968, %973 : vector<8x128xf32>
    %1034 = arith.addf %1032, %1033 : vector<8x128xf32>
    %1035 = arith.mulf %973, %994 : vector<8x128xf32>
    %1036 = arith.addf %1034, %1035 : vector<8x128xf32>
    %1037 = arith.mulf %963, %958 : vector<8x128xf32>
    %1038 = arith.mulf %968, %979 : vector<8x128xf32>
    %1039 = arith.addf %1037, %1038 : vector<8x128xf32>
    %1040 = arith.mulf %973, %1000 : vector<8x128xf32>
    %1041 = arith.addf %1039, %1040 : vector<8x128xf32>
    %1042 = arith.addf %1041, %979 : vector<8x128xf32>
    %1043 = arith.mulf %984, %942 : vector<8x128xf32>
    %1044 = arith.mulf %989, %963 : vector<8x128xf32>
    %1045 = arith.addf %1043, %1044 : vector<8x128xf32>
    %1046 = arith.mulf %994, %984 : vector<8x128xf32>
    %1047 = arith.addf %1045, %1046 : vector<8x128xf32>
    %1048 = arith.mulf %984, %947 : vector<8x128xf32>
    %1049 = arith.mulf %989, %968 : vector<8x128xf32>
    %1050 = arith.addf %1048, %1049 : vector<8x128xf32>
    %1051 = arith.mulf %994, %989 : vector<8x128xf32>
    %1052 = arith.addf %1050, %1051 : vector<8x128xf32>
    %1053 = arith.mulf %984, %952 : vector<8x128xf32>
    %1054 = arith.mulf %989, %973 : vector<8x128xf32>
    %1055 = arith.addf %1053, %1054 : vector<8x128xf32>
    %1056 = arith.mulf %994, %994 : vector<8x128xf32>
    %1057 = arith.addf %1055, %1056 : vector<8x128xf32>
    %1058 = arith.mulf %984, %958 : vector<8x128xf32>
    %1059 = arith.mulf %989, %979 : vector<8x128xf32>
    %1060 = arith.addf %1058, %1059 : vector<8x128xf32>
    %1061 = arith.mulf %994, %1000 : vector<8x128xf32>
    %1062 = arith.addf %1060, %1061 : vector<8x128xf32>
    %1063 = arith.addf %1062, %1000 : vector<8x128xf32>
    %1064 = arith.mulf %1005, %1005 : vector<8x128xf32>
    %1065 = arith.mulf %1010, %1026 : vector<8x128xf32>
    %1066 = arith.addf %1064, %1065 : vector<8x128xf32>
    %1067 = arith.mulf %1015, %1047 : vector<8x128xf32>
    %1068 = arith.addf %1066, %1067 : vector<8x128xf32>
    %1069 = arith.mulf %1005, %1010 : vector<8x128xf32>
    %1070 = arith.mulf %1010, %1031 : vector<8x128xf32>
    %1071 = arith.addf %1069, %1070 : vector<8x128xf32>
    %1072 = arith.mulf %1015, %1052 : vector<8x128xf32>
    %1073 = arith.addf %1071, %1072 : vector<8x128xf32>
    %1074 = arith.mulf %1005, %1015 : vector<8x128xf32>
    %1075 = arith.mulf %1010, %1036 : vector<8x128xf32>
    %1076 = arith.addf %1074, %1075 : vector<8x128xf32>
    %1077 = arith.mulf %1015, %1057 : vector<8x128xf32>
    %1078 = arith.addf %1076, %1077 : vector<8x128xf32>
    %1079 = arith.mulf %1005, %1021 : vector<8x128xf32>
    %1080 = arith.mulf %1010, %1042 : vector<8x128xf32>
    %1081 = arith.addf %1079, %1080 : vector<8x128xf32>
    %1082 = arith.mulf %1015, %1063 : vector<8x128xf32>
    %1083 = arith.addf %1081, %1082 : vector<8x128xf32>
    %1084 = arith.addf %1083, %1021 : vector<8x128xf32>
    %1085 = arith.mulf %1026, %1005 : vector<8x128xf32>
    %1086 = arith.mulf %1031, %1026 : vector<8x128xf32>
    %1087 = arith.addf %1085, %1086 : vector<8x128xf32>
    %1088 = arith.mulf %1036, %1047 : vector<8x128xf32>
    %1089 = arith.addf %1087, %1088 : vector<8x128xf32>
    %1090 = arith.mulf %1026, %1010 : vector<8x128xf32>
    %1091 = arith.mulf %1031, %1031 : vector<8x128xf32>
    %1092 = arith.addf %1090, %1091 : vector<8x128xf32>
    %1093 = arith.mulf %1036, %1052 : vector<8x128xf32>
    %1094 = arith.addf %1092, %1093 : vector<8x128xf32>
    %1095 = arith.mulf %1026, %1015 : vector<8x128xf32>
    %1096 = arith.mulf %1031, %1036 : vector<8x128xf32>
    %1097 = arith.addf %1095, %1096 : vector<8x128xf32>
    %1098 = arith.mulf %1036, %1057 : vector<8x128xf32>
    %1099 = arith.addf %1097, %1098 : vector<8x128xf32>
    %1100 = arith.mulf %1026, %1021 : vector<8x128xf32>
    %1101 = arith.mulf %1031, %1042 : vector<8x128xf32>
    %1102 = arith.addf %1100, %1101 : vector<8x128xf32>
    %1103 = arith.mulf %1036, %1063 : vector<8x128xf32>
    %1104 = arith.addf %1102, %1103 : vector<8x128xf32>
    %1105 = arith.addf %1104, %1042 : vector<8x128xf32>
    %1106 = arith.mulf %1047, %1005 : vector<8x128xf32>
    %1107 = arith.mulf %1052, %1026 : vector<8x128xf32>
    %1108 = arith.addf %1106, %1107 : vector<8x128xf32>
    %1109 = arith.mulf %1057, %1047 : vector<8x128xf32>
    %1110 = arith.addf %1108, %1109 : vector<8x128xf32>
    %1111 = arith.mulf %1047, %1010 : vector<8x128xf32>
    %1112 = arith.mulf %1052, %1031 : vector<8x128xf32>
    %1113 = arith.addf %1111, %1112 : vector<8x128xf32>
    %1114 = arith.mulf %1057, %1052 : vector<8x128xf32>
    %1115 = arith.addf %1113, %1114 : vector<8x128xf32>
    %1116 = arith.mulf %1047, %1015 : vector<8x128xf32>
    %1117 = arith.mulf %1052, %1036 : vector<8x128xf32>
    %1118 = arith.addf %1116, %1117 : vector<8x128xf32>
    %1119 = arith.mulf %1057, %1057 : vector<8x128xf32>
    %1120 = arith.addf %1118, %1119 : vector<8x128xf32>
    %1121 = arith.mulf %1047, %1021 : vector<8x128xf32>
    %1122 = arith.mulf %1052, %1042 : vector<8x128xf32>
    %1123 = arith.addf %1121, %1122 : vector<8x128xf32>
    %1124 = arith.mulf %1057, %1063 : vector<8x128xf32>
    %1125 = arith.addf %1123, %1124 : vector<8x128xf32>
    %1126 = arith.addf %1125, %1063 : vector<8x128xf32>
    %c0_276 = arith.constant 0 : index
    %1127 = arith.index_cast %97 : i32 to index
    %c0_277 = arith.constant 0 : index
    %1128 = vector.load %arg3[%c0_276, %1127, %c0_277] : memref<3x16x128xf32, #tpu.memory_space<vmem>>, vector<1x8x128xf32>
    %1129 = vector.shape_cast %1128 : vector<1x8x128xf32> to vector<8x128xf32>
    %c1_278 = arith.constant 1 : index
    %1130 = arith.index_cast %97 : i32 to index
    %c0_279 = arith.constant 0 : index
    %1131 = vector.load %arg3[%c1_278, %1130, %c0_279] : memref<3x16x128xf32, #tpu.memory_space<vmem>>, vector<1x8x128xf32>
    %1132 = vector.shape_cast %1131 : vector<1x8x128xf32> to vector<8x128xf32>
    %c2_280 = arith.constant 2 : index
    %1133 = arith.index_cast %97 : i32 to index
    %c0_281 = arith.constant 0 : index
    %1134 = vector.load %arg3[%c2_280, %1133, %c0_281] : memref<3x16x128xf32, #tpu.memory_space<vmem>>, vector<1x8x128xf32>
    %1135 = vector.shape_cast %1134 : vector<1x8x128xf32> to vector<8x128xf32>
    %1136 = arith.mulf %1068, %1129 : vector<8x128xf32>
    %1137 = arith.mulf %1073, %1132 : vector<8x128xf32>
    %1138 = arith.addf %1136, %1137 : vector<8x128xf32>
    %1139 = arith.mulf %1078, %1135 : vector<8x128xf32>
    %1140 = arith.addf %1138, %1139 : vector<8x128xf32>
    %1141 = arith.addf %1140, %1084 : vector<8x128xf32>
    %1142 = arith.mulf %1089, %1129 : vector<8x128xf32>
    %1143 = arith.mulf %1094, %1132 : vector<8x128xf32>
    %1144 = arith.addf %1142, %1143 : vector<8x128xf32>
    %1145 = arith.mulf %1099, %1135 : vector<8x128xf32>
    %1146 = arith.addf %1144, %1145 : vector<8x128xf32>
    %1147 = arith.addf %1146, %1105 : vector<8x128xf32>
    %1148 = arith.mulf %1110, %1129 : vector<8x128xf32>
    %1149 = arith.mulf %1115, %1132 : vector<8x128xf32>
    %1150 = arith.addf %1148, %1149 : vector<8x128xf32>
    %1151 = arith.mulf %1120, %1135 : vector<8x128xf32>
    %1152 = arith.addf %1150, %1151 : vector<8x128xf32>
    %1153 = arith.addf %1152, %1126 : vector<8x128xf32>
    %cst_282 = arith.constant 8.000000e+00 : f32
    %1154 = vector.broadcast %cst_282 : f32 to vector<8x128xf32>
    %1155 = arith.mulf %1154, %1153 : vector<8x128xf32>
    %cst_283 = arith.constant 7.500000e+00 : f32
    %1156 = vector.broadcast %cst_283 : f32 to vector<8x128xf32>
    %1157 = arith.addf %1155, %1156 : vector<8x128xf32>
    %c0_284 = arith.constant 0 : index
    %1158 = arith.index_cast %97 : i32 to index
    %c0_285 = arith.constant 0 : index
    %1159 = vector.load %arg4[%c0_284, %1158, %c0_285] : memref<3x16x128xf32, #tpu.memory_space<vmem>>, vector<1x8x128xf32>
    %1160 = vector.shape_cast %1159 : vector<1x8x128xf32> to vector<8x128xf32>
    %1161 = vector.shape_cast %1157 : vector<8x128xf32> to vector<1x8x128xf32>
    tpu.vector_store %arg4[%c0_284, %1158, %c0_285], %1161 {strides = array<i32>} : memref<3x16x128xf32, #tpu.memory_space<vmem>>, vector<1x8x128xf32>,
    %cst_286 = arith.constant 8.000000e+00 : f32
    %1162 = vector.broadcast %cst_286 : f32 to vector<8x128xf32>
    %1163 = arith.mulf %1162, %1147 : vector<8x128xf32>
    %cst_287 = arith.constant 7.500000e+00 : f32
    %1164 = vector.broadcast %cst_287 : f32 to vector<8x128xf32>
    %1165 = arith.addf %1163, %1164 : vector<8x128xf32>
    %c1_288 = arith.constant 1 : index
    %1166 = arith.index_cast %97 : i32 to index
    %c0_289 = arith.constant 0 : index
    %1167 = vector.load %arg4[%c1_288, %1166, %c0_289] : memref<3x16x128xf32, #tpu.memory_space<vmem>>, vector<1x8x128xf32>
    %1168 = vector.shape_cast %1167 : vector<1x8x128xf32> to vector<8x128xf32>
    %1169 = vector.shape_cast %1165 : vector<8x128xf32> to vector<1x8x128xf32>
    tpu.vector_store %arg4[%c1_288, %1166, %c0_289], %1169 {strides = array<i32>} : memref<3x16x128xf32, #tpu.memory_space<vmem>>, vector<1x8x128xf32>,
    %cst_290 = arith.constant 8.000000e+00 : f32
    %1170 = vector.broadcast %cst_290 : f32 to vector<8x128xf32>
    %1171 = arith.mulf %1170, %1141 : vector<8x128xf32>
    %cst_291 = arith.constant 7.500000e+00 : f32
    %1172 = vector.broadcast %cst_291 : f32 to vector<8x128xf32>
    %1173 = arith.addf %1171, %1172 : vector<8x128xf32>
    %c2_292 = arith.constant 2 : index
    %1174 = arith.index_cast %97 : i32 to index
    %c0_293 = arith.constant 0 : index
    %1175 = vector.load %arg4[%c2_292, %1174, %c0_293] : memref<3x16x128xf32, #tpu.memory_space<vmem>>, vector<1x8x128xf32>
    %1176 = vector.shape_cast %1175 : vector<1x8x128xf32> to vector<8x128xf32>
    %1177 = vector.shape_cast %1173 : vector<8x128xf32> to vector<1x8x128xf32>
    tpu.vector_store %arg4[%c2_292, %1174, %c0_293], %1177 {strides = array<i32>} : memref<3x16x128xf32, #tpu.memory_space<vmem>>, vector<1x8x128xf32>,
    %c1_i32 = arith.constant 1 : i32
    %c8_i32_294 = arith.constant 8 : i32
    %1178 = arith.muli %c1_i32, %c8_i32_294 : i32
    %1179 = tpu.assume_multiple %1178, 8 : i32
    %c0_295 = arith.constant 0 : index
    %1180 = arith.index_cast %1179 : i32 to index
    %c0_296 = arith.constant 0 : index
    %1181 = vector.load %arg2[%c0_295, %1180, %c0_296] : memref<8x16x128xf32, #tpu.memory_space<vmem>>, vector<1x8x128xf32>
    %1182 = vector.shape_cast %1181 : vector<1x8x128xf32> to vector<8x128xf32>
    %1183 = vector.broadcast %0 : f32 to vector<8x128xf32>
    %1184 = arith.mulf %1183, %1182 : vector<8x128xf32>
    %1185 = vector.broadcast %1 : f32 to vector<8x128xf32>
    %1186 = arith.mulf %1185, %1182 : vector<8x128xf32>
    %1187 = vector.broadcast %2 : f32 to vector<8x128xf32>
    %1188 = arith.mulf %1187, %1182 : vector<8x128xf32>
    %1189 = vector.broadcast %3 : f32 to vector<8x128xf32>
    %1190 = arith.mulf %1189, %1182 : vector<8x128xf32>
    %1191 = vector.broadcast %4 : f32 to vector<8x128xf32>
    %1192 = arith.mulf %1191, %1182 : vector<8x128xf32>
    %1193 = vector.broadcast %5 : f32 to vector<8x128xf32>
    %1194 = arith.mulf %1193, %1182 : vector<8x128xf32>
    %1195 = vector.broadcast %6 : f32 to vector<8x128xf32>
    %1196 = arith.mulf %1195, %1182 : vector<8x128xf32>
    %1197 = vector.broadcast %7 : f32 to vector<8x128xf32>
    %1198 = arith.mulf %1197, %1182 : vector<8x128xf32>
    %1199 = vector.broadcast %8 : f32 to vector<8x128xf32>
    %1200 = arith.mulf %1199, %1182 : vector<8x128xf32>
    %1201 = vector.broadcast %9 : f32 to vector<8x128xf32>
    %1202 = arith.mulf %1201, %1182 : vector<8x128xf32>
    %1203 = vector.broadcast %10 : f32 to vector<8x128xf32>
    %1204 = arith.mulf %1203, %1182 : vector<8x128xf32>
    %1205 = vector.broadcast %11 : f32 to vector<8x128xf32>
    %1206 = arith.mulf %1205, %1182 : vector<8x128xf32>
    %c1_297 = arith.constant 1 : index
    %1207 = arith.index_cast %1179 : i32 to index
    %c0_298 = arith.constant 0 : index
    %1208 = vector.load %arg2[%c1_297, %1207, %c0_298] : memref<8x16x128xf32, #tpu.memory_space<vmem>>, vector<1x8x128xf32>
    %1209 = vector.shape_cast %1208 : vector<1x8x128xf32> to vector<8x128xf32>
    %1210 = vector.broadcast %12 : f32 to vector<8x128xf32>
    %1211 = arith.mulf %1210, %1209 : vector<8x128xf32>
    %1212 = arith.addf %1184, %1211 : vector<8x128xf32>
    %1213 = vector.broadcast %13 : f32 to vector<8x128xf32>
    %1214 = arith.mulf %1213, %1209 : vector<8x128xf32>
    %1215 = arith.addf %1186, %1214 : vector<8x128xf32>
    %1216 = vector.broadcast %14 : f32 to vector<8x128xf32>
    %1217 = arith.mulf %1216, %1209 : vector<8x128xf32>
    %1218 = arith.addf %1188, %1217 : vector<8x128xf32>
    %1219 = vector.broadcast %15 : f32 to vector<8x128xf32>
    %1220 = arith.mulf %1219, %1209 : vector<8x128xf32>
    %1221 = arith.addf %1190, %1220 : vector<8x128xf32>
    %1222 = vector.broadcast %16 : f32 to vector<8x128xf32>
    %1223 = arith.mulf %1222, %1209 : vector<8x128xf32>
    %1224 = arith.addf %1192, %1223 : vector<8x128xf32>
    %1225 = vector.broadcast %17 : f32 to vector<8x128xf32>
    %1226 = arith.mulf %1225, %1209 : vector<8x128xf32>
    %1227 = arith.addf %1194, %1226 : vector<8x128xf32>
    %1228 = vector.broadcast %18 : f32 to vector<8x128xf32>
    %1229 = arith.mulf %1228, %1209 : vector<8x128xf32>
    %1230 = arith.addf %1196, %1229 : vector<8x128xf32>
    %1231 = vector.broadcast %19 : f32 to vector<8x128xf32>
    %1232 = arith.mulf %1231, %1209 : vector<8x128xf32>
    %1233 = arith.addf %1198, %1232 : vector<8x128xf32>
    %1234 = vector.broadcast %20 : f32 to vector<8x128xf32>
    %1235 = arith.mulf %1234, %1209 : vector<8x128xf32>
    %1236 = arith.addf %1200, %1235 : vector<8x128xf32>
    %1237 = vector.broadcast %21 : f32 to vector<8x128xf32>
    %1238 = arith.mulf %1237, %1209 : vector<8x128xf32>
    %1239 = arith.addf %1202, %1238 : vector<8x128xf32>
    %1240 = vector.broadcast %22 : f32 to vector<8x128xf32>
    %1241 = arith.mulf %1240, %1209 : vector<8x128xf32>
    %1242 = arith.addf %1204, %1241 : vector<8x128xf32>
    %1243 = vector.broadcast %23 : f32 to vector<8x128xf32>
    %1244 = arith.mulf %1243, %1209 : vector<8x128xf32>
    %1245 = arith.addf %1206, %1244 : vector<8x128xf32>
    %c2_299 = arith.constant 2 : index
    %1246 = arith.index_cast %1179 : i32 to index
    %c0_300 = arith.constant 0 : index
    %1247 = vector.load %arg2[%c2_299, %1246, %c0_300] : memref<8x16x128xf32, #tpu.memory_space<vmem>>, vector<1x8x128xf32>
    %1248 = vector.shape_cast %1247 : vector<1x8x128xf32> to vector<8x128xf32>
    %1249 = vector.broadcast %24 : f32 to vector<8x128xf32>
    %1250 = arith.mulf %1249, %1248 : vector<8x128xf32>
    %1251 = arith.addf %1212, %1250 : vector<8x128xf32>
    %1252 = vector.broadcast %25 : f32 to vector<8x128xf32>
    %1253 = arith.mulf %1252, %1248 : vector<8x128xf32>
    %1254 = arith.addf %1215, %1253 : vector<8x128xf32>
    %1255 = vector.broadcast %26 : f32 to vector<8x128xf32>
    %1256 = arith.mulf %1255, %1248 : vector<8x128xf32>
    %1257 = arith.addf %1218, %1256 : vector<8x128xf32>
    %1258 = vector.broadcast %27 : f32 to vector<8x128xf32>
    %1259 = arith.mulf %1258, %1248 : vector<8x128xf32>
    %1260 = arith.addf %1221, %1259 : vector<8x128xf32>
    %1261 = vector.broadcast %28 : f32 to vector<8x128xf32>
    %1262 = arith.mulf %1261, %1248 : vector<8x128xf32>
    %1263 = arith.addf %1224, %1262 : vector<8x128xf32>
    %1264 = vector.broadcast %29 : f32 to vector<8x128xf32>
    %1265 = arith.mulf %1264, %1248 : vector<8x128xf32>
    %1266 = arith.addf %1227, %1265 : vector<8x128xf32>
    %1267 = vector.broadcast %30 : f32 to vector<8x128xf32>
    %1268 = arith.mulf %1267, %1248 : vector<8x128xf32>
    %1269 = arith.addf %1230, %1268 : vector<8x128xf32>
    %1270 = vector.broadcast %31 : f32 to vector<8x128xf32>
    %1271 = arith.mulf %1270, %1248 : vector<8x128xf32>
    %1272 = arith.addf %1233, %1271 : vector<8x128xf32>
    %1273 = vector.broadcast %32 : f32 to vector<8x128xf32>
    %1274 = arith.mulf %1273, %1248 : vector<8x128xf32>
    %1275 = arith.addf %1236, %1274 : vector<8x128xf32>
    %1276 = vector.broadcast %33 : f32 to vector<8x128xf32>
    %1277 = arith.mulf %1276, %1248 : vector<8x128xf32>
    %1278 = arith.addf %1239, %1277 : vector<8x128xf32>
    %1279 = vector.broadcast %34 : f32 to vector<8x128xf32>
    %1280 = arith.mulf %1279, %1248 : vector<8x128xf32>
    %1281 = arith.addf %1242, %1280 : vector<8x128xf32>
    %1282 = vector.broadcast %35 : f32 to vector<8x128xf32>
    %1283 = arith.mulf %1282, %1248 : vector<8x128xf32>
    %1284 = arith.addf %1245, %1283 : vector<8x128xf32>
    %c3_301 = arith.constant 3 : index
    %1285 = arith.index_cast %1179 : i32 to index
    %c0_302 = arith.constant 0 : index
    %1286 = vector.load %arg2[%c3_301, %1285, %c0_302] : memref<8x16x128xf32, #tpu.memory_space<vmem>>, vector<1x8x128xf32>
    %1287 = vector.shape_cast %1286 : vector<1x8x128xf32> to vector<8x128xf32>
    %1288 = vector.broadcast %36 : f32 to vector<8x128xf32>
    %1289 = arith.mulf %1288, %1287 : vector<8x128xf32>
    %1290 = arith.addf %1251, %1289 : vector<8x128xf32>
    %1291 = vector.broadcast %37 : f32 to vector<8x128xf32>
    %1292 = arith.mulf %1291, %1287 : vector<8x128xf32>
    %1293 = arith.addf %1254, %1292 : vector<8x128xf32>
    %1294 = vector.broadcast %38 : f32 to vector<8x128xf32>
    %1295 = arith.mulf %1294, %1287 : vector<8x128xf32>
    %1296 = arith.addf %1257, %1295 : vector<8x128xf32>
    %1297 = vector.broadcast %39 : f32 to vector<8x128xf32>
    %1298 = arith.mulf %1297, %1287 : vector<8x128xf32>
    %1299 = arith.addf %1260, %1298 : vector<8x128xf32>
    %1300 = vector.broadcast %40 : f32 to vector<8x128xf32>
    %1301 = arith.mulf %1300, %1287 : vector<8x128xf32>
    %1302 = arith.addf %1263, %1301 : vector<8x128xf32>
    %1303 = vector.broadcast %41 : f32 to vector<8x128xf32>
    %1304 = arith.mulf %1303, %1287 : vector<8x128xf32>
    %1305 = arith.addf %1266, %1304 : vector<8x128xf32>
    %1306 = vector.broadcast %42 : f32 to vector<8x128xf32>
    %1307 = arith.mulf %1306, %1287 : vector<8x128xf32>
    %1308 = arith.addf %1269, %1307 : vector<8x128xf32>
    %1309 = vector.broadcast %43 : f32 to vector<8x128xf32>
    %1310 = arith.mulf %1309, %1287 : vector<8x128xf32>
    %1311 = arith.addf %1272, %1310 : vector<8x128xf32>
    %1312 = vector.broadcast %44 : f32 to vector<8x128xf32>
    %1313 = arith.mulf %1312, %1287 : vector<8x128xf32>
    %1314 = arith.addf %1275, %1313 : vector<8x128xf32>
    %1315 = vector.broadcast %45 : f32 to vector<8x128xf32>
    %1316 = arith.mulf %1315, %1287 : vector<8x128xf32>
    %1317 = arith.addf %1278, %1316 : vector<8x128xf32>
    %1318 = vector.broadcast %46 : f32 to vector<8x128xf32>
    %1319 = arith.mulf %1318, %1287 : vector<8x128xf32>
    %1320 = arith.addf %1281, %1319 : vector<8x128xf32>
    %1321 = vector.broadcast %47 : f32 to vector<8x128xf32>
    %1322 = arith.mulf %1321, %1287 : vector<8x128xf32>
    %1323 = arith.addf %1284, %1322 : vector<8x128xf32>
    %c4_303 = arith.constant 4 : index
    %1324 = arith.index_cast %1179 : i32 to index
    %c0_304 = arith.constant 0 : index
    %1325 = vector.load %arg2[%c4_303, %1324, %c0_304] : memref<8x16x128xf32, #tpu.memory_space<vmem>>, vector<1x8x128xf32>
    %1326 = vector.shape_cast %1325 : vector<1x8x128xf32> to vector<8x128xf32>
    %1327 = vector.broadcast %48 : f32 to vector<8x128xf32>
    %1328 = arith.mulf %1327, %1326 : vector<8x128xf32>
    %1329 = arith.addf %1290, %1328 : vector<8x128xf32>
    %1330 = vector.broadcast %49 : f32 to vector<8x128xf32>
    %1331 = arith.mulf %1330, %1326 : vector<8x128xf32>
    %1332 = arith.addf %1293, %1331 : vector<8x128xf32>
    %1333 = vector.broadcast %50 : f32 to vector<8x128xf32>
    %1334 = arith.mulf %1333, %1326 : vector<8x128xf32>
    %1335 = arith.addf %1296, %1334 : vector<8x128xf32>
    %1336 = vector.broadcast %51 : f32 to vector<8x128xf32>
    %1337 = arith.mulf %1336, %1326 : vector<8x128xf32>
    %1338 = arith.addf %1299, %1337 : vector<8x128xf32>
    %1339 = vector.broadcast %52 : f32 to vector<8x128xf32>
    %1340 = arith.mulf %1339, %1326 : vector<8x128xf32>
    %1341 = arith.addf %1302, %1340 : vector<8x128xf32>
    %1342 = vector.broadcast %53 : f32 to vector<8x128xf32>
    %1343 = arith.mulf %1342, %1326 : vector<8x128xf32>
    %1344 = arith.addf %1305, %1343 : vector<8x128xf32>
    %1345 = vector.broadcast %54 : f32 to vector<8x128xf32>
    %1346 = arith.mulf %1345, %1326 : vector<8x128xf32>
    %1347 = arith.addf %1308, %1346 : vector<8x128xf32>
    %1348 = vector.broadcast %55 : f32 to vector<8x128xf32>
    %1349 = arith.mulf %1348, %1326 : vector<8x128xf32>
    %1350 = arith.addf %1311, %1349 : vector<8x128xf32>
    %1351 = vector.broadcast %56 : f32 to vector<8x128xf32>
    %1352 = arith.mulf %1351, %1326 : vector<8x128xf32>
    %1353 = arith.addf %1314, %1352 : vector<8x128xf32>
    %1354 = vector.broadcast %57 : f32 to vector<8x128xf32>
    %1355 = arith.mulf %1354, %1326 : vector<8x128xf32>
    %1356 = arith.addf %1317, %1355 : vector<8x128xf32>
    %1357 = vector.broadcast %58 : f32 to vector<8x128xf32>
    %1358 = arith.mulf %1357, %1326 : vector<8x128xf32>
    %1359 = arith.addf %1320, %1358 : vector<8x128xf32>
    %1360 = vector.broadcast %59 : f32 to vector<8x128xf32>
    %1361 = arith.mulf %1360, %1326 : vector<8x128xf32>
    %1362 = arith.addf %1323, %1361 : vector<8x128xf32>
    %c5_305 = arith.constant 5 : index
    %1363 = arith.index_cast %1179 : i32 to index
    %c0_306 = arith.constant 0 : index
    %1364 = vector.load %arg2[%c5_305, %1363, %c0_306] : memref<8x16x128xf32, #tpu.memory_space<vmem>>, vector<1x8x128xf32>
    %1365 = vector.shape_cast %1364 : vector<1x8x128xf32> to vector<8x128xf32>
    %1366 = vector.broadcast %60 : f32 to vector<8x128xf32>
    %1367 = arith.mulf %1366, %1365 : vector<8x128xf32>
    %1368 = arith.addf %1329, %1367 : vector<8x128xf32>
    %1369 = vector.broadcast %61 : f32 to vector<8x128xf32>
    %1370 = arith.mulf %1369, %1365 : vector<8x128xf32>
    %1371 = arith.addf %1332, %1370 : vector<8x128xf32>
    %1372 = vector.broadcast %62 : f32 to vector<8x128xf32>
    %1373 = arith.mulf %1372, %1365 : vector<8x128xf32>
    %1374 = arith.addf %1335, %1373 : vector<8x128xf32>
    %1375 = vector.broadcast %63 : f32 to vector<8x128xf32>
    %1376 = arith.mulf %1375, %1365 : vector<8x128xf32>
    %1377 = arith.addf %1338, %1376 : vector<8x128xf32>
    %1378 = vector.broadcast %64 : f32 to vector<8x128xf32>
    %1379 = arith.mulf %1378, %1365 : vector<8x128xf32>
    %1380 = arith.addf %1341, %1379 : vector<8x128xf32>
    %1381 = vector.broadcast %65 : f32 to vector<8x128xf32>
    %1382 = arith.mulf %1381, %1365 : vector<8x128xf32>
    %1383 = arith.addf %1344, %1382 : vector<8x128xf32>
    %1384 = vector.broadcast %66 : f32 to vector<8x128xf32>
    %1385 = arith.mulf %1384, %1365 : vector<8x128xf32>
    %1386 = arith.addf %1347, %1385 : vector<8x128xf32>
    %1387 = vector.broadcast %67 : f32 to vector<8x128xf32>
    %1388 = arith.mulf %1387, %1365 : vector<8x128xf32>
    %1389 = arith.addf %1350, %1388 : vector<8x128xf32>
    %1390 = vector.broadcast %68 : f32 to vector<8x128xf32>
    %1391 = arith.mulf %1390, %1365 : vector<8x128xf32>
    %1392 = arith.addf %1353, %1391 : vector<8x128xf32>
    %1393 = vector.broadcast %69 : f32 to vector<8x128xf32>
    %1394 = arith.mulf %1393, %1365 : vector<8x128xf32>
    %1395 = arith.addf %1356, %1394 : vector<8x128xf32>
    %1396 = vector.broadcast %70 : f32 to vector<8x128xf32>
    %1397 = arith.mulf %1396, %1365 : vector<8x128xf32>
    %1398 = arith.addf %1359, %1397 : vector<8x128xf32>
    %1399 = vector.broadcast %71 : f32 to vector<8x128xf32>
    %1400 = arith.mulf %1399, %1365 : vector<8x128xf32>
    %1401 = arith.addf %1362, %1400 : vector<8x128xf32>
    %c6_307 = arith.constant 6 : index
    %1402 = arith.index_cast %1179 : i32 to index
    %c0_308 = arith.constant 0 : index
    %1403 = vector.load %arg2[%c6_307, %1402, %c0_308] : memref<8x16x128xf32, #tpu.memory_space<vmem>>, vector<1x8x128xf32>
    %1404 = vector.shape_cast %1403 : vector<1x8x128xf32> to vector<8x128xf32>
    %1405 = vector.broadcast %72 : f32 to vector<8x128xf32>
    %1406 = arith.mulf %1405, %1404 : vector<8x128xf32>
    %1407 = arith.addf %1368, %1406 : vector<8x128xf32>
    %1408 = vector.broadcast %73 : f32 to vector<8x128xf32>
    %1409 = arith.mulf %1408, %1404 : vector<8x128xf32>
    %1410 = arith.addf %1371, %1409 : vector<8x128xf32>
    %1411 = vector.broadcast %74 : f32 to vector<8x128xf32>
    %1412 = arith.mulf %1411, %1404 : vector<8x128xf32>
    %1413 = arith.addf %1374, %1412 : vector<8x128xf32>
    %1414 = vector.broadcast %75 : f32 to vector<8x128xf32>
    %1415 = arith.mulf %1414, %1404 : vector<8x128xf32>
    %1416 = arith.addf %1377, %1415 : vector<8x128xf32>
    %1417 = vector.broadcast %76 : f32 to vector<8x128xf32>
    %1418 = arith.mulf %1417, %1404 : vector<8x128xf32>
    %1419 = arith.addf %1380, %1418 : vector<8x128xf32>
    %1420 = vector.broadcast %77 : f32 to vector<8x128xf32>
    %1421 = arith.mulf %1420, %1404 : vector<8x128xf32>
    %1422 = arith.addf %1383, %1421 : vector<8x128xf32>
    %1423 = vector.broadcast %78 : f32 to vector<8x128xf32>
    %1424 = arith.mulf %1423, %1404 : vector<8x128xf32>
    %1425 = arith.addf %1386, %1424 : vector<8x128xf32>
    %1426 = vector.broadcast %79 : f32 to vector<8x128xf32>
    %1427 = arith.mulf %1426, %1404 : vector<8x128xf32>
    %1428 = arith.addf %1389, %1427 : vector<8x128xf32>
    %1429 = vector.broadcast %80 : f32 to vector<8x128xf32>
    %1430 = arith.mulf %1429, %1404 : vector<8x128xf32>
    %1431 = arith.addf %1392, %1430 : vector<8x128xf32>
    %1432 = vector.broadcast %81 : f32 to vector<8x128xf32>
    %1433 = arith.mulf %1432, %1404 : vector<8x128xf32>
    %1434 = arith.addf %1395, %1433 : vector<8x128xf32>
    %1435 = vector.broadcast %82 : f32 to vector<8x128xf32>
    %1436 = arith.mulf %1435, %1404 : vector<8x128xf32>
    %1437 = arith.addf %1398, %1436 : vector<8x128xf32>
    %1438 = vector.broadcast %83 : f32 to vector<8x128xf32>
    %1439 = arith.mulf %1438, %1404 : vector<8x128xf32>
    %1440 = arith.addf %1401, %1439 : vector<8x128xf32>
    %c7_309 = arith.constant 7 : index
    %1441 = arith.index_cast %1179 : i32 to index
    %c0_310 = arith.constant 0 : index
    %1442 = vector.load %arg2[%c7_309, %1441, %c0_310] : memref<8x16x128xf32, #tpu.memory_space<vmem>>, vector<1x8x128xf32>
    %1443 = vector.shape_cast %1442 : vector<1x8x128xf32> to vector<8x128xf32>
    %1444 = vector.broadcast %84 : f32 to vector<8x128xf32>
    %1445 = arith.mulf %1444, %1443 : vector<8x128xf32>
    %1446 = arith.addf %1407, %1445 : vector<8x128xf32>
    %1447 = vector.broadcast %85 : f32 to vector<8x128xf32>
    %1448 = arith.mulf %1447, %1443 : vector<8x128xf32>
    %1449 = arith.addf %1410, %1448 : vector<8x128xf32>
    %1450 = vector.broadcast %86 : f32 to vector<8x128xf32>
    %1451 = arith.mulf %1450, %1443 : vector<8x128xf32>
    %1452 = arith.addf %1413, %1451 : vector<8x128xf32>
    %1453 = vector.broadcast %87 : f32 to vector<8x128xf32>
    %1454 = arith.mulf %1453, %1443 : vector<8x128xf32>
    %1455 = arith.addf %1416, %1454 : vector<8x128xf32>
    %1456 = vector.broadcast %88 : f32 to vector<8x128xf32>
    %1457 = arith.mulf %1456, %1443 : vector<8x128xf32>
    %1458 = arith.addf %1419, %1457 : vector<8x128xf32>
    %1459 = vector.broadcast %89 : f32 to vector<8x128xf32>
    %1460 = arith.mulf %1459, %1443 : vector<8x128xf32>
    %1461 = arith.addf %1422, %1460 : vector<8x128xf32>
    %1462 = vector.broadcast %90 : f32 to vector<8x128xf32>
    %1463 = arith.mulf %1462, %1443 : vector<8x128xf32>
    %1464 = arith.addf %1425, %1463 : vector<8x128xf32>
    %1465 = vector.broadcast %91 : f32 to vector<8x128xf32>
    %1466 = arith.mulf %1465, %1443 : vector<8x128xf32>
    %1467 = arith.addf %1428, %1466 : vector<8x128xf32>
    %1468 = vector.broadcast %92 : f32 to vector<8x128xf32>
    %1469 = arith.mulf %1468, %1443 : vector<8x128xf32>
    %1470 = arith.addf %1431, %1469 : vector<8x128xf32>
    %1471 = vector.broadcast %93 : f32 to vector<8x128xf32>
    %1472 = arith.mulf %1471, %1443 : vector<8x128xf32>
    %1473 = arith.addf %1434, %1472 : vector<8x128xf32>
    %1474 = vector.broadcast %94 : f32 to vector<8x128xf32>
    %1475 = arith.mulf %1474, %1443 : vector<8x128xf32>
    %1476 = arith.addf %1437, %1475 : vector<8x128xf32>
    %1477 = vector.broadcast %95 : f32 to vector<8x128xf32>
    %1478 = arith.mulf %1477, %1443 : vector<8x128xf32>
    %1479 = arith.addf %1440, %1478 : vector<8x128xf32>
    %1480 = arith.mulf %1446, %1446 : vector<8x128xf32>
    %1481 = arith.mulf %1449, %1458 : vector<8x128xf32>
    %1482 = arith.addf %1480, %1481 : vector<8x128xf32>
    %1483 = arith.mulf %1452, %1470 : vector<8x128xf32>
    %1484 = arith.addf %1482, %1483 : vector<8x128xf32>
    %1485 = arith.mulf %1446, %1449 : vector<8x128xf32>
    %1486 = arith.mulf %1449, %1461 : vector<8x128xf32>
    %1487 = arith.addf %1485, %1486 : vector<8x128xf32>
    %1488 = arith.mulf %1452, %1473 : vector<8x128xf32>
    %1489 = arith.addf %1487, %1488 : vector<8x128xf32>
    %1490 = arith.mulf %1446, %1452 : vector<8x128xf32>
    %1491 = arith.mulf %1449, %1464 : vector<8x128xf32>
    %1492 = arith.addf %1490, %1491 : vector<8x128xf32>
    %1493 = arith.mulf %1452, %1476 : vector<8x128xf32>
    %1494 = arith.addf %1492, %1493 : vector<8x128xf32>
    %1495 = arith.mulf %1446, %1455 : vector<8x128xf32>
    %1496 = arith.mulf %1449, %1467 : vector<8x128xf32>
    %1497 = arith.addf %1495, %1496 : vector<8x128xf32>
    %1498 = arith.mulf %1452, %1479 : vector<8x128xf32>
    %1499 = arith.addf %1497, %1498 : vector<8x128xf32>
    %1500 = arith.mulf %1458, %1446 : vector<8x128xf32>
    %1501 = arith.mulf %1461, %1458 : vector<8x128xf32>
    %1502 = arith.addf %1500, %1501 : vector<8x128xf32>
    %1503 = arith.mulf %1464, %1470 : vector<8x128xf32>
    %1504 = arith.addf %1502, %1503 : vector<8x128xf32>
    %1505 = arith.mulf %1458, %1449 : vector<8x128xf32>
    %1506 = arith.mulf %1461, %1461 : vector<8x128xf32>
    %1507 = arith.addf %1505, %1506 : vector<8x128xf32>
    %1508 = arith.mulf %1464, %1473 : vector<8x128xf32>
    %1509 = arith.addf %1507, %1508 : vector<8x128xf32>
    %1510 = arith.mulf %1458, %1452 : vector<8x128xf32>
    %1511 = arith.mulf %1461, %1464 : vector<8x128xf32>
    %1512 = arith.addf %1510, %1511 : vector<8x128xf32>
    %1513 = arith.mulf %1464, %1476 : vector<8x128xf32>
    %1514 = arith.addf %1512, %1513 : vector<8x128xf32>
    %1515 = arith.mulf %1458, %1455 : vector<8x128xf32>
    %1516 = arith.mulf %1461, %1467 : vector<8x128xf32>
    %1517 = arith.addf %1515, %1516 : vector<8x128xf32>
    %1518 = arith.mulf %1464, %1479 : vector<8x128xf32>
    %1519 = arith.addf %1517, %1518 : vector<8x128xf32>
    %1520 = arith.mulf %1470, %1446 : vector<8x128xf32>
    %1521 = arith.mulf %1473, %1458 : vector<8x128xf32>
    %1522 = arith.addf %1520, %1521 : vector<8x128xf32>
    %1523 = arith.mulf %1476, %1470 : vector<8x128xf32>
    %1524 = arith.addf %1522, %1523 : vector<8x128xf32>
    %1525 = arith.mulf %1470, %1449 : vector<8x128xf32>
    %1526 = arith.mulf %1473, %1461 : vector<8x128xf32>
    %1527 = arith.addf %1525, %1526 : vector<8x128xf32>
    %1528 = arith.mulf %1476, %1473 : vector<8x128xf32>
    %1529 = arith.addf %1527, %1528 : vector<8x128xf32>
    %1530 = arith.mulf %1470, %1452 : vector<8x128xf32>
    %1531 = arith.mulf %1473, %1464 : vector<8x128xf32>
    %1532 = arith.addf %1530, %1531 : vector<8x128xf32>
    %1533 = arith.mulf %1476, %1476 : vector<8x128xf32>
    %1534 = arith.addf %1532, %1533 : vector<8x128xf32>
    %1535 = arith.mulf %1470, %1455 : vector<8x128xf32>
    %1536 = arith.mulf %1473, %1467 : vector<8x128xf32>
    %1537 = arith.addf %1535, %1536 : vector<8x128xf32>
    %1538 = arith.mulf %1476, %1479 : vector<8x128xf32>
    %1539 = arith.addf %1537, %1538 : vector<8x128xf32>
    %1540 = arith.mulf %1484, %1446 : vector<8x128xf32>
    %1541 = arith.mulf %1489, %1458 : vector<8x128xf32>
    %1542 = arith.addf %1540, %1541 : vector<8x128xf32>
    %1543 = arith.mulf %1494, %1470 : vector<8x128xf32>
    %1544 = arith.addf %1542, %1543 : vector<8x128xf32>
    %1545 = arith.mulf %1484, %1449 : vector<8x128xf32>
    %1546 = arith.mulf %1489, %1461 : vector<8x128xf32>
    %1547 = arith.addf %1545, %1546 : vector<8x128xf32>
    %1548 = arith.mulf %1494, %1473 : vector<8x128xf32>
    %1549 = arith.addf %1547, %1548 : vector<8x128xf32>
    %1550 = arith.mulf %1484, %1452 : vector<8x128xf32>
    %1551 = arith.mulf %1489, %1464 : vector<8x128xf32>
    %1552 = arith.addf %1550, %1551 : vector<8x128xf32>
    %1553 = arith.mulf %1494, %1476 : vector<8x128xf32>
    %1554 = arith.addf %1552, %1553 : vector<8x128xf32>
    %1555 = arith.mulf %1484, %1455 : vector<8x128xf32>
    %1556 = arith.mulf %1489, %1467 : vector<8x128xf32>
    %1557 = arith.addf %1555, %1556 : vector<8x128xf32>
    %1558 = arith.mulf %1494, %1479 : vector<8x128xf32>
    %1559 = arith.addf %1557, %1558 : vector<8x128xf32>
    %1560 = arith.mulf %1504, %1446 : vector<8x128xf32>
    %1561 = arith.mulf %1509, %1458 : vector<8x128xf32>
    %1562 = arith.addf %1560, %1561 : vector<8x128xf32>
    %1563 = arith.mulf %1514, %1470 : vector<8x128xf32>
    %1564 = arith.addf %1562, %1563 : vector<8x128xf32>
    %1565 = arith.mulf %1504, %1449 : vector<8x128xf32>
    %1566 = arith.mulf %1509, %1461 : vector<8x128xf32>
    %1567 = arith.addf %1565, %1566 : vector<8x128xf32>
    %1568 = arith.mulf %1514, %1473 : vector<8x128xf32>
    %1569 = arith.addf %1567, %1568 : vector<8x128xf32>
    %1570 = arith.mulf %1504, %1452 : vector<8x128xf32>
    %1571 = arith.mulf %1509, %1464 : vector<8x128xf32>
    %1572 = arith.addf %1570, %1571 : vector<8x128xf32>
    %1573 = arith.mulf %1514, %1476 : vector<8x128xf32>
    %1574 = arith.addf %1572, %1573 : vector<8x128xf32>
    %1575 = arith.mulf %1504, %1455 : vector<8x128xf32>
    %1576 = arith.mulf %1509, %1467 : vector<8x128xf32>
    %1577 = arith.addf %1575, %1576 : vector<8x128xf32>
    %1578 = arith.mulf %1514, %1479 : vector<8x128xf32>
    %1579 = arith.addf %1577, %1578 : vector<8x128xf32>
    %1580 = arith.mulf %1524, %1446 : vector<8x128xf32>
    %1581 = arith.mulf %1529, %1458 : vector<8x128xf32>
    %1582 = arith.addf %1580, %1581 : vector<8x128xf32>
    %1583 = arith.mulf %1534, %1470 : vector<8x128xf32>
    %1584 = arith.addf %1582, %1583 : vector<8x128xf32>
    %1585 = arith.mulf %1524, %1449 : vector<8x128xf32>
    %1586 = arith.mulf %1529, %1461 : vector<8x128xf32>
    %1587 = arith.addf %1585, %1586 : vector<8x128xf32>
    %1588 = arith.mulf %1534, %1473 : vector<8x128xf32>
    %1589 = arith.addf %1587, %1588 : vector<8x128xf32>
    %1590 = arith.mulf %1524, %1452 : vector<8x128xf32>
    %1591 = arith.mulf %1529, %1464 : vector<8x128xf32>
    %1592 = arith.addf %1590, %1591 : vector<8x128xf32>
    %1593 = arith.mulf %1534, %1476 : vector<8x128xf32>
    %1594 = arith.addf %1592, %1593 : vector<8x128xf32>
    %1595 = arith.mulf %1524, %1455 : vector<8x128xf32>
    %1596 = arith.mulf %1529, %1467 : vector<8x128xf32>
    %1597 = arith.addf %1595, %1596 : vector<8x128xf32>
    %1598 = arith.mulf %1534, %1479 : vector<8x128xf32>
    %1599 = arith.addf %1597, %1598 : vector<8x128xf32>
    %cst_311 = arith.constant 5.000000e-01 : f32
    %1600 = vector.broadcast %cst_311 : f32 to vector<8x128xf32>
    %1601 = arith.mulf %1600, %1484 : vector<8x128xf32>
    %1602 = arith.addf %1446, %1601 : vector<8x128xf32>
    %cst_312 = arith.constant 0.166666672 : f32
    %1603 = vector.broadcast %cst_312 : f32 to vector<8x128xf32>
    %1604 = arith.mulf %1603, %1544 : vector<8x128xf32>
    %1605 = arith.addf %1602, %1604 : vector<8x128xf32>
    %cst_313 = arith.constant 0.00833333377 : f32
    %1606 = vector.broadcast %cst_313 : f32 to vector<8x128xf32>
    %1607 = arith.mulf %1606, %1446 : vector<8x128xf32>
    %cst_314 = arith.constant 0.00138888892 : f32
    %1608 = vector.broadcast %cst_314 : f32 to vector<8x128xf32>
    %1609 = arith.mulf %1608, %1484 : vector<8x128xf32>
    %1610 = arith.addf %1607, %1609 : vector<8x128xf32>
    %cst_315 = arith.constant 1.98412701E-4 : f32
    %1611 = vector.broadcast %cst_315 : f32 to vector<8x128xf32>
    %1612 = arith.mulf %1611, %1544 : vector<8x128xf32>
    %1613 = arith.addf %1610, %1612 : vector<8x128xf32>
    %cst_316 = arith.constant 1.000000e+00 : f32
    %1614 = vector.broadcast %cst_316 : f32 to vector<8x128xf32>
    %1615 = arith.addf %1605, %1614 : vector<8x128xf32>
    %cst_317 = arith.constant 0.0416666679 : f32
    %1616 = vector.broadcast %cst_317 : f32 to vector<8x128xf32>
    %1617 = arith.addf %1613, %1616 : vector<8x128xf32>
    %cst_318 = arith.constant 5.000000e-01 : f32
    %1618 = vector.broadcast %cst_318 : f32 to vector<8x128xf32>
    %1619 = arith.mulf %1618, %1489 : vector<8x128xf32>
    %1620 = arith.addf %1449, %1619 : vector<8x128xf32>
    %cst_319 = arith.constant 0.166666672 : f32
    %1621 = vector.broadcast %cst_319 : f32 to vector<8x128xf32>
    %1622 = arith.mulf %1621, %1549 : vector<8x128xf32>
    %1623 = arith.addf %1620, %1622 : vector<8x128xf32>
    %cst_320 = arith.constant 0.00833333377 : f32
    %1624 = vector.broadcast %cst_320 : f32 to vector<8x128xf32>
    %1625 = arith.mulf %1624, %1449 : vector<8x128xf32>
    %cst_321 = arith.constant 0.00138888892 : f32
    %1626 = vector.broadcast %cst_321 : f32 to vector<8x128xf32>
    %1627 = arith.mulf %1626, %1489 : vector<8x128xf32>
    %1628 = arith.addf %1625, %1627 : vector<8x128xf32>
    %cst_322 = arith.constant 1.98412701E-4 : f32
    %1629 = vector.broadcast %cst_322 : f32 to vector<8x128xf32>
    %1630 = arith.mulf %1629, %1549 : vector<8x128xf32>
    %1631 = arith.addf %1628, %1630 : vector<8x128xf32>
    %cst_323 = arith.constant 5.000000e-01 : f32
    %1632 = vector.broadcast %cst_323 : f32 to vector<8x128xf32>
    %1633 = arith.mulf %1632, %1494 : vector<8x128xf32>
    %1634 = arith.addf %1452, %1633 : vector<8x128xf32>
    %cst_324 = arith.constant 0.166666672 : f32
    %1635 = vector.broadcast %cst_324 : f32 to vector<8x128xf32>
    %1636 = arith.mulf %1635, %1554 : vector<8x128xf32>
    %1637 = arith.addf %1634, %1636 : vector<8x128xf32>
    %cst_325 = arith.constant 0.00833333377 : f32
    %1638 = vector.broadcast %cst_325 : f32 to vector<8x128xf32>
    %1639 = arith.mulf %1638, %1452 : vector<8x128xf32>
    %cst_326 = arith.constant 0.00138888892 : f32
    %1640 = vector.broadcast %cst_326 : f32 to vector<8x128xf32>
    %1641 = arith.mulf %1640, %1494 : vector<8x128xf32>
    %1642 = arith.addf %1639, %1641 : vector<8x128xf32>
    %cst_327 = arith.constant 1.98412701E-4 : f32
    %1643 = vector.broadcast %cst_327 : f32 to vector<8x128xf32>
    %1644 = arith.mulf %1643, %1554 : vector<8x128xf32>
    %1645 = arith.addf %1642, %1644 : vector<8x128xf32>
    %cst_328 = arith.constant 5.000000e-01 : f32
    %1646 = vector.broadcast %cst_328 : f32 to vector<8x128xf32>
    %1647 = arith.mulf %1646, %1499 : vector<8x128xf32>
    %1648 = arith.addf %1455, %1647 : vector<8x128xf32>
    %cst_329 = arith.constant 0.166666672 : f32
    %1649 = vector.broadcast %cst_329 : f32 to vector<8x128xf32>
    %1650 = arith.mulf %1649, %1559 : vector<8x128xf32>
    %1651 = arith.addf %1648, %1650 : vector<8x128xf32>
    %cst_330 = arith.constant 0.00833333377 : f32
    %1652 = vector.broadcast %cst_330 : f32 to vector<8x128xf32>
    %1653 = arith.mulf %1652, %1455 : vector<8x128xf32>
    %cst_331 = arith.constant 0.00138888892 : f32
    %1654 = vector.broadcast %cst_331 : f32 to vector<8x128xf32>
    %1655 = arith.mulf %1654, %1499 : vector<8x128xf32>
    %1656 = arith.addf %1653, %1655 : vector<8x128xf32>
    %cst_332 = arith.constant 1.98412701E-4 : f32
    %1657 = vector.broadcast %cst_332 : f32 to vector<8x128xf32>
    %1658 = arith.mulf %1657, %1559 : vector<8x128xf32>
    %1659 = arith.addf %1656, %1658 : vector<8x128xf32>
    %cst_333 = arith.constant 5.000000e-01 : f32
    %1660 = vector.broadcast %cst_333 : f32 to vector<8x128xf32>
    %1661 = arith.mulf %1660, %1504 : vector<8x128xf32>
    %1662 = arith.addf %1458, %1661 : vector<8x128xf32>
    %cst_334 = arith.constant 0.166666672 : f32
    %1663 = vector.broadcast %cst_334 : f32 to vector<8x128xf32>
    %1664 = arith.mulf %1663, %1564 : vector<8x128xf32>
    %1665 = arith.addf %1662, %1664 : vector<8x128xf32>
    %cst_335 = arith.constant 0.00833333377 : f32
    %1666 = vector.broadcast %cst_335 : f32 to vector<8x128xf32>
    %1667 = arith.mulf %1666, %1458 : vector<8x128xf32>
    %cst_336 = arith.constant 0.00138888892 : f32
    %1668 = vector.broadcast %cst_336 : f32 to vector<8x128xf32>
    %1669 = arith.mulf %1668, %1504 : vector<8x128xf32>
    %1670 = arith.addf %1667, %1669 : vector<8x128xf32>
    %cst_337 = arith.constant 1.98412701E-4 : f32
    %1671 = vector.broadcast %cst_337 : f32 to vector<8x128xf32>
    %1672 = arith.mulf %1671, %1564 : vector<8x128xf32>
    %1673 = arith.addf %1670, %1672 : vector<8x128xf32>
    %cst_338 = arith.constant 5.000000e-01 : f32
    %1674 = vector.broadcast %cst_338 : f32 to vector<8x128xf32>
    %1675 = arith.mulf %1674, %1509 : vector<8x128xf32>
    %1676 = arith.addf %1461, %1675 : vector<8x128xf32>
    %cst_339 = arith.constant 0.166666672 : f32
    %1677 = vector.broadcast %cst_339 : f32 to vector<8x128xf32>
    %1678 = arith.mulf %1677, %1569 : vector<8x128xf32>
    %1679 = arith.addf %1676, %1678 : vector<8x128xf32>
    %cst_340 = arith.constant 0.00833333377 : f32
    %1680 = vector.broadcast %cst_340 : f32 to vector<8x128xf32>
    %1681 = arith.mulf %1680, %1461 : vector<8x128xf32>
    %cst_341 = arith.constant 0.00138888892 : f32
    %1682 = vector.broadcast %cst_341 : f32 to vector<8x128xf32>
    %1683 = arith.mulf %1682, %1509 : vector<8x128xf32>
    %1684 = arith.addf %1681, %1683 : vector<8x128xf32>
    %cst_342 = arith.constant 1.98412701E-4 : f32
    %1685 = vector.broadcast %cst_342 : f32 to vector<8x128xf32>
    %1686 = arith.mulf %1685, %1569 : vector<8x128xf32>
    %1687 = arith.addf %1684, %1686 : vector<8x128xf32>
    %cst_343 = arith.constant 1.000000e+00 : f32
    %1688 = vector.broadcast %cst_343 : f32 to vector<8x128xf32>
    %1689 = arith.addf %1679, %1688 : vector<8x128xf32>
    %cst_344 = arith.constant 0.0416666679 : f32
    %1690 = vector.broadcast %cst_344 : f32 to vector<8x128xf32>
    %1691 = arith.addf %1687, %1690 : vector<8x128xf32>
    %cst_345 = arith.constant 5.000000e-01 : f32
    %1692 = vector.broadcast %cst_345 : f32 to vector<8x128xf32>
    %1693 = arith.mulf %1692, %1514 : vector<8x128xf32>
    %1694 = arith.addf %1464, %1693 : vector<8x128xf32>
    %cst_346 = arith.constant 0.166666672 : f32
    %1695 = vector.broadcast %cst_346 : f32 to vector<8x128xf32>
    %1696 = arith.mulf %1695, %1574 : vector<8x128xf32>
    %1697 = arith.addf %1694, %1696 : vector<8x128xf32>
    %cst_347 = arith.constant 0.00833333377 : f32
    %1698 = vector.broadcast %cst_347 : f32 to vector<8x128xf32>
    %1699 = arith.mulf %1698, %1464 : vector<8x128xf32>
    %cst_348 = arith.constant 0.00138888892 : f32
    %1700 = vector.broadcast %cst_348 : f32 to vector<8x128xf32>
    %1701 = arith.mulf %1700, %1514 : vector<8x128xf32>
    %1702 = arith.addf %1699, %1701 : vector<8x128xf32>
    %cst_349 = arith.constant 1.98412701E-4 : f32
    %1703 = vector.broadcast %cst_349 : f32 to vector<8x128xf32>
    %1704 = arith.mulf %1703, %1574 : vector<8x128xf32>
    %1705 = arith.addf %1702, %1704 : vector<8x128xf32>
    %cst_350 = arith.constant 5.000000e-01 : f32
    %1706 = vector.broadcast %cst_350 : f32 to vector<8x128xf32>
    %1707 = arith.mulf %1706, %1519 : vector<8x128xf32>
    %1708 = arith.addf %1467, %1707 : vector<8x128xf32>
    %cst_351 = arith.constant 0.166666672 : f32
    %1709 = vector.broadcast %cst_351 : f32 to vector<8x128xf32>
    %1710 = arith.mulf %1709, %1579 : vector<8x128xf32>
    %1711 = arith.addf %1708, %1710 : vector<8x128xf32>
    %cst_352 = arith.constant 0.00833333377 : f32
    %1712 = vector.broadcast %cst_352 : f32 to vector<8x128xf32>
    %1713 = arith.mulf %1712, %1467 : vector<8x128xf32>
    %cst_353 = arith.constant 0.00138888892 : f32
    %1714 = vector.broadcast %cst_353 : f32 to vector<8x128xf32>
    %1715 = arith.mulf %1714, %1519 : vector<8x128xf32>
    %1716 = arith.addf %1713, %1715 : vector<8x128xf32>
    %cst_354 = arith.constant 1.98412701E-4 : f32
    %1717 = vector.broadcast %cst_354 : f32 to vector<8x128xf32>
    %1718 = arith.mulf %1717, %1579 : vector<8x128xf32>
    %1719 = arith.addf %1716, %1718 : vector<8x128xf32>
    %cst_355 = arith.constant 5.000000e-01 : f32
    %1720 = vector.broadcast %cst_355 : f32 to vector<8x128xf32>
    %1721 = arith.mulf %1720, %1524 : vector<8x128xf32>
    %1722 = arith.addf %1470, %1721 : vector<8x128xf32>
    %cst_356 = arith.constant 0.166666672 : f32
    %1723 = vector.broadcast %cst_356 : f32 to vector<8x128xf32>
    %1724 = arith.mulf %1723, %1584 : vector<8x128xf32>
    %1725 = arith.addf %1722, %1724 : vector<8x128xf32>
    %cst_357 = arith.constant 0.00833333377 : f32
    %1726 = vector.broadcast %cst_357 : f32 to vector<8x128xf32>
    %1727 = arith.mulf %1726, %1470 : vector<8x128xf32>
    %cst_358 = arith.constant 0.00138888892 : f32
    %1728 = vector.broadcast %cst_358 : f32 to vector<8x128xf32>
    %1729 = arith.mulf %1728, %1524 : vector<8x128xf32>
    %1730 = arith.addf %1727, %1729 : vector<8x128xf32>
    %cst_359 = arith.constant 1.98412701E-4 : f32
    %1731 = vector.broadcast %cst_359 : f32 to vector<8x128xf32>
    %1732 = arith.mulf %1731, %1584 : vector<8x128xf32>
    %1733 = arith.addf %1730, %1732 : vector<8x128xf32>
    %cst_360 = arith.constant 5.000000e-01 : f32
    %1734 = vector.broadcast %cst_360 : f32 to vector<8x128xf32>
    %1735 = arith.mulf %1734, %1529 : vector<8x128xf32>
    %1736 = arith.addf %1473, %1735 : vector<8x128xf32>
    %cst_361 = arith.constant 0.166666672 : f32
    %1737 = vector.broadcast %cst_361 : f32 to vector<8x128xf32>
    %1738 = arith.mulf %1737, %1589 : vector<8x128xf32>
    %1739 = arith.addf %1736, %1738 : vector<8x128xf32>
    %cst_362 = arith.constant 0.00833333377 : f32
    %1740 = vector.broadcast %cst_362 : f32 to vector<8x128xf32>
    %1741 = arith.mulf %1740, %1473 : vector<8x128xf32>
    %cst_363 = arith.constant 0.00138888892 : f32
    %1742 = vector.broadcast %cst_363 : f32 to vector<8x128xf32>
    %1743 = arith.mulf %1742, %1529 : vector<8x128xf32>
    %1744 = arith.addf %1741, %1743 : vector<8x128xf32>
    %cst_364 = arith.constant 1.98412701E-4 : f32
    %1745 = vector.broadcast %cst_364 : f32 to vector<8x128xf32>
    %1746 = arith.mulf %1745, %1589 : vector<8x128xf32>
    %1747 = arith.addf %1744, %1746 : vector<8x128xf32>
    %cst_365 = arith.constant 5.000000e-01 : f32
    %1748 = vector.broadcast %cst_365 : f32 to vector<8x128xf32>
    %1749 = arith.mulf %1748, %1534 : vector<8x128xf32>
    %1750 = arith.addf %1476, %1749 : vector<8x128xf32>
    %cst_366 = arith.constant 0.166666672 : f32
    %1751 = vector.broadcast %cst_366 : f32 to vector<8x128xf32>
    %1752 = arith.mulf %1751, %1594 : vector<8x128xf32>
    %1753 = arith.addf %1750, %1752 : vector<8x128xf32>
    %cst_367 = arith.constant 0.00833333377 : f32
    %1754 = vector.broadcast %cst_367 : f32 to vector<8x128xf32>
    %1755 = arith.mulf %1754, %1476 : vector<8x128xf32>
    %cst_368 = arith.constant 0.00138888892 : f32
    %1756 = vector.broadcast %cst_368 : f32 to vector<8x128xf32>
    %1757 = arith.mulf %1756, %1534 : vector<8x128xf32>
    %1758 = arith.addf %1755, %1757 : vector<8x128xf32>
    %cst_369 = arith.constant 1.98412701E-4 : f32
    %1759 = vector.broadcast %cst_369 : f32 to vector<8x128xf32>
    %1760 = arith.mulf %1759, %1594 : vector<8x128xf32>
    %1761 = arith.addf %1758, %1760 : vector<8x128xf32>
    %cst_370 = arith.constant 1.000000e+00 : f32
    %1762 = vector.broadcast %cst_370 : f32 to vector<8x128xf32>
    %1763 = arith.addf %1753, %1762 : vector<8x128xf32>
    %cst_371 = arith.constant 0.0416666679 : f32
    %1764 = vector.broadcast %cst_371 : f32 to vector<8x128xf32>
    %1765 = arith.addf %1761, %1764 : vector<8x128xf32>
    %cst_372 = arith.constant 5.000000e-01 : f32
    %1766 = vector.broadcast %cst_372 : f32 to vector<8x128xf32>
    %1767 = arith.mulf %1766, %1539 : vector<8x128xf32>
    %1768 = arith.addf %1479, %1767 : vector<8x128xf32>
    %cst_373 = arith.constant 0.166666672 : f32
    %1769 = vector.broadcast %cst_373 : f32 to vector<8x128xf32>
    %1770 = arith.mulf %1769, %1599 : vector<8x128xf32>
    %1771 = arith.addf %1768, %1770 : vector<8x128xf32>
    %cst_374 = arith.constant 0.00833333377 : f32
    %1772 = vector.broadcast %cst_374 : f32 to vector<8x128xf32>
    %1773 = arith.mulf %1772, %1479 : vector<8x128xf32>
    %cst_375 = arith.constant 0.00138888892 : f32
    %1774 = vector.broadcast %cst_375 : f32 to vector<8x128xf32>
    %1775 = arith.mulf %1774, %1539 : vector<8x128xf32>
    %1776 = arith.addf %1773, %1775 : vector<8x128xf32>
    %cst_376 = arith.constant 1.98412701E-4 : f32
    %1777 = vector.broadcast %cst_376 : f32 to vector<8x128xf32>
    %1778 = arith.mulf %1777, %1599 : vector<8x128xf32>
    %1779 = arith.addf %1776, %1778 : vector<8x128xf32>
    %1780 = arith.mulf %1484, %1484 : vector<8x128xf32>
    %1781 = arith.mulf %1489, %1504 : vector<8x128xf32>
    %1782 = arith.addf %1780, %1781 : vector<8x128xf32>
    %1783 = arith.mulf %1494, %1524 : vector<8x128xf32>
    %1784 = arith.addf %1782, %1783 : vector<8x128xf32>
    %1785 = arith.mulf %1484, %1489 : vector<8x128xf32>
    %1786 = arith.mulf %1489, %1509 : vector<8x128xf32>
    %1787 = arith.addf %1785, %1786 : vector<8x128xf32>
    %1788 = arith.mulf %1494, %1529 : vector<8x128xf32>
    %1789 = arith.addf %1787, %1788 : vector<8x128xf32>
    %1790 = arith.mulf %1484, %1494 : vector<8x128xf32>
    %1791 = arith.mulf %1489, %1514 : vector<8x128xf32>
    %1792 = arith.addf %1790, %1791 : vector<8x128xf32>
    %1793 = arith.mulf %1494, %1534 : vector<8x128xf32>
    %1794 = arith.addf %1792, %1793 : vector<8x128xf32>
    %1795 = arith.mulf %1484, %1499 : vector<8x128xf32>
    %1796 = arith.mulf %1489, %1519 : vector<8x128xf32>
    %1797 = arith.addf %1795, %1796 : vector<8x128xf32>
    %1798 = arith.mulf %1494, %1539 : vector<8x128xf32>
    %1799 = arith.addf %1797, %1798 : vector<8x128xf32>
    %1800 = arith.mulf %1504, %1484 : vector<8x128xf32>
    %1801 = arith.mulf %1509, %1504 : vector<8x128xf32>
    %1802 = arith.addf %1800, %1801 : vector<8x128xf32>
    %1803 = arith.mulf %1514, %1524 : vector<8x128xf32>
    %1804 = arith.addf %1802, %1803 : vector<8x128xf32>
    %1805 = arith.mulf %1504, %1489 : vector<8x128xf32>
    %1806 = arith.mulf %1509, %1509 : vector<8x128xf32>
    %1807 = arith.addf %1805, %1806 : vector<8x128xf32>
    %1808 = arith.mulf %1514, %1529 : vector<8x128xf32>
    %1809 = arith.addf %1807, %1808 : vector<8x128xf32>
    %1810 = arith.mulf %1504, %1494 : vector<8x128xf32>
    %1811 = arith.mulf %1509, %1514 : vector<8x128xf32>
    %1812 = arith.addf %1810, %1811 : vector<8x128xf32>
    %1813 = arith.mulf %1514, %1534 : vector<8x128xf32>
    %1814 = arith.addf %1812, %1813 : vector<8x128xf32>
    %1815 = arith.mulf %1504, %1499 : vector<8x128xf32>
    %1816 = arith.mulf %1509, %1519 : vector<8x128xf32>
    %1817 = arith.addf %1815, %1816 : vector<8x128xf32>
    %1818 = arith.mulf %1514, %1539 : vector<8x128xf32>
    %1819 = arith.addf %1817, %1818 : vector<8x128xf32>
    %1820 = arith.mulf %1524, %1484 : vector<8x128xf32>
    %1821 = arith.mulf %1529, %1504 : vector<8x128xf32>
    %1822 = arith.addf %1820, %1821 : vector<8x128xf32>
    %1823 = arith.mulf %1534, %1524 : vector<8x128xf32>
    %1824 = arith.addf %1822, %1823 : vector<8x128xf32>
    %1825 = arith.mulf %1524, %1489 : vector<8x128xf32>
    %1826 = arith.mulf %1529, %1509 : vector<8x128xf32>
    %1827 = arith.addf %1825, %1826 : vector<8x128xf32>
    %1828 = arith.mulf %1534, %1529 : vector<8x128xf32>
    %1829 = arith.addf %1827, %1828 : vector<8x128xf32>
    %1830 = arith.mulf %1524, %1494 : vector<8x128xf32>
    %1831 = arith.mulf %1529, %1514 : vector<8x128xf32>
    %1832 = arith.addf %1830, %1831 : vector<8x128xf32>
    %1833 = arith.mulf %1534, %1534 : vector<8x128xf32>
    %1834 = arith.addf %1832, %1833 : vector<8x128xf32>
    %1835 = arith.mulf %1524, %1499 : vector<8x128xf32>
    %1836 = arith.mulf %1529, %1519 : vector<8x128xf32>
    %1837 = arith.addf %1835, %1836 : vector<8x128xf32>
    %1838 = arith.mulf %1534, %1539 : vector<8x128xf32>
    %1839 = arith.addf %1837, %1838 : vector<8x128xf32>
    %cst_377 = arith.constant 2.48015876E-5 : f32
    %1840 = vector.broadcast %cst_377 : f32 to vector<8x128xf32>
    %1841 = arith.mulf %1840, %1784 : vector<8x128xf32>
    %1842 = arith.addf %1617, %1841 : vector<8x128xf32>
    %cst_378 = arith.constant 2.48015876E-5 : f32
    %1843 = vector.broadcast %cst_378 : f32 to vector<8x128xf32>
    %1844 = arith.mulf %1843, %1789 : vector<8x128xf32>
    %1845 = arith.addf %1631, %1844 : vector<8x128xf32>
    %cst_379 = arith.constant 2.48015876E-5 : f32
    %1846 = vector.broadcast %cst_379 : f32 to vector<8x128xf32>
    %1847 = arith.mulf %1846, %1794 : vector<8x128xf32>
    %1848 = arith.addf %1645, %1847 : vector<8x128xf32>
    %cst_380 = arith.constant 2.48015876E-5 : f32
    %1849 = vector.broadcast %cst_380 : f32 to vector<8x128xf32>
    %1850 = arith.mulf %1849, %1799 : vector<8x128xf32>
    %1851 = arith.addf %1659, %1850 : vector<8x128xf32>
    %cst_381 = arith.constant 2.48015876E-5 : f32
    %1852 = vector.broadcast %cst_381 : f32 to vector<8x128xf32>
    %1853 = arith.mulf %1852, %1804 : vector<8x128xf32>
    %1854 = arith.addf %1673, %1853 : vector<8x128xf32>
    %cst_382 = arith.constant 2.48015876E-5 : f32
    %1855 = vector.broadcast %cst_382 : f32 to vector<8x128xf32>
    %1856 = arith.mulf %1855, %1809 : vector<8x128xf32>
    %1857 = arith.addf %1691, %1856 : vector<8x128xf32>
    %cst_383 = arith.constant 2.48015876E-5 : f32
    %1858 = vector.broadcast %cst_383 : f32 to vector<8x128xf32>
    %1859 = arith.mulf %1858, %1814 : vector<8x128xf32>
    %1860 = arith.addf %1705, %1859 : vector<8x128xf32>
    %cst_384 = arith.constant 2.48015876E-5 : f32
    %1861 = vector.broadcast %cst_384 : f32 to vector<8x128xf32>
    %1862 = arith.mulf %1861, %1819 : vector<8x128xf32>
    %1863 = arith.addf %1719, %1862 : vector<8x128xf32>
    %cst_385 = arith.constant 2.48015876E-5 : f32
    %1864 = vector.broadcast %cst_385 : f32 to vector<8x128xf32>
    %1865 = arith.mulf %1864, %1824 : vector<8x128xf32>
    %1866 = arith.addf %1733, %1865 : vector<8x128xf32>
    %cst_386 = arith.constant 2.48015876E-5 : f32
    %1867 = vector.broadcast %cst_386 : f32 to vector<8x128xf32>
    %1868 = arith.mulf %1867, %1829 : vector<8x128xf32>
    %1869 = arith.addf %1747, %1868 : vector<8x128xf32>
    %cst_387 = arith.constant 2.48015876E-5 : f32
    %1870 = vector.broadcast %cst_387 : f32 to vector<8x128xf32>
    %1871 = arith.mulf %1870, %1834 : vector<8x128xf32>
    %1872 = arith.addf %1765, %1871 : vector<8x128xf32>
    %cst_388 = arith.constant 2.48015876E-5 : f32
    %1873 = vector.broadcast %cst_388 : f32 to vector<8x128xf32>
    %1874 = arith.mulf %1873, %1839 : vector<8x128xf32>
    %1875 = arith.addf %1779, %1874 : vector<8x128xf32>
    %1876 = arith.mulf %1784, %1842 : vector<8x128xf32>
    %1877 = arith.mulf %1789, %1854 : vector<8x128xf32>
    %1878 = arith.addf %1876, %1877 : vector<8x128xf32>
    %1879 = arith.mulf %1794, %1866 : vector<8x128xf32>
    %1880 = arith.addf %1878, %1879 : vector<8x128xf32>
    %1881 = arith.mulf %1784, %1845 : vector<8x128xf32>
    %1882 = arith.mulf %1789, %1857 : vector<8x128xf32>
    %1883 = arith.addf %1881, %1882 : vector<8x128xf32>
    %1884 = arith.mulf %1794, %1869 : vector<8x128xf32>
    %1885 = arith.addf %1883, %1884 : vector<8x128xf32>
    %1886 = arith.mulf %1784, %1848 : vector<8x128xf32>
    %1887 = arith.mulf %1789, %1860 : vector<8x128xf32>
    %1888 = arith.addf %1886, %1887 : vector<8x128xf32>
    %1889 = arith.mulf %1794, %1872 : vector<8x128xf32>
    %1890 = arith.addf %1888, %1889 : vector<8x128xf32>
    %1891 = arith.mulf %1784, %1851 : vector<8x128xf32>
    %1892 = arith.mulf %1789, %1863 : vector<8x128xf32>
    %1893 = arith.addf %1891, %1892 : vector<8x128xf32>
    %1894 = arith.mulf %1794, %1875 : vector<8x128xf32>
    %1895 = arith.addf %1893, %1894 : vector<8x128xf32>
    %cst_389 = arith.constant 0.0416666679 : f32
    %1896 = vector.broadcast %cst_389 : f32 to vector<8x128xf32>
    %1897 = arith.mulf %1896, %1799 : vector<8x128xf32>
    %1898 = arith.addf %1895, %1897 : vector<8x128xf32>
    %1899 = arith.mulf %1804, %1842 : vector<8x128xf32>
    %1900 = arith.mulf %1809, %1854 : vector<8x128xf32>
    %1901 = arith.addf %1899, %1900 : vector<8x128xf32>
    %1902 = arith.mulf %1814, %1866 : vector<8x128xf32>
    %1903 = arith.addf %1901, %1902 : vector<8x128xf32>
    %1904 = arith.mulf %1804, %1845 : vector<8x128xf32>
    %1905 = arith.mulf %1809, %1857 : vector<8x128xf32>
    %1906 = arith.addf %1904, %1905 : vector<8x128xf32>
    %1907 = arith.mulf %1814, %1869 : vector<8x128xf32>
    %1908 = arith.addf %1906, %1907 : vector<8x128xf32>
    %1909 = arith.mulf %1804, %1848 : vector<8x128xf32>
    %1910 = arith.mulf %1809, %1860 : vector<8x128xf32>
    %1911 = arith.addf %1909, %1910 : vector<8x128xf32>
    %1912 = arith.mulf %1814, %1872 : vector<8x128xf32>
    %1913 = arith.addf %1911, %1912 : vector<8x128xf32>
    %1914 = arith.mulf %1804, %1851 : vector<8x128xf32>
    %1915 = arith.mulf %1809, %1863 : vector<8x128xf32>
    %1916 = arith.addf %1914, %1915 : vector<8x128xf32>
    %1917 = arith.mulf %1814, %1875 : vector<8x128xf32>
    %1918 = arith.addf %1916, %1917 : vector<8x128xf32>
    %cst_390 = arith.constant 0.0416666679 : f32
    %1919 = vector.broadcast %cst_390 : f32 to vector<8x128xf32>
    %1920 = arith.mulf %1919, %1819 : vector<8x128xf32>
    %1921 = arith.addf %1918, %1920 : vector<8x128xf32>
    %1922 = arith.mulf %1824, %1842 : vector<8x128xf32>
    %1923 = arith.mulf %1829, %1854 : vector<8x128xf32>
    %1924 = arith.addf %1922, %1923 : vector<8x128xf32>
    %1925 = arith.mulf %1834, %1866 : vector<8x128xf32>
    %1926 = arith.addf %1924, %1925 : vector<8x128xf32>
    %1927 = arith.mulf %1824, %1845 : vector<8x128xf32>
    %1928 = arith.mulf %1829, %1857 : vector<8x128xf32>
    %1929 = arith.addf %1927, %1928 : vector<8x128xf32>
    %1930 = arith.mulf %1834, %1869 : vector<8x128xf32>
    %1931 = arith.addf %1929, %1930 : vector<8x128xf32>
    %1932 = arith.mulf %1824, %1848 : vector<8x128xf32>
    %1933 = arith.mulf %1829, %1860 : vector<8x128xf32>
    %1934 = arith.addf %1932, %1933 : vector<8x128xf32>
    %1935 = arith.mulf %1834, %1872 : vector<8x128xf32>
    %1936 = arith.addf %1934, %1935 : vector<8x128xf32>
    %1937 = arith.mulf %1824, %1851 : vector<8x128xf32>
    %1938 = arith.mulf %1829, %1863 : vector<8x128xf32>
    %1939 = arith.addf %1937, %1938 : vector<8x128xf32>
    %1940 = arith.mulf %1834, %1875 : vector<8x128xf32>
    %1941 = arith.addf %1939, %1940 : vector<8x128xf32>
    %cst_391 = arith.constant 0.0416666679 : f32
    %1942 = vector.broadcast %cst_391 : f32 to vector<8x128xf32>
    %1943 = arith.mulf %1942, %1839 : vector<8x128xf32>
    %1944 = arith.addf %1941, %1943 : vector<8x128xf32>
    %1945 = arith.addf %1615, %1880 : vector<8x128xf32>
    %1946 = arith.addf %1623, %1885 : vector<8x128xf32>
    %1947 = arith.addf %1637, %1890 : vector<8x128xf32>
    %1948 = arith.addf %1651, %1898 : vector<8x128xf32>
    %1949 = arith.addf %1665, %1903 : vector<8x128xf32>
    %1950 = arith.addf %1689, %1908 : vector<8x128xf32>
    %1951 = arith.addf %1697, %1913 : vector<8x128xf32>
    %1952 = arith.addf %1711, %1921 : vector<8x128xf32>
    %1953 = arith.addf %1725, %1926 : vector<8x128xf32>
    %1954 = arith.addf %1739, %1931 : vector<8x128xf32>
    %1955 = arith.addf %1763, %1936 : vector<8x128xf32>
    %1956 = arith.addf %1771, %1944 : vector<8x128xf32>
    %1957 = arith.mulf %1945, %1945 : vector<8x128xf32>
    %1958 = arith.mulf %1946, %1949 : vector<8x128xf32>
    %1959 = arith.addf %1957, %1958 : vector<8x128xf32>
    %1960 = arith.mulf %1947, %1953 : vector<8x128xf32>
    %1961 = arith.addf %1959, %1960 : vector<8x128xf32>
    %1962 = arith.mulf %1945, %1946 : vector<8x128xf32>
    %1963 = arith.mulf %1946, %1950 : vector<8x128xf32>
    %1964 = arith.addf %1962, %1963 : vector<8x128xf32>
    %1965 = arith.mulf %1947, %1954 : vector<8x128xf32>
    %1966 = arith.addf %1964, %1965 : vector<8x128xf32>
    %1967 = arith.mulf %1945, %1947 : vector<8x128xf32>
    %1968 = arith.mulf %1946, %1951 : vector<8x128xf32>
    %1969 = arith.addf %1967, %1968 : vector<8x128xf32>
    %1970 = arith.mulf %1947, %1955 : vector<8x128xf32>
    %1971 = arith.addf %1969, %1970 : vector<8x128xf32>
    %1972 = arith.mulf %1945, %1948 : vector<8x128xf32>
    %1973 = arith.mulf %1946, %1952 : vector<8x128xf32>
    %1974 = arith.addf %1972, %1973 : vector<8x128xf32>
    %1975 = arith.mulf %1947, %1956 : vector<8x128xf32>
    %1976 = arith.addf %1974, %1975 : vector<8x128xf32>
    %1977 = arith.addf %1976, %1948 : vector<8x128xf32>
    %1978 = arith.mulf %1949, %1945 : vector<8x128xf32>
    %1979 = arith.mulf %1950, %1949 : vector<8x128xf32>
    %1980 = arith.addf %1978, %1979 : vector<8x128xf32>
    %1981 = arith.mulf %1951, %1953 : vector<8x128xf32>
    %1982 = arith.addf %1980, %1981 : vector<8x128xf32>
    %1983 = arith.mulf %1949, %1946 : vector<8x128xf32>
    %1984 = arith.mulf %1950, %1950 : vector<8x128xf32>
    %1985 = arith.addf %1983, %1984 : vector<8x128xf32>
    %1986 = arith.mulf %1951, %1954 : vector<8x128xf32>
    %1987 = arith.addf %1985, %1986 : vector<8x128xf32>
    %1988 = arith.mulf %1949, %1947 : vector<8x128xf32>
    %1989 = arith.mulf %1950, %1951 : vector<8x128xf32>
    %1990 = arith.addf %1988, %1989 : vector<8x128xf32>
    %1991 = arith.mulf %1951, %1955 : vector<8x128xf32>
    %1992 = arith.addf %1990, %1991 : vector<8x128xf32>
    %1993 = arith.mulf %1949, %1948 : vector<8x128xf32>
    %1994 = arith.mulf %1950, %1952 : vector<8x128xf32>
    %1995 = arith.addf %1993, %1994 : vector<8x128xf32>
    %1996 = arith.mulf %1951, %1956 : vector<8x128xf32>
    %1997 = arith.addf %1995, %1996 : vector<8x128xf32>
    %1998 = arith.addf %1997, %1952 : vector<8x128xf32>
    %1999 = arith.mulf %1953, %1945 : vector<8x128xf32>
    %2000 = arith.mulf %1954, %1949 : vector<8x128xf32>
    %2001 = arith.addf %1999, %2000 : vector<8x128xf32>
    %2002 = arith.mulf %1955, %1953 : vector<8x128xf32>
    %2003 = arith.addf %2001, %2002 : vector<8x128xf32>
    %2004 = arith.mulf %1953, %1946 : vector<8x128xf32>
    %2005 = arith.mulf %1954, %1950 : vector<8x128xf32>
    %2006 = arith.addf %2004, %2005 : vector<8x128xf32>
    %2007 = arith.mulf %1955, %1954 : vector<8x128xf32>
    %2008 = arith.addf %2006, %2007 : vector<8x128xf32>
    %2009 = arith.mulf %1953, %1947 : vector<8x128xf32>
    %2010 = arith.mulf %1954, %1951 : vector<8x128xf32>
    %2011 = arith.addf %2009, %2010 : vector<8x128xf32>
    %2012 = arith.mulf %1955, %1955 : vector<8x128xf32>
    %2013 = arith.addf %2011, %2012 : vector<8x128xf32>
    %2014 = arith.mulf %1953, %1948 : vector<8x128xf32>
    %2015 = arith.mulf %1954, %1952 : vector<8x128xf32>
    %2016 = arith.addf %2014, %2015 : vector<8x128xf32>
    %2017 = arith.mulf %1955, %1956 : vector<8x128xf32>
    %2018 = arith.addf %2016, %2017 : vector<8x128xf32>
    %2019 = arith.addf %2018, %1956 : vector<8x128xf32>
    %2020 = arith.mulf %1961, %1961 : vector<8x128xf32>
    %2021 = arith.mulf %1966, %1982 : vector<8x128xf32>
    %2022 = arith.addf %2020, %2021 : vector<8x128xf32>
    %2023 = arith.mulf %1971, %2003 : vector<8x128xf32>
    %2024 = arith.addf %2022, %2023 : vector<8x128xf32>
    %2025 = arith.mulf %1961, %1966 : vector<8x128xf32>
    %2026 = arith.mulf %1966, %1987 : vector<8x128xf32>
    %2027 = arith.addf %2025, %2026 : vector<8x128xf32>
    %2028 = arith.mulf %1971, %2008 : vector<8x128xf32>
    %2029 = arith.addf %2027, %2028 : vector<8x128xf32>
    %2030 = arith.mulf %1961, %1971 : vector<8x128xf32>
    %2031 = arith.mulf %1966, %1992 : vector<8x128xf32>
    %2032 = arith.addf %2030, %2031 : vector<8x128xf32>
    %2033 = arith.mulf %1971, %2013 : vector<8x128xf32>
    %2034 = arith.addf %2032, %2033 : vector<8x128xf32>
    %2035 = arith.mulf %1961, %1977 : vector<8x128xf32>
    %2036 = arith.mulf %1966, %1998 : vector<8x128xf32>
    %2037 = arith.addf %2035, %2036 : vector<8x128xf32>
    %2038 = arith.mulf %1971, %2019 : vector<8x128xf32>
    %2039 = arith.addf %2037, %2038 : vector<8x128xf32>
    %2040 = arith.addf %2039, %1977 : vector<8x128xf32>
    %2041 = arith.mulf %1982, %1961 : vector<8x128xf32>
    %2042 = arith.mulf %1987, %1982 : vector<8x128xf32>
    %2043 = arith.addf %2041, %2042 : vector<8x128xf32>
    %2044 = arith.mulf %1992, %2003 : vector<8x128xf32>
    %2045 = arith.addf %2043, %2044 : vector<8x128xf32>
    %2046 = arith.mulf %1982, %1966 : vector<8x128xf32>
    %2047 = arith.mulf %1987, %1987 : vector<8x128xf32>
    %2048 = arith.addf %2046, %2047 : vector<8x128xf32>
    %2049 = arith.mulf %1992, %2008 : vector<8x128xf32>
    %2050 = arith.addf %2048, %2049 : vector<8x128xf32>
    %2051 = arith.mulf %1982, %1971 : vector<8x128xf32>
    %2052 = arith.mulf %1987, %1992 : vector<8x128xf32>
    %2053 = arith.addf %2051, %2052 : vector<8x128xf32>
    %2054 = arith.mulf %1992, %2013 : vector<8x128xf32>
    %2055 = arith.addf %2053, %2054 : vector<8x128xf32>
    %2056 = arith.mulf %1982, %1977 : vector<8x128xf32>
    %2057 = arith.mulf %1987, %1998 : vector<8x128xf32>
    %2058 = arith.addf %2056, %2057 : vector<8x128xf32>
    %2059 = arith.mulf %1992, %2019 : vector<8x128xf32>
    %2060 = arith.addf %2058, %2059 : vector<8x128xf32>
    %2061 = arith.addf %2060, %1998 : vector<8x128xf32>
    %2062 = arith.mulf %2003, %1961 : vector<8x128xf32>
    %2063 = arith.mulf %2008, %1982 : vector<8x128xf32>
    %2064 = arith.addf %2062, %2063 : vector<8x128xf32>
    %2065 = arith.mulf %2013, %2003 : vector<8x128xf32>
    %2066 = arith.addf %2064, %2065 : vector<8x128xf32>
    %2067 = arith.mulf %2003, %1966 : vector<8x128xf32>
    %2068 = arith.mulf %2008, %1987 : vector<8x128xf32>
    %2069 = arith.addf %2067, %2068 : vector<8x128xf32>
    %2070 = arith.mulf %2013, %2008 : vector<8x128xf32>
    %2071 = arith.addf %2069, %2070 : vector<8x128xf32>
    %2072 = arith.mulf %2003, %1971 : vector<8x128xf32>
    %2073 = arith.mulf %2008, %1992 : vector<8x128xf32>
    %2074 = arith.addf %2072, %2073 : vector<8x128xf32>
    %2075 = arith.mulf %2013, %2013 : vector<8x128xf32>
    %2076 = arith.addf %2074, %2075 : vector<8x128xf32>
    %2077 = arith.mulf %2003, %1977 : vector<8x128xf32>
    %2078 = arith.mulf %2008, %1998 : vector<8x128xf32>
    %2079 = arith.addf %2077, %2078 : vector<8x128xf32>
    %2080 = arith.mulf %2013, %2019 : vector<8x128xf32>
    %2081 = arith.addf %2079, %2080 : vector<8x128xf32>
    %2082 = arith.addf %2081, %2019 : vector<8x128xf32>
    %2083 = arith.mulf %2024, %2024 : vector<8x128xf32>
    %2084 = arith.mulf %2029, %2045 : vector<8x128xf32>
    %2085 = arith.addf %2083, %2084 : vector<8x128xf32>
    %2086 = arith.mulf %2034, %2066 : vector<8x128xf32>
    %2087 = arith.addf %2085, %2086 : vector<8x128xf32>
    %2088 = arith.mulf %2024, %2029 : vector<8x128xf32>
    %2089 = arith.mulf %2029, %2050 : vector<8x128xf32>
    %2090 = arith.addf %2088, %2089 : vector<8x128xf32>
    %2091 = arith.mulf %2034, %2071 : vector<8x128xf32>
    %2092 = arith.addf %2090, %2091 : vector<8x128xf32>
    %2093 = arith.mulf %2024, %2034 : vector<8x128xf32>
    %2094 = arith.mulf %2029, %2055 : vector<8x128xf32>
    %2095 = arith.addf %2093, %2094 : vector<8x128xf32>
    %2096 = arith.mulf %2034, %2076 : vector<8x128xf32>
    %2097 = arith.addf %2095, %2096 : vector<8x128xf32>
    %2098 = arith.mulf %2024, %2040 : vector<8x128xf32>
    %2099 = arith.mulf %2029, %2061 : vector<8x128xf32>
    %2100 = arith.addf %2098, %2099 : vector<8x128xf32>
    %2101 = arith.mulf %2034, %2082 : vector<8x128xf32>
    %2102 = arith.addf %2100, %2101 : vector<8x128xf32>
    %2103 = arith.addf %2102, %2040 : vector<8x128xf32>
    %2104 = arith.mulf %2045, %2024 : vector<8x128xf32>
    %2105 = arith.mulf %2050, %2045 : vector<8x128xf32>
    %2106 = arith.addf %2104, %2105 : vector<8x128xf32>
    %2107 = arith.mulf %2055, %2066 : vector<8x128xf32>
    %2108 = arith.addf %2106, %2107 : vector<8x128xf32>
    %2109 = arith.mulf %2045, %2029 : vector<8x128xf32>
    %2110 = arith.mulf %2050, %2050 : vector<8x128xf32>
    %2111 = arith.addf %2109, %2110 : vector<8x128xf32>
    %2112 = arith.mulf %2055, %2071 : vector<8x128xf32>
    %2113 = arith.addf %2111, %2112 : vector<8x128xf32>
    %2114 = arith.mulf %2045, %2034 : vector<8x128xf32>
    %2115 = arith.mulf %2050, %2055 : vector<8x128xf32>
    %2116 = arith.addf %2114, %2115 : vector<8x128xf32>
    %2117 = arith.mulf %2055, %2076 : vector<8x128xf32>
    %2118 = arith.addf %2116, %2117 : vector<8x128xf32>
    %2119 = arith.mulf %2045, %2040 : vector<8x128xf32>
    %2120 = arith.mulf %2050, %2061 : vector<8x128xf32>
    %2121 = arith.addf %2119, %2120 : vector<8x128xf32>
    %2122 = arith.mulf %2055, %2082 : vector<8x128xf32>
    %2123 = arith.addf %2121, %2122 : vector<8x128xf32>
    %2124 = arith.addf %2123, %2061 : vector<8x128xf32>
    %2125 = arith.mulf %2066, %2024 : vector<8x128xf32>
    %2126 = arith.mulf %2071, %2045 : vector<8x128xf32>
    %2127 = arith.addf %2125, %2126 : vector<8x128xf32>
    %2128 = arith.mulf %2076, %2066 : vector<8x128xf32>
    %2129 = arith.addf %2127, %2128 : vector<8x128xf32>
    %2130 = arith.mulf %2066, %2029 : vector<8x128xf32>
    %2131 = arith.mulf %2071, %2050 : vector<8x128xf32>
    %2132 = arith.addf %2130, %2131 : vector<8x128xf32>
    %2133 = arith.mulf %2076, %2071 : vector<8x128xf32>
    %2134 = arith.addf %2132, %2133 : vector<8x128xf32>
    %2135 = arith.mulf %2066, %2034 : vector<8x128xf32>
    %2136 = arith.mulf %2071, %2055 : vector<8x128xf32>
    %2137 = arith.addf %2135, %2136 : vector<8x128xf32>
    %2138 = arith.mulf %2076, %2076 : vector<8x128xf32>
    %2139 = arith.addf %2137, %2138 : vector<8x128xf32>
    %2140 = arith.mulf %2066, %2040 : vector<8x128xf32>
    %2141 = arith.mulf %2071, %2061 : vector<8x128xf32>
    %2142 = arith.addf %2140, %2141 : vector<8x128xf32>
    %2143 = arith.mulf %2076, %2082 : vector<8x128xf32>
    %2144 = arith.addf %2142, %2143 : vector<8x128xf32>
    %2145 = arith.addf %2144, %2082 : vector<8x128xf32>
    %2146 = arith.mulf %2087, %2087 : vector<8x128xf32>
    %2147 = arith.mulf %2092, %2108 : vector<8x128xf32>
    %2148 = arith.addf %2146, %2147 : vector<8x128xf32>
    %2149 = arith.mulf %2097, %2129 : vector<8x128xf32>
    %2150 = arith.addf %2148, %2149 : vector<8x128xf32>
    %2151 = arith.mulf %2087, %2092 : vector<8x128xf32>
    %2152 = arith.mulf %2092, %2113 : vector<8x128xf32>
    %2153 = arith.addf %2151, %2152 : vector<8x128xf32>
    %2154 = arith.mulf %2097, %2134 : vector<8x128xf32>
    %2155 = arith.addf %2153, %2154 : vector<8x128xf32>
    %2156 = arith.mulf %2087, %2097 : vector<8x128xf32>
    %2157 = arith.mulf %2092, %2118 : vector<8x128xf32>
    %2158 = arith.addf %2156, %2157 : vector<8x128xf32>
    %2159 = arith.mulf %2097, %2139 : vector<8x128xf32>
    %2160 = arith.addf %2158, %2159 : vector<8x128xf32>
    %2161 = arith.mulf %2087, %2103 : vector<8x128xf32>
    %2162 = arith.mulf %2092, %2124 : vector<8x128xf32>
    %2163 = arith.addf %2161, %2162 : vector<8x128xf32>
    %2164 = arith.mulf %2097, %2145 : vector<8x128xf32>
    %2165 = arith.addf %2163, %2164 : vector<8x128xf32>
    %2166 = arith.addf %2165, %2103 : vector<8x128xf32>
    %2167 = arith.mulf %2108, %2087 : vector<8x128xf32>
    %2168 = arith.mulf %2113, %2108 : vector<8x128xf32>
    %2169 = arith.addf %2167, %2168 : vector<8x128xf32>
    %2170 = arith.mulf %2118, %2129 : vector<8x128xf32>
    %2171 = arith.addf %2169, %2170 : vector<8x128xf32>
    %2172 = arith.mulf %2108, %2092 : vector<8x128xf32>
    %2173 = arith.mulf %2113, %2113 : vector<8x128xf32>
    %2174 = arith.addf %2172, %2173 : vector<8x128xf32>
    %2175 = arith.mulf %2118, %2134 : vector<8x128xf32>
    %2176 = arith.addf %2174, %2175 : vector<8x128xf32>
    %2177 = arith.mulf %2108, %2097 : vector<8x128xf32>
    %2178 = arith.mulf %2113, %2118 : vector<8x128xf32>
    %2179 = arith.addf %2177, %2178 : vector<8x128xf32>
    %2180 = arith.mulf %2118, %2139 : vector<8x128xf32>
    %2181 = arith.addf %2179, %2180 : vector<8x128xf32>
    %2182 = arith.mulf %2108, %2103 : vector<8x128xf32>
    %2183 = arith.mulf %2113, %2124 : vector<8x128xf32>
    %2184 = arith.addf %2182, %2183 : vector<8x128xf32>
    %2185 = arith.mulf %2118, %2145 : vector<8x128xf32>
    %2186 = arith.addf %2184, %2185 : vector<8x128xf32>
    %2187 = arith.addf %2186, %2124 : vector<8x128xf32>
    %2188 = arith.mulf %2129, %2087 : vector<8x128xf32>
    %2189 = arith.mulf %2134, %2108 : vector<8x128xf32>
    %2190 = arith.addf %2188, %2189 : vector<8x128xf32>
    %2191 = arith.mulf %2139, %2129 : vector<8x128xf32>
    %2192 = arith.addf %2190, %2191 : vector<8x128xf32>
    %2193 = arith.mulf %2129, %2092 : vector<8x128xf32>
    %2194 = arith.mulf %2134, %2113 : vector<8x128xf32>
    %2195 = arith.addf %2193, %2194 : vector<8x128xf32>
    %2196 = arith.mulf %2139, %2134 : vector<8x128xf32>
    %2197 = arith.addf %2195, %2196 : vector<8x128xf32>
    %2198 = arith.mulf %2129, %2097 : vector<8x128xf32>
    %2199 = arith.mulf %2134, %2118 : vector<8x128xf32>
    %2200 = arith.addf %2198, %2199 : vector<8x128xf32>
    %2201 = arith.mulf %2139, %2139 : vector<8x128xf32>
    %2202 = arith.addf %2200, %2201 : vector<8x128xf32>
    %2203 = arith.mulf %2129, %2103 : vector<8x128xf32>
    %2204 = arith.mulf %2134, %2124 : vector<8x128xf32>
    %2205 = arith.addf %2203, %2204 : vector<8x128xf32>
    %2206 = arith.mulf %2139, %2145 : vector<8x128xf32>
    %2207 = arith.addf %2205, %2206 : vector<8x128xf32>
    %2208 = arith.addf %2207, %2145 : vector<8x128xf32>
    %c0_392 = arith.constant 0 : index
    %2209 = arith.index_cast %1179 : i32 to index
    %c0_393 = arith.constant 0 : index
    %2210 = vector.load %arg3[%c0_392, %2209, %c0_393] : memref<3x16x128xf32, #tpu.memory_space<vmem>>, vector<1x8x128xf32>
    %2211 = vector.shape_cast %2210 : vector<1x8x128xf32> to vector<8x128xf32>
    %c1_394 = arith.constant 1 : index
    %2212 = arith.index_cast %1179 : i32 to index
    %c0_395 = arith.constant 0 : index
    %2213 = vector.load %arg3[%c1_394, %2212, %c0_395] : memref<3x16x128xf32, #tpu.memory_space<vmem>>, vector<1x8x128xf32>
    %2214 = vector.shape_cast %2213 : vector<1x8x128xf32> to vector<8x128xf32>
    %c2_396 = arith.constant 2 : index
    %2215 = arith.index_cast %1179 : i32 to index
    %c0_397 = arith.constant 0 : index
    %2216 = vector.load %arg3[%c2_396, %2215, %c0_397] : memref<3x16x128xf32, #tpu.memory_space<vmem>>, vector<1x8x128xf32>
    %2217 = vector.shape_cast %2216 : vector<1x8x128xf32> to vector<8x128xf32>
    %2218 = arith.mulf %2150, %2211 : vector<8x128xf32>
    %2219 = arith.mulf %2155, %2214 : vector<8x128xf32>
    %2220 = arith.addf %2218, %2219 : vector<8x128xf32>
    %2221 = arith.mulf %2160, %2217 : vector<8x128xf32>
    %2222 = arith.addf %2220, %2221 : vector<8x128xf32>
    %2223 = arith.addf %2222, %2166 : vector<8x128xf32>
    %2224 = arith.mulf %2171, %2211 : vector<8x128xf32>
    %2225 = arith.mulf %2176, %2214 : vector<8x128xf32>
    %2226 = arith.addf %2224, %2225 : vector<8x128xf32>
    %2227 = arith.mulf %2181, %2217 : vector<8x128xf32>
    %2228 = arith.addf %2226, %2227 : vector<8x128xf32>
    %2229 = arith.addf %2228, %2187 : vector<8x128xf32>
    %2230 = arith.mulf %2192, %2211 : vector<8x128xf32>
    %2231 = arith.mulf %2197, %2214 : vector<8x128xf32>
    %2232 = arith.addf %2230, %2231 : vector<8x128xf32>
    %2233 = arith.mulf %2202, %2217 : vector<8x128xf32>
    %2234 = arith.addf %2232, %2233 : vector<8x128xf32>
    %2235 = arith.addf %2234, %2208 : vector<8x128xf32>
    %cst_398 = arith.constant 8.000000e+00 : f32
    %2236 = vector.broadcast %cst_398 : f32 to vector<8x128xf32>
    %2237 = arith.mulf %2236, %2235 : vector<8x128xf32>
    %cst_399 = arith.constant 7.500000e+00 : f32
    %2238 = vector.broadcast %cst_399 : f32 to vector<8x128xf32>
    %2239 = arith.addf %2237, %2238 : vector<8x128xf32>
    %c0_400 = arith.constant 0 : index
    %2240 = arith.index_cast %1179 : i32 to index
    %c0_401 = arith.constant 0 : index
    %2241 = vector.load %arg4[%c0_400, %2240, %c0_401] : memref<3x16x128xf32, #tpu.memory_space<vmem>>, vector<1x8x128xf32>
    %2242 = vector.shape_cast %2241 : vector<1x8x128xf32> to vector<8x128xf32>
    %2243 = vector.shape_cast %2239 : vector<8x128xf32> to vector<1x8x128xf32>
    tpu.vector_store %arg4[%c0_400, %2240, %c0_401], %2243 {strides = array<i32>} : memref<3x16x128xf32, #tpu.memory_space<vmem>>, vector<1x8x128xf32>,
    %cst_402 = arith.constant 8.000000e+00 : f32
    %2244 = vector.broadcast %cst_402 : f32 to vector<8x128xf32>
    %2245 = arith.mulf %2244, %2229 : vector<8x128xf32>
    %cst_403 = arith.constant 7.500000e+00 : f32
    %2246 = vector.broadcast %cst_403 : f32 to vector<8x128xf32>
    %2247 = arith.addf %2245, %2246 : vector<8x128xf32>
    %c1_404 = arith.constant 1 : index
    %2248 = arith.index_cast %1179 : i32 to index
    %c0_405 = arith.constant 0 : index
    %2249 = vector.load %arg4[%c1_404, %2248, %c0_405] : memref<3x16x128xf32, #tpu.memory_space<vmem>>, vector<1x8x128xf32>
    %2250 = vector.shape_cast %2249 : vector<1x8x128xf32> to vector<8x128xf32>
    %2251 = vector.shape_cast %2247 : vector<8x128xf32> to vector<1x8x128xf32>
    tpu.vector_store %arg4[%c1_404, %2248, %c0_405], %2251 {strides = array<i32>} : memref<3x16x128xf32, #tpu.memory_space<vmem>>, vector<1x8x128xf32>,
    %cst_406 = arith.constant 8.000000e+00 : f32
    %2252 = vector.broadcast %cst_406 : f32 to vector<8x128xf32>
    %2253 = arith.mulf %2252, %2223 : vector<8x128xf32>
    %cst_407 = arith.constant 7.500000e+00 : f32
    %2254 = vector.broadcast %cst_407 : f32 to vector<8x128xf32>
    %2255 = arith.addf %2253, %2254 : vector<8x128xf32>
    %c2_408 = arith.constant 2 : index
    %2256 = arith.index_cast %1179 : i32 to index
    %c0_409 = arith.constant 0 : index
    %2257 = vector.load %arg4[%c2_408, %2256, %c0_409] : memref<3x16x128xf32, #tpu.memory_space<vmem>>, vector<1x8x128xf32>
    %2258 = vector.shape_cast %2257 : vector<1x8x128xf32> to vector<8x128xf32>
    %2259 = vector.shape_cast %2255 : vector<8x128xf32> to vector<1x8x128xf32>
    tpu.vector_store %arg4[%c2_408, %2256, %c0_409], %2259 {strides = array<i32>} : memref<3x16x128xf32, #tpu.memory_space<vmem>>, vector<1x8x128xf32>,
    %c2_i32 = arith.constant 2 : i32
    return
  }
  func.func @transform_0(%arg0: i32) -> (i32, i32) {
    %c0_i32 = arith.constant 0 : i32
    %c0_i32_0 = arith.constant 0 : i32
    %c0_i32_1 = arith.constant 0 : i32
    return %c0_i32, %c0_i32_0 : i32, i32
  }
  func.func @transform_1(%arg0: i32) -> (i32, i32, i32) {
    %c0_i32 = arith.constant 0 : i32
    %c0_i32_0 = arith.constant 0 : i32
    %c0_i32_1 = arith.constant 0 : i32
    return %c0_i32, %arg0, %c0_i32_0 : i32, i32, i32
  }
  func.func @transform_2(%arg0: i32) -> (i32, i32, i32) {
    %c0_i32 = arith.constant 0 : i32
    %c0_i32_0 = arith.constant 0 : i32
    %c0_i32_1 = arith.constant 0 : i32
    return %c0_i32, %arg0, %c0_i32_0 : i32, i32, i32
  }
  func.func @transform_3(%arg0: i32) -> (i32, i32, i32) {
    %c0_i32 = arith.constant 0 : i32
    %c0_i32_0 = arith.constant 0 : i32
    %c0_i32_1 = arith.constant 0 : i32
    return %c0_i32, %arg0, %c0_i32_0 : i32, i32, i32
  }
}

</mosaic_0001>

<llo_original>
// kernel: polyrigid_forward.1
$region0: #{polyrigid_forward.1}
  #allocation0 [shape = 'u32[]', space=smem, size = 0x4, offset = 0x4, fixed_abs, tag = 'smem constant byte address 0x4 - core index']
  #allocation1 [shape = 'u32[72,128]{1,0:T(1,128)}', space=vmem, size = 0x9000, scoped, tag = 'internal scratch']
  %s0 = inlined_call_operand.vmem [shape: f32[8,12], index: 0, kind: input, shape index: {}]
  %s1 = inlined_call_operand.vmem [shape: f32[8,32,128], index: 1, kind: input, shape index: {}]
  %s2 = inlined_call_operand.vmem [shape: f32[3,32,128], index: 2, kind: input, shape index: {}]
  %s3 = inlined_call_operand.vmem [shape: f32[3,32,128], index: 3, kind: output, shape index: {}]
  %s4 = sld [smem:[#allocation0]]
  $region159: #{polyrigid_forward.1} parent=0
    _
  %s6 = ssub.s32 1, %s4
  %s7 = scalar_select 0, %s6, %s4
  $region1: #{polyrigid_forward.1} parent=0
    #allocation2 [shape = 'u8[4096]{0}', space=smem, size = 0x1000, scoped, tag = 'input window, operand 0, single buffered']
    #allocation3 [shape = 's32[2]{0}', space=sflag, size = 0x8, scoped, tag = 'scoped memory for polyrigid_forward.1']
    #allocation4 [shape = 'u8[131072]{0}', space=vmem, size = 0x20000, scoped, tag = 'input window, operand 1']
    #allocation5 [shape = 'u8[49152]{0}', space=vmem, size = 0xc000, scoped, tag = 'input window, operand 2']
    #allocation6 [shape = 'u8[49152]{0}', space=vmem, size = 0xc000, scoped, tag = 'output window, operand 0']
    %8 = vsyncpa [#allocation3], 0
    loop: start=0, step=1, limit=4
    $region2: #{polyrigid_forward.1} parent=1 // loop_pre_header
      _
    $region3: #{polyrigid_forward.1} parent=1 // loop_header
      %s10 = sphi 0, %s14
      %p11 = scmp.ge.s32.totalorder %s10, 4
      %s18 = sphi 0, %s18
      %s20 = sphi 0, %s18
      %s21 = sphi 0, %s20
      %s35 = sphi 0, %s21
      %s41 = sphi 0, %s43
      %s44 = sphi 0, %s41
      %s45 = sphi 0, %s44
      %s61 = sphi 0, %s45
      %s67 = sphi 0, %s69
      %s70 = sphi 0, %s67
      %s71 = sphi 0, %s70
      %s87 = sphi 0, %s71
      %s93 = sphi 0, %s95
      %s96 = sphi 0, %s93
      %s97 = sphi 0, %s96
      %s113 = sphi 0, %s97
    $region4: #{polyrigid_forward.1} parent=1 // loop_header_branch
      %13 = sbr.rel (%p11) target = $region8
    $region5: #{polyrigid_forward.1} parent=1 // loop_body
      %s15 = ssub.s32 %s10, 1
      %s16 = ssub.s32 %s10, 2
      %s17 = sadd.s32 %s10, 1
      %s19 = sadd.s32 %s18, 1
      %p22 = scmp.eq.s32.totalorder %s10, 1
      %p23 = scmp.ne.s32.totalorder %s18, %s20
      %p24 = scmp.eq.s32.totalorder %s10, 0
      %p25 = por %p23, %p24
      %p26 = scmp.ne.s32.totalorder %s18, %s20
      %p27 = scmp.eq.s32.totalorder %s15, 1
      %p28 = por %p26, %p27
      %p29 = scmp.ne.s32.totalorder %s20, %s21
      %p30 = scmp.eq.s32.totalorder %s15, 0
      %p31 = por %p29, %p30
      %p32 = scmp.ne.s32.totalorder %s20, %s21
      %p33 = scmp.eq.s32.totalorder %s16, 1
      %p34 = por %p32, %p33
      %p36 = scmp.ne.s32.totalorder %s21, %s35
      %p37 = scmp.eq.s32.totalorder %s16, 0
      %p38 = por %p36, %p37
      %s39 = ssub.s32 %s10, %s17
      %p40 = scmp.eq.s32.totalorder %s39, 0
      %s42 = sadd.s32 %s41, 1
      %s43 = scalar_select %p40, %s41, %s42
      %p46 = pneg %p40
      %p47 = scmp.eq.s32.totalorder %s10, 1
      %p48 = por %p46, %p47
      %p49 = scmp.ne.s32.totalorder %s41, %s44
      %p50 = scmp.eq.s32.totalorder %s10, 0
      %p51 = por %p49, %p50
      %p52 = scmp.ne.s32.totalorder %s41, %s44
      %p53 = scmp.eq.s32.totalorder %s15, 1
      %p54 = por %p52, %p53
      %p55 = scmp.ne.s32.totalorder %s44, %s45
      %p56 = scmp.eq.s32.totalorder %s15, 0
      %p57 = por %p55, %p56
      %p58 = scmp.ne.s32.totalorder %s44, %s45
      %p59 = scmp.eq.s32.totalorder %s16, 1
      %p60 = por %p58, %p59
      %p62 = scmp.ne.s32.totalorder %s45, %s61
      %p63 = scmp.eq.s32.totalorder %s16, 0
      %p64 = por %p62, %p63
      %s65 = ssub.s32 %s10, %s17
      %p66 = scmp.eq.s32.totalorder %s65, 0
      %s68 = sadd.s32 %s67, 1
      %s69 = scalar_select %p66, %s67, %s68
      %p72 = pneg %p66
      %p73 = scmp.eq.s32.totalorder %s10, 1
      %p74 = por %p72, %p73
      %p75 = scmp.ne.s32.totalorder %s67, %s70
      %p76 = scmp.eq.s32.totalorder %s10, 0
      %p77 = por %p75, %p76
      %p78 = scmp.ne.s32.totalorder %s67, %s70
      %p79 = scmp.eq.s32.totalorder %s15, 1
      %p80 = por %p78, %p79
      %p81 = scmp.ne.s32.totalorder %s70, %s71
      %p82 = scmp.eq.s32.totalorder %s15, 0
      %p83 = por %p81, %p82
      %p84 = scmp.ne.s32.totalorder %s70, %s71
      %p85 = scmp.eq.s32.totalorder %s16, 1
      %p86 = por %p84, %p85
      %p88 = scmp.ne.s32.totalorder %s71, %s87
      %p89 = scmp.eq.s32.totalorder %s16, 0
      %p90 = por %p88, %p89
      %s91 = ssub.s32 %s10, %s17
      %p92 = scmp.eq.s32.totalorder %s91, 0
      %s94 = sadd.s32 %s93, 1
      %s95 = scalar_select %p92, %s93, %s94
      %p98 = pneg %p92
      %p99 = scmp.eq.s32.totalorder %s10, 1
      %p100 = por %p98, %p99
      %p101 = scmp.ne.s32.totalorder %s93, %s96
      %p102 = scmp.eq.s32.totalorder %s10, 0
      %p103 = por %p101, %p102
      %p104 = scmp.ne.s32.totalorder %s93, %s96
      %p105 = scmp.eq.s32.totalorder %s15, 1
      %p106 = por %p104, %p105
      %p107 = scmp.ne.s32.totalorder %s96, %s97
      %p108 = scmp.eq.s32.totalorder %s15, 0
      %p109 = por %p107, %p108
      %p110 = scmp.ne.s32.totalorder %s96, %s97
      %p111 = scmp.eq.s32.totalorder %s16, 1
      %p112 = por %p110, %p111
      %p114 = scmp.ne.s32.totalorder %s97, %s113
      %p115 = scmp.eq.s32.totalorder %s16, 0
      %p116 = por %p114, %p115
      %p117 = scmp.le.s32.totalorder 1, %s10
      %p118 = scmp.lt.s32.totalorder %s10, 3
      %p119 = pnand %p117, %p118
      %p120 = pneg %p119
      // Predicated region
      $region9: #{polyrigid_forward.1} parent=5 // pred_check
        _
      $region10: #{polyrigid_forward.1} parent=5 // pred_check_branch
        %122 = sbr.rel (%p119) target = $region12
      $region11: #{polyrigid_forward.1} parent=5 // pred_region
        %s123 = ssub.s32 %s10, 1
        // Predicated region
        $region13: #{polyrigid_forward.1} parent=11 // pred_check
          %p124 = pneg %p31
        $region14: #{polyrigid_forward.1} parent=11 // pred_check_branch
          %126 = sbr.rel (%p124) target = $region16
        $region15: #{polyrigid_forward.1} parent=11 // pred_region
          %128 = vsyncadd [#allocation3], 0
          %s130 = sshll.u32 %s0, 4
          %s131 = int_to_ptr.vmem [resolvable:$true] %s130
          %133 = dma.vmem_to_smem %s131, 128, [#allocation2], [#allocation3]
        $region16: #{polyrigid_forward.1} parent=11 // pred_fallthru
          _
      $region12: #{polyrigid_forward.1} parent=5 // pred_fallthru
        _
      %p134 = scmp.lt.s32.totalorder %s10, 2
      // Predicated region
      $region17: #{polyrigid_forward.1} parent=5 // pred_check
        %p135 = pneg %p134
      $region18: #{polyrigid_forward.1} parent=5 // pred_check_branch
        %137 = sbr.rel (%p135) target = $region20
      $region19: #{polyrigid_forward.1} parent=5 // pred_region
        // Predicated region
        $region21: #{polyrigid_forward.1} parent=19 // pred_check
          %p138 = pneg %p51
        $region22: #{polyrigid_forward.1} parent=19 // pred_check_branch
          %140 = sbr.rel (%p138) target = $region24
        $region23: #{polyrigid_forward.1} parent=19 // pred_region
          %s141 = sand.u32 %s41, 1
          %s142 = sand.u32 %s41, 1
          %s143 = smul.addr %s142, 128
          %s144 = scalar_lea.vmem [#allocation4], %s143
          %s145 = smul.u32 2, %s10
          %s146 = smul.addr %s145, 8
          %s147 = scalar_lea.vmem %s1, %s146
          // Predicated region
          $region25: #{polyrigid_forward.1} parent=23 // pred_check
            _
          $region26: #{polyrigid_forward.1} parent=23 // pred_check_branch
            %149 = sbr.rel (0) target = $region28
          $region27: #{polyrigid_forward.1} parent=23 // pred_region
            // Predicated region
            $region29: #{polyrigid_forward.1} parent=27 // pred_check
              _
            $region30: #{polyrigid_forward.1} parent=27 // pred_check_branch
              %151 = sbr.rel (0) target = $region32
            $region31: #{polyrigid_forward.1} parent=27 // pred_region
              // Predicated region
              $region44: #{polyrigid_forward.1} parent=31 // pred_check
                _
              $region45: #{polyrigid_forward.1} parent=31 // pred_check_branch
                %197 = sbr.rel (0) target = $region47
              $region46: #{polyrigid_forward.1} parent=31 // pred_region
                loop: start=0, step=1, limit=1
                $region48: #{polyrigid_forward.1} parent=46 // loop_pre_header
                  _
                $region49: #{polyrigid_forward.1} parent=46 // loop_header
                  %s199 = sphi 0, %s203
                  %p200 = scmp.ge.s32.totalorder %s199, 1
                  %s204 = sphi %s147, %s147
                  %s205 = sphi %s144, %s144
                $region50: #{polyrigid_forward.1} parent=46 // loop_header_branch
                  %202 = sbr.rel (%p200) target = $region54
                $region51: #{polyrigid_forward.1} parent=46 // loop_body
                  %v206 = vld [vmem:[%s204] sm:$0xff]
                  %207 = vst [vmem:[%s205] sm:$0xff] %v206
                  %v208 = vld [vmem:[%s204 + $0x8] sm:$0xff]
                  %209 = vst [vmem:[%s205 + $0x8] sm:$0xff] %v208
                  %v210 = vld [vmem:[%s204 + $0x20] sm:$0xff]
                  %211 = vst [vmem:[%s205 + $0x10] sm:$0xff] %v210
                  %v212 = vld [vmem:[%s204 + $0x28] sm:$0xff]
                  %213 = vst [vmem:[%s205 + $0x18] sm:$0xff] %v212
                  %v214 = vld [vmem:[%s204 + $0x40] sm:$0xff]
                  %215 = vst [vmem:[%s205 + $0x20] sm:$0xff] %v214
                  %v216 = vld [vmem:[%s204 + $0x48] sm:$0xff]
                  %217 = vst [vmem:[%s205 + $0x28] sm:$0xff] %v216
                  %v218 = vld [vmem:[%s204 + $0x60] sm:$0xff]
                  %219 = vst [vmem:[%s205 + $0x30] sm:$0xff] %v218
                  %v220 = vld [vmem:[%s204 + $0x68] sm:$0xff]
                  %221 = vst [vmem:[%s205 + $0x38] sm:$0xff] %v220
                  %v222 = vld [vmem:[%s204 + $0x80] sm:$0xff]
                  %223 = vst [vmem:[%s205 + $0x40] sm:$0xff] %v222
                  %v224 = vld [vmem:[%s204 + $0x88] sm:$0xff]
                  %225 = vst [vmem:[%s205 + $0x48] sm:$0xff] %v224
                  %v226 = vld [vmem:[%s204 + $0xa0] sm:$0xff]
                  %227 = vst [vmem:[%s205 + $0x50] sm:$0xff] %v226
                  %v228 = vld [vmem:[%s204 + $0xa8] sm:$0xff]
                  %229 = vst [vmem:[%s205 + $0x58] sm:$0xff] %v228
                  %v230 = vld [vmem:[%s204 + $0xc0] sm:$0xff]
                  %231 = vst [vmem:[%s205 + $0x60] sm:$0xff] %v230
                  %v232 = vld [vmem:[%s204 + $0xc8] sm:$0xff]
                  %233 = vst [vmem:[%s205 + $0x68] sm:$0xff] %v232
                  %v234 = vld [vmem:[%s204 + $0xe0] sm:$0xff]
                  %235 = vst [vmem:[%s205 + $0x70] sm:$0xff] %v234
                  %v236 = vld [vmem:[%s204 + $0xe8] sm:$0xff]
                  %237 = vst [vmem:[%s205 + $0x78] sm:$0xff] %v236
                $region52: #{polyrigid_forward.1} parent=46 // loop_footer
                  %s203 = sadd.s32 1, %s199
                $region53: #{polyrigid_forward.1} parent=46 // loop_footer_branch
                  %198 = sbr.rel target = $region49
                $region54: #{polyrigid_forward.1} parent=46 // loop_exit
                  _
              $region47: #{polyrigid_forward.1} parent=31 // pred_fallthru
                _
              // Predicated region
              $region55: #{polyrigid_forward.1} parent=31 // pred_check
                _
              $region56: #{polyrigid_forward.1} parent=31 // pred_check_branch
                %239 = sbr.rel target = $region58
              $region57: #{polyrigid_forward.1} parent=31 // pred_region
                _
              $region58: #{polyrigid_forward.1} parent=31 // pred_fallthru
                _
            $region32: #{polyrigid_forward.1} parent=27 // pred_fallthru
              _
            // Predicated region
            $region33: #{polyrigid_forward.1} parent=27 // pred_check
              _
            $region34: #{polyrigid_forward.1} parent=27 // pred_check_branch
              %153 = sbr.rel target = $region36
            $region35: #{polyrigid_forward.1} parent=27 // pred_region
              %s155 = ssub.s32 256, 1
              loop: start=0, step=1, limit=1
              $region37: #{polyrigid_forward.1} parent=35 // loop_pre_header
                _
              $region38: #{polyrigid_forward.1} parent=35 // loop_header
                %s157 = sphi 0, %s161
                %p158 = scmp.ge.s32.totalorder %s157, 1
                %s162 = sphi %s147, %s147
                %s163 = sphi %s144, %s144
              $region39: #{polyrigid_forward.1} parent=35 // loop_header_branch
                %160 = sbr.rel (%p158) target = $region43
              $region40: #{polyrigid_forward.1} parent=35 // loop_body
                %v164 = vld [vmem:[%s162] sm:%s155]
                %165 = vst [vmem:[%s163] sm:%s155] %v164
                %v166 = vld [vmem:[%s162 + $0x8] sm:%s155]
                %167 = vst [vmem:[%s163 + $0x8] sm:%s155] %v166
                %v168 = vld [vmem:[%s162 + $0x20] sm:%s155]
                %169 = vst [vmem:[%s163 + $0x10] sm:%s155] %v168
                %v170 = vld [vmem:[%s162 + $0x28] sm:%s155]
                %171 = vst [vmem:[%s163 + $0x18] sm:%s155] %v170
                %v172 = vld [vmem:[%s162 + $0x40] sm:%s155]
                %173 = vst [vmem:[%s163 + $0x20] sm:%s155] %v172
                %v174 = vld [vmem:[%s162 + $0x48] sm:%s155]
                %175 = vst [vmem:[%s163 + $0x28] sm:%s155] %v174
                %v176 = vld [vmem:[%s162 + $0x60] sm:%s155]
                %177 = vst [vmem:[%s163 + $0x30] sm:%s155] %v176
                %v178 = vld [vmem:[%s162 + $0x68] sm:%s155]
                %179 = vst [vmem:[%s163 + $0x38] sm:%s155] %v178
                %v180 = vld [vmem:[%s162 + $0x80] sm:%s155]
                %181 = vst [vmem:[%s163 + $0x40] sm:%s155] %v180
                %v182 = vld [vmem:[%s162 + $0x88] sm:%s155]
                %183 = vst [vmem:[%s163 + $0x48] sm:%s155] %v182
                %v184 = vld [vmem:[%s162 + $0xa0] sm:%s155]
                %185 = vst [vmem:[%s163 + $0x50] sm:%s155] %v184
                %v186 = vld [vmem:[%s162 + $0xa8] sm:%s155]
                %187 = vst [vmem:[%s163 + $0x58] sm:%s155] %v186
                %v188 = vld [vmem:[%s162 + $0xc0] sm:%s155]
                %189 = vst [vmem:[%s163 + $0x60] sm:%s155] %v188
                %v190 = vld [vmem:[%s162 + $0xc8] sm:%s155]
                %191 = vst [vmem:[%s163 + $0x68] sm:%s155] %v190
                %v192 = vld [vmem:[%s162 + $0xe0] sm:%s155]
                %193 = vst [vmem:[%s163 + $0x70] sm:%s155] %v192
                %v194 = vld [vmem:[%s162 + $0xe8] sm:%s155]
                %195 = vst [vmem:[%s163 + $0x78] sm:%s155] %v194
              $region41: #{polyrigid_forward.1} parent=35 // loop_footer
                %s161 = sadd.s32 1, %s157
              $region42: #{polyrigid_forward.1} parent=35 // loop_footer_branch
                %156 = sbr.rel target = $region38
              $region43: #{polyrigid_forward.1} parent=35 // loop_exit
                _
            $region36: #{polyrigid_forward.1} parent=27 // pred_fallthru
              _
          $region28: #{polyrigid_forward.1} parent=23 // pred_fallthru
            _
          %240 = vnop
        $region24: #{polyrigid_forward.1} parent=19 // pred_fallthru
          _
        // Predicated region
        $region59: #{polyrigid_forward.1} parent=19 // pred_check
          %p241 = pneg %p77
        $region60: #{polyrigid_forward.1} parent=19 // pred_check_branch
          %243 = sbr.rel (%p241) target = $region62
        $region61: #{polyrigid_forward.1} parent=19 // pred_region
          %s244 = sand.u32 %s67, 1
          %s245 = sand.u32 %s67, 1
          %s246 = smul.addr %s245, 48
          %s247 = scalar_lea.vmem [#allocation5], %s246
          %s248 = smul.u32 2, %s10
          %s249 = smul.addr %s248, 8
          %s250 = scalar_lea.vmem %s2, %s249
          // Predicated region
          $region63: #{polyrigid_forward.1} parent=61 // pred_check
            _
          $region64: #{polyrigid_forward.1} parent=61 // pred_check_branch
            %252 = sbr.rel (0) target = $region66
          $region65: #{polyrigid_forward.1} parent=61 // pred_region
            // Predicated region
            $region67: #{polyrigid_forward.1} parent=65 // pred_check
              _
            $region68: #{polyrigid_forward.1} parent=65 // pred_check_branch
              %254 = sbr.rel (0) target = $region70
            $region69: #{polyrigid_forward.1} parent=65 // pred_region
              // Predicated region
              $region82: #{polyrigid_forward.1} parent=69 // pred_check
                _
              $region83: #{polyrigid_forward.1} parent=69 // pred_check_branch
                %280 = sbr.rel (0) target = $region85
              $region84: #{polyrigid_forward.1} parent=69 // pred_region
                loop: start=0, step=1, limit=1
                $region86: #{polyrigid_forward.1} parent=84 // loop_pre_header
                  _
                $region87: #{polyrigid_forward.1} parent=84 // loop_header
                  %s282 = sphi 0, %s286
                  %p283 = scmp.ge.s32.totalorder %s282, 1
                  %s287 = sphi %s250, %s250
                  %s288 = sphi %s247, %s247
                $region88: #{polyrigid_forward.1} parent=84 // loop_header_branch
                  %285 = sbr.rel (%p283) target = $region92
                $region89: #{polyrigid_forward.1} parent=84 // loop_body
                  %v289 = vld [vmem:[%s287] sm:$0xff]
                  %290 = vst [vmem:[%s288] sm:$0xff] %v289
                  %v291 = vld [vmem:[%s287 + $0x8] sm:$0xff]
                  %292 = vst [vmem:[%s288 + $0x8] sm:$0xff] %v291
                  %v293 = vld [vmem:[%s287 + $0x20] sm:$0xff]
                  %294 = vst [vmem:[%s288 + $0x10] sm:$0xff] %v293
                  %v295 = vld [vmem:[%s287 + $0x28] sm:$0xff]
                  %296 = vst [vmem:[%s288 + $0x18] sm:$0xff] %v295
                  %v297 = vld [vmem:[%s287 + $0x40] sm:$0xff]
                  %298 = vst [vmem:[%s288 + $0x20] sm:$0xff] %v297
                  %v299 = vld [vmem:[%s287 + $0x48] sm:$0xff]
                  %300 = vst [vmem:[%s288 + $0x28] sm:$0xff] %v299
                $region90: #{polyrigid_forward.1} parent=84 // loop_footer
                  %s286 = sadd.s32 1, %s282
                $region91: #{polyrigid_forward.1} parent=84 // loop_footer_branch
                  %281 = sbr.rel target = $region87
                $region92: #{polyrigid_forward.1} parent=84 // loop_exit
                  _
              $region85: #{polyrigid_forward.1} parent=69 // pred_fallthru
                _
              // Predicated region
              $region93: #{polyrigid_forward.1} parent=69 // pred_check
                _
              $region94: #{polyrigid_forward.1} parent=69 // pred_check_branch
                %302 = sbr.rel target = $region96
              $region95: #{polyrigid_forward.1} parent=69 // pred_region
                _
              $region96: #{polyrigid_forward.1} parent=69 // pred_fallthru
                _
            $region70: #{polyrigid_forward.1} parent=65 // pred_fallthru
              _
            // Predicated region
            $region71: #{polyrigid_forward.1} parent=65 // pred_check
              _
            $region72: #{polyrigid_forward.1} parent=65 // pred_check_branch
              %256 = sbr.rel target = $region74
            $region73: #{polyrigid_forward.1} parent=65 // pred_region
              %s258 = ssub.s32 256, 1
              loop: start=0, step=1, limit=1
              $region75: #{polyrigid_forward.1} parent=73 // loop_pre_header
                _
              $region76: #{polyrigid_forward.1} parent=73 // loop_header
                %s260 = sphi 0, %s264
                %p261 = scmp.ge.s32.totalorder %s260, 1
                %s265 = sphi %s250, %s250
                %s266 = sphi %s247, %s247
              $region77: #{polyrigid_forward.1} parent=73 // loop_header_branch
                %263 = sbr.rel (%p261) target = $region81
              $region78: #{polyrigid_forward.1} parent=73 // loop_body
                %v267 = vld [vmem:[%s265] sm:%s258]
                %268 = vst [vmem:[%s266] sm:%s258] %v267
                %v269 = vld [vmem:[%s265 + $0x8] sm:%s258]
                %270 = vst [vmem:[%s266 + $0x8] sm:%s258] %v269
                %v271 = vld [vmem:[%s265 + $0x20] sm:%s258]
                %272 = vst [vmem:[%s266 + $0x10] sm:%s258] %v271
                %v273 = vld [vmem:[%s265 + $0x28] sm:%s258]
                %274 = vst [vmem:[%s266 + $0x18] sm:%s258] %v273
                %v275 = vld [vmem:[%s265 + $0x40] sm:%s258]
                %276 = vst [vmem:[%s266 + $0x20] sm:%s258] %v275
                %v277 = vld [vmem:[%s265 + $0x48] sm:%s258]
                %278 = vst [vmem:[%s266 + $0x28] sm:%s258] %v277
              $region79: #{polyrigid_forward.1} parent=73 // loop_footer
                %s264 = sadd.s32 1, %s260
              $region80: #{polyrigid_forward.1} parent=73 // loop_footer_branch
                %259 = sbr.rel target = $region76
              $region81: #{polyrigid_forward.1} parent=73 // loop_exit
                _
            $region74: #{polyrigid_forward.1} parent=65 // pred_fallthru
              _
          $region66: #{polyrigid_forward.1} parent=61 // pred_fallthru
            _
          %303 = vnop
        $region62: #{polyrigid_forward.1} parent=19 // pred_fallthru
          _
      $region20: #{polyrigid_forward.1} parent=5 // pred_fallthru
        _
      %p304 = scmp.le.s32.totalorder 1, %s10
      %p305 = scmp.lt.s32.totalorder %s10, 3
      %p306 = pnand %p304, %p305
      %p307 = pneg %p306
      // Predicated region
      $region97: #{polyrigid_forward.1} parent=5 // pred_check
        _
      $region98: #{polyrigid_forward.1} parent=5 // pred_check_branch
        %309 = sbr.rel (%p306) target = $region100
      $region99: #{polyrigid_forward.1} parent=5 // pred_region
        %s310 = ssub.s32 %s10, 1
        // Predicated region
        $region101: #{polyrigid_forward.1} parent=99 // pred_check
          %p311 = pneg %p31
        $region102: #{polyrigid_forward.1} parent=99 // pred_check_branch
          %313 = sbr.rel (%p311) target = $region104
        $region103: #{polyrigid_forward.1} parent=99 // pred_region
          %315 = dma.done [#allocation3], 128
        $region104: #{polyrigid_forward.1} parent=99 // pred_fallthru
          _
        %s316 = sand.u32 %s44, 1
        %s317 = sand.u32 %s44, 1
        %s318 = smul.addr %s317, 128
        %s319 = scalar_lea.vmem [#allocation4], %s318
        // Predicated region
        $region105: #{polyrigid_forward.1} parent=99 // pred_check
          %p320 = pneg %p57
        $region106: #{polyrigid_forward.1} parent=99 // pred_check_branch
          %322 = sbr.rel (%p320) target = $region108
        $region107: #{polyrigid_forward.1} parent=99 // pred_region
          _
        $region108: #{polyrigid_forward.1} parent=99 // pred_fallthru
          _
        %s323 = sand.u32 %s70, 1
        %s324 = sand.u32 %s70, 1
        %s325 = smul.addr %s324, 48
        %s326 = scalar_lea.vmem [#allocation5], %s325
        // Predicated region
        $region109: #{polyrigid_forward.1} parent=99 // pred_check
          %p327 = pneg %p83
        $region110: #{polyrigid_forward.1} parent=99 // pred_check_branch
          %329 = sbr.rel (%p327) target = $region112
        $region111: #{polyrigid_forward.1} parent=99 // pred_region
          _
        $region112: #{polyrigid_forward.1} parent=99 // pred_fallthru
          _
        %330 = sfence
        %p331 = pneg %p31
        %p332 = pneg %p28
        %s333 = sand.u32 %s44, 1
        %s334 = sand.u32 %s44, 1
        %s335 = smul.addr %s334, 128
        %s336 = scalar_lea.vmem [#allocation4], %s335
        %p337 = pneg %p57
        %p338 = pneg %p54
        %s339 = sand.u32 %s70, 1
        %s340 = sand.u32 %s70, 1
        %s341 = smul.addr %s340, 48
        %s342 = scalar_lea.vmem [#allocation5], %s341
        %p343 = pneg %p83
        %p344 = pneg %p80
        %p345 = pneg %p109
        %p346 = pneg %p106
        %s347 = sand.u32 %s96, 1
        %s348 = sand.u32 %s96, 1
        %s349 = smul.addr %s348, 48
        %s350 = scalar_lea.vmem [#allocation6], %s349
        %s351 = smul.u32 2, %s15
        %s352 = smul.u32 2, %s15
        %s353 = smul.u32 2, %s15
        %s354 = sld [smem:[#allocation2]]
        %s355 = sld [smem:[#allocation2 + $0x1]]
        %s356 = sld [smem:[#allocation2 + $0x2]]
        %s357 = sld [smem:[#allocation2 + $0x3]]
        %s358 = sld [smem:[#allocation2 + $0x4]]
        %s359 = sld [smem:[#allocation2 + $0x5]]
        %s360 = sld [smem:[#allocation2 + $0x6]]
        %s361 = sld [smem:[#allocation2 + $0x7]]
        %s362 = sld [smem:[#allocation2 + $0x8]]
        %s363 = sld [smem:[#allocation2 + $0x9]]
        %s364 = sld [smem:[#allocation2 + $0xa]]
        %s365 = sld [smem:[#allocation2 + $0xb]]
        %s366 = sld [smem:[#allocation2 + $0x80]]
        %s367 = sld [smem:[#allocation2 + $0x81]]
        %s368 = sld [smem:[#allocation2 + $0x82]]
        %s369 = sld [smem:[#allocation2 + $0x83]]
        %s370 = sld [smem:[#allocation2 + $0x84]]
        %s371 = sld [smem:[#allocation2 + $0x85]]
        %s372 = sld [smem:[#allocation2 + $0x86]]
        %s373 = sld [smem:[#allocation2 + $0x87]]
        %s374 = sld [smem:[#allocation2 + $0x88]]
        %s375 = sld [smem:[#allocation2 + $0x89]]
        %s376 = sld [smem:[#allocation2 + $0x8a]]
        %s377 = sld [smem:[#allocation2 + $0x8b]]
        %s378 = sld [smem:[#allocation2 + $0x100]]
        %s379 = sld [smem:[#allocation2 + $0x101]]
        %s380 = sld [smem:[#allocation2 + $0x102]]
        %s381 = sld [smem:[#allocation2 + $0x103]]
        %s382 = sld [smem:[#allocation2 + $0x104]]
        %s383 = sld [smem:[#allocation2 + $0x105]]
        %s384 = sld [smem:[#allocation2 + $0x106]]
        %s385 = sld [smem:[#allocation2 + $0x107]]
        %s386 = sld [smem:[#allocation2 + $0x108]]
        %s387 = sld [smem:[#allocation2 + $0x109]]
        %s388 = sld [smem:[#allocation2 + $0x10a]]
        %s389 = sld [smem:[#allocation2 + $0x10b]]
        %s390 = sld [smem:[#allocation2 + $0x180]]
        %s391 = sld [smem:[#allocation2 + $0x181]]
        %s392 = sld [smem:[#allocation2 + $0x182]]
        %s393 = sld [smem:[#allocation2 + $0x183]]
        %s394 = sld [smem:[#allocation2 + $0x184]]
        %s395 = sld [smem:[#allocation2 + $0x185]]
        %s396 = sld [smem:[#allocation2 + $0x186]]
        %s397 = sld [smem:[#allocation2 + $0x187]]
        %s398 = sld [smem:[#allocation2 + $0x188]]
        %s399 = sld [smem:[#allocation2 + $0x189]]
        %s400 = sld [smem:[#allocation2 + $0x18a]]
        %s401 = sld [smem:[#allocation2 + $0x18b]]
        %s402 = sld [smem:[#allocation2 + $0x200]]
        %s403 = sld [smem:[#allocation2 + $0x201]]
        %s404 = sld [smem:[#allocation2 + $0x202]]
        %s405 = sld [smem:[#allocation2 + $0x203]]
        %s406 = sld [smem:[#allocation2 + $0x204]]
        %s407 = sld [smem:[#allocation2 + $0x205]]
        %s408 = sld [smem:[#allocation2 + $0x206]]
        %s409 = sld [smem:[#allocation2 + $0x207]]
        %s410 = sld [smem:[#allocation2 + $0x208]]
        %s411 = sld [smem:[#allocation2 + $0x209]]
        %s412 = sld [smem:[#allocation2 + $0x20a]]
        %s413 = sld [smem:[#allocation2 + $0x20b]]
        %s414 = sld [smem:[#allocation2 + $0x280]]
        %s415 = sld [smem:[#allocation2 + $0x281]]
        %s416 = sld [smem:[#allocation2 + $0x282]]
        %s417 = sld [smem:[#allocation2 + $0x283]]
        %s418 = sld [smem:[#allocation2 + $0x284]]
        %s419 = sld [smem:[#allocation2 + $0x285]]
        %s420 = sld [smem:[#allocation2 + $0x286]]
        %s421 = sld [smem:[#allocation2 + $0x287]]
        %s422 = sld [smem:[#allocation2 + $0x288]]
        %s423 = sld [smem:[#allocation2 + $0x289]]
        %s424 = sld [smem:[#allocation2 + $0x28a]]
        %s425 = sld [smem:[#allocation2 + $0x28b]]
        %s426 = sld [smem:[#allocation2 + $0x300]]
        %s427 = sld [smem:[#allocation2 + $0x301]]
        %s428 = sld [smem:[#allocation2 + $0x302]]
        %s429 = sld [smem:[#allocation2 + $0x303]]
        %s430 = sld [smem:[#allocation2 + $0x304]]
        %s431 = sld [smem:[#allocation2 + $0x305]]
        %s432 = sld [smem:[#allocation2 + $0x306]]
        %s433 = sld [smem:[#allocation2 + $0x307]]
        %s434 = sld [smem:[#allocation2 + $0x308]]
        %s435 = sld [smem:[#allocation2 + $0x309]]
        %s436 = sld [smem:[#allocation2 + $0x30a]]
        %s437 = sld [smem:[#allocation2 + $0x30b]]
        %s438 = sld [smem:[#allocation2 + $0x380]]
        %s439 = sld [smem:[#allocation2 + $0x381]]
        %s440 = sld [smem:[#allocation2 + $0x382]]
        %s441 = sld [smem:[#allocation2 + $0x383]]
        %s442 = sld [smem:[#allocation2 + $0x384]]
        %s443 = sld [smem:[#allocation2 + $0x385]]
        %s444 = sld [smem:[#allocation2 + $0x386]]
        %s445 = sld [smem:[#allocation2 + $0x387]]
        %s446 = sld [smem:[#allocation2 + $0x388]]
        %s447 = sld [smem:[#allocation2 + $0x389]]
        %s448 = sld [smem:[#allocation2 + $0x38a]]
        %s449 = sld [smem:[#allocation2 + $0x38b]]
        %v450 = vld [vmem:[%s319] sm:$0xff]
        %v451 = vstv %s354
        %v452 = vmul.f32 %v451, %v450
        %v453 = vstv %s355
        %v454 = vmul.f32 %v453, %v450
        %v455 = vstv %s356
        %v456 = vmul.f32 %v455, %v450
        %v457 = vstv %s357
        %v458 = vmul.f32 %v457, %v450
        %v459 = vstv %s358
        %v460 = vmul.f32 %v459, %v450
        %v461 = vstv %s359
        %v462 = vmul.f32 %v461, %v450
        %v463 = vstv %s360
        %v464 = vmul.f32 %v463, %v450
        %v465 = vstv %s361
        %v466 = vmul.f32 %v465, %v450
        %v467 = vstv %s362
        %v468 = vmul.f32 %v467, %v450
        %v469 = vstv %s363
        %v470 = vmul.f32 %v469, %v450
        %v471 = vstv %s364
        %v472 = vmul.f32 %v471, %v450
        %v473 = vstv %s365
        %v474 = vmul.f32 %v473, %v450
        %s475 = sadd.s32 0, 16
        %s476 = scalar_lea.vmem %s319, %s475 [#allocation4]
        %v477 = vld [vmem:[%s476] sm:$0xff]
        %v478 = vstv %s366
        %v479 = vmul.f32 %v478, %v477
        %v480 = vadd.f32 %v452, %v479
        %v481 = vstv %s367
        %v482 = vmul.f32 %v481, %v477
        %v483 = vadd.f32 %v454, %v482
        %v484 = vstv %s368
        %v485 = vmul.f32 %v484, %v477
        %v486 = vadd.f32 %v456, %v485
        %v487 = vstv %s369
        %v488 = vmul.f32 %v487, %v477
        %v489 = vadd.f32 %v458, %v488
        %v490 = vstv %s370
        %v491 = vmul.f32 %v490, %v477
        %v492 = vadd.f32 %v460, %v491
        %v493 = vstv %s371
        %v494 = vmul.f32 %v493, %v477
        %v495 = vadd.f32 %v462, %v494
        %v496 = vstv %s372
        %v497 = vmul.f32 %v496, %v477
        %v498 = vadd.f32 %v464, %v497
        %v499 = vstv %s373
        %v500 = vmul.f32 %v499, %v477
        %v501 = vadd.f32 %v466, %v500
        %v502 = vstv %s374
        %v503 = vmul.f32 %v502, %v477
        %v504 = vadd.f32 %v468, %v503
        %v505 = vstv %s375
        %v506 = vmul.f32 %v505, %v477
        %v507 = vadd.f32 %v470, %v506
        %v508 = vstv %s376
        %v509 = vmul.f32 %v508, %v477
        %v510 = vadd.f32 %v472, %v509
        %v511 = vstv %s377
        %v512 = vmul.f32 %v511, %v477
        %v513 = vadd.f32 %v474, %v512
        %s514 = sadd.s32 0, 32
        %s515 = scalar_lea.vmem %s319, %s514 [#allocation4]
        %v516 = vld [vmem:[%s515] sm:$0xff]
        %v517 = vstv %s378
        %v518 = vmul.f32 %v517, %v516
        %v519 = vadd.f32 %v480, %v518
        %v520 = vstv %s379
        %v521 = vmul.f32 %v520, %v516
        %v522 = vadd.f32 %v483, %v521
        %v523 = vstv %s380
        %v524 = vmul.f32 %v523, %v516
        %v525 = vadd.f32 %v486, %v524
        %v526 = vstv %s381
        %v527 = vmul.f32 %v526, %v516
        %v528 = vadd.f32 %v489, %v527
        %v529 = vstv %s382
        %v530 = vmul.f32 %v529, %v516
        %v531 = vadd.f32 %v492, %v530
        %v532 = vstv %s383
        %v533 = vmul.f32 %v532, %v516
        %v534 = vadd.f32 %v495, %v533
        %v535 = vstv %s384
        %v536 = vmul.f32 %v535, %v516
        %v537 = vadd.f32 %v498, %v536
        %v538 = vstv %s385
        %v539 = vmul.f32 %v538, %v516
        %v540 = vadd.f32 %v501, %v539
        %v541 = vstv %s386
        %v542 = vmul.f32 %v541, %v516
        %v543 = vadd.f32 %v504, %v542
        %v544 = vstv %s387
        %v545 = vmul.f32 %v544, %v516
        %v546 = vadd.f32 %v507, %v545
        %v547 = vstv %s388
        %v548 = vmul.f32 %v547, %v516
        %v549 = vadd.f32 %v510, %v548
        %v550 = vstv %s389
        %v551 = vmul.f32 %v550, %v516
        %v552 = vadd.f32 %v513, %v551
        %s553 = sadd.s32 0, 48
        %s554 = scalar_lea.vmem %s319, %s553 [#allocation4]
        %v555 = vld [vmem:[%s554] sm:$0xff]
        %v556 = vstv %s390
        %v557 = vmul.f32 %v556, %v555
        %v558 = vadd.f32 %v519, %v557
        %v559 = vstv %s391
        %v560 = vmul.f32 %v559, %v555
        %v561 = vadd.f32 %v522, %v560
        %v562 = vstv %s392
        %v563 = vmul.f32 %v562, %v555
        %v564 = vadd.f32 %v525, %v563
        %v565 = vstv %s393
        %v566 = vmul.f32 %v565, %v555
        %v567 = vadd.f32 %v528, %v566
        %v568 = vstv %s394
        %v569 = vmul.f32 %v568, %v555
        %v570 = vadd.f32 %v531, %v569
        %v571 = vstv %s395
        %v572 = vmul.f32 %v571, %v555
        %v573 = vadd.f32 %v534, %v572
        %v574 = vstv %s396
        %v575 = vmul.f32 %v574, %v555
        %v576 = vadd.f32 %v537, %v575
        %v577 = vstv %s397
        %v578 = vmul.f32 %v577, %v555
        %v579 = vadd.f32 %v540, %v578
        %v580 = vstv %s398
        %v581 = vmul.f32 %v580, %v555
        %v582 = vadd.f32 %v543, %v581
        %v583 = vstv %s399
        %v584 = vmul.f32 %v583, %v555
        %v585 = vadd.f32 %v546, %v584
        %v586 = vstv %s400
        %v587 = vmul.f32 %v586, %v555
        %v588 = vadd.f32 %v549, %v587
        %v589 = vstv %s401
        %v590 = vmul.f32 %v589, %v555
        %v591 = vadd.f32 %v552, %v590
        %s592 = sadd.s32 0, 64
        %s593 = scalar_lea.vmem %s319, %s592 [#allocation4]
        %v594 = vld [vmem:[%s593] sm:$0xff]
        %v595 = vstv %s402
        %v596 = vmul.f32 %v595, %v594
        %v597 = vadd.f32 %v558, %v596
        %v598 = vstv %s403
        %v599 = vmul.f32 %v598, %v594
        %v600 = vadd.f32 %v561, %v599
        %v601 = vstv %s404
        %v602 = vmul.f32 %v601, %v594
        %v603 = vadd.f32 %v564, %v602
        %v604 = vstv %s405
        %v605 = vmul.f32 %v604, %v594
        %v606 = vadd.f32 %v567, %v605
        %v607 = vstv %s406
        %v608 = vmul.f32 %v607, %v594
        %v609 = vadd.f32 %v570, %v608
        %v610 = vstv %s407
        %v611 = vmul.f32 %v610, %v594
        %v612 = vadd.f32 %v573, %v611
        %v613 = vstv %s408
        %v614 = vmul.f32 %v613, %v594
        %v615 = vadd.f32 %v576, %v614
        %v616 = vstv %s409
        %v617 = vmul.f32 %v616, %v594
        %v618 = vadd.f32 %v579, %v617
        %v619 = vstv %s410
        %v620 = vmul.f32 %v619, %v594
        %v621 = vadd.f32 %v582, %v620
        %v622 = vstv %s411
        %v623 = vmul.f32 %v622, %v594
        %v624 = vadd.f32 %v585, %v623
        %v625 = vstv %s412
        %v626 = vmul.f32 %v625, %v594
        %v627 = vadd.f32 %v588, %v626
        %v628 = vstv %s413
        %v629 = vmul.f32 %v628, %v594
        %v630 = vadd.f32 %v591, %v629
        %s631 = sadd.s32 0, 80
        %s632 = scalar_lea.vmem %s319, %s631 [#allocation4]
        %v633 = vld [vmem:[%s632] sm:$0xff]
        %v634 = vstv %s414
        %v635 = vmul.f32 %v634, %v633
        %v636 = vadd.f32 %v597, %v635
        %v637 = vstv %s415
        %v638 = vmul.f32 %v637, %v633
        %v639 = vadd.f32 %v600, %v638
        %v640 = vstv %s416
        %v641 = vmul.f32 %v640, %v633
        %v642 = vadd.f32 %v603, %v641
        %v643 = vstv %s417
        %v644 = vmul.f32 %v643, %v633
        %v645 = vadd.f32 %v606, %v644
        %v646 = vstv %s418
        %v647 = vmul.f32 %v646, %v633
        %v648 = vadd.f32 %v609, %v647
        %v649 = vstv %s419
        %v650 = vmul.f32 %v649, %v633
        %v651 = vadd.f32 %v612, %v650
        %v652 = vstv %s420
        %v653 = vmul.f32 %v652, %v633
        %v654 = vadd.f32 %v615, %v653
        %v655 = vstv %s421
        %v656 = vmul.f32 %v655, %v633
        %v657 = vadd.f32 %v618, %v656
        %v658 = vstv %s422
        %v659 = vmul.f32 %v658, %v633
        %v660 = vadd.f32 %v621, %v659
        %v661 = vstv %s423
        %v662 = vmul.f32 %v661, %v633
        %v663 = vadd.f32 %v624, %v662
        %v664 = vstv %s424
        %v665 = vmul.f32 %v664, %v633
        %v666 = vadd.f32 %v627, %v665
        %v667 = vstv %s425
        %v668 = vmul.f32 %v667, %v633
        %v669 = vadd.f32 %v630, %v668
        %s670 = sadd.s32 0, 96
        %s671 = scalar_lea.vmem %s319, %s670 [#allocation4]
        %v672 = vld [vmem:[%s671] sm:$0xff]
        %v673 = vstv %s426
        %v674 = vmul.f32 %v673, %v672
        %v675 = vadd.f32 %v636, %v674
        %v676 = vstv %s427
        %v677 = vmul.f32 %v676, %v672
        %v678 = vadd.f32 %v639, %v677
        %v679 = vstv %s428
        %v680 = vmul.f32 %v679, %v672
        %v681 = vadd.f32 %v642, %v680
        %v682 = vstv %s429
        %v683 = vmul.f32 %v682, %v672
        %v684 = vadd.f32 %v645, %v683
        %v685 = vstv %s430
        %v686 = vmul.f32 %v685, %v672
        %v687 = vadd.f32 %v648, %v686
        %v688 = vstv %s431
        %v689 = vmul.f32 %v688, %v672
        %v690 = vadd.f32 %v651, %v689
        %v691 = vstv %s432
        %v692 = vmul.f32 %v691, %v672
        %v693 = vadd.f32 %v654, %v692
        %v694 = vstv %s433
        %v695 = vmul.f32 %v694, %v672
        %v696 = vadd.f32 %v657, %v695
        %v697 = vstv %s434
        %v698 = vmul.f32 %v697, %v672
        %v699 = vadd.f32 %v660, %v698
        %v700 = vstv %s435
        %v701 = vmul.f32 %v700, %v672
        %v702 = vadd.f32 %v663, %v701
        %v703 = vstv %s436
        %v704 = vmul.f32 %v703, %v672
        %v705 = vadd.f32 %v666, %v704
        %v706 = vstv %s437
        %v707 = vmul.f32 %v706, %v672
        %v708 = vadd.f32 %v669, %v707
        %s709 = sadd.s32 0, 112
        %s710 = scalar_lea.vmem %s319, %s709 [#allocation4]
        %v711 = vld [vmem:[%s710] sm:$0xff]
        %v712 = vstv %s438
        %v713 = vmul.f32 %v712, %v711
        %v714 = vadd.f32 %v675, %v713
        %v715 = vstv %s439
        %v716 = vmul.f32 %v715, %v711
        %v717 = vadd.f32 %v678, %v716
        %v718 = vstv %s440
        %v719 = vmul.f32 %v718, %v711
        %v720 = vadd.f32 %v681, %v719
        %v721 = vstv %s441
        %v722 = vmul.f32 %v721, %v711
        %v723 = vadd.f32 %v684, %v722
        %v724 = vstv %s442
        %v725 = vmul.f32 %v724, %v711
        %v726 = vadd.f32 %v687, %v725
        %v727 = vstv %s443
        %v728 = vmul.f32 %v727, %v711
        %v729 = vadd.f32 %v690, %v728
        %v730 = vstv %s444
        %v731 = vmul.f32 %v730, %v711
        %v732 = vadd.f32 %v693, %v731
        %v733 = vstv %s445
        %v734 = vmul.f32 %v733, %v711
        %v735 = vadd.f32 %v696, %v734
        %v736 = vstv %s446
        %v737 = vmul.f32 %v736, %v711
        %v738 = vadd.f32 %v699, %v737
        %v739 = vstv %s447
        %v740 = vmul.f32 %v739, %v711
        %v741 = vadd.f32 %v702, %v740
        %v742 = vstv %s448
        %v743 = vmul.f32 %v742, %v711
        %v744 = vadd.f32 %v705, %v743
        %v745 = vstv %s449
        %v746 = vmul.f32 %v745, %v711
        %v747 = vadd.f32 %v708, %v746
        %v748 = vmul.f32 %v714, %v714
        %v749 = vmul.f32 %v717, %v726
        %v750 = vadd.f32 %v748, %v749
        %v751 = vmul.f32 %v720, %v738
        %v752 = vadd.f32 %v750, %v751
        %v753 = vmul.f32 %v714, %v717
        %v754 = vmul.f32 %v717, %v729
        %v755 = vadd.f32 %v753, %v754
        %v756 = vmul.f32 %v720, %v741
        %v757 = vadd.f32 %v755, %v756
        %v758 = vmul.f32 %v714, %v720
        %v759 = vmul.f32 %v717, %v732
        %v760 = vadd.f32 %v758, %v759
        %v761 = vmul.f32 %v720, %v744
        %v762 = vadd.f32 %v760, %v761
        %v763 = vmul.f32 %v714, %v723
        %v764 = vmul.f32 %v717, %v735
        %v765 = vadd.f32 %v763, %v764
        %v766 = vmul.f32 %v720, %v747
        %v767 = vadd.f32 %v765, %v766
        %v768 = vmul.f32 %v726, %v714
        %v769 = vmul.f32 %v729, %v726
        %v770 = vadd.f32 %v768, %v769
        %v771 = vmul.f32 %v732, %v738
        %v772 = vadd.f32 %v770, %v771
        %v773 = vmul.f32 %v729, %v729
        %v774 = vadd.f32 %v749, %v773
        %v775 = vmul.f32 %v732, %v741
        %v776 = vadd.f32 %v774, %v775
        %v777 = vmul.f32 %v726, %v720
        %v778 = vmul.f32 %v729, %v732
        %v779 = vadd.f32 %v777, %v778
        %v780 = vmul.f32 %v732, %v744
        %v781 = vadd.f32 %v779, %v780
        %v782 = vmul.f32 %v726, %v723
        %v783 = vmul.f32 %v729, %v735
        %v784 = vadd.f32 %v782, %v783
        %v785 = vmul.f32 %v732, %v747
        %v786 = vadd.f32 %v784, %v785
        %v787 = vmul.f32 %v738, %v714
        %v788 = vmul.f32 %v741, %v726
        %v789 = vadd.f32 %v787, %v788
        %v790 = vmul.f32 %v744, %v738
        %v791 = vadd.f32 %v789, %v790
        %v792 = vmul.f32 %v738, %v717
        %v793 = vmul.f32 %v741, %v729
        %v794 = vadd.f32 %v792, %v793
        %v795 = vmul.f32 %v744, %v741
        %v796 = vadd.f32 %v794, %v795
        %v797 = vadd.f32 %v751, %v775
        %v798 = vmul.f32 %v744, %v744
        %v799 = vadd.f32 %v797, %v798
        %v800 = vmul.f32 %v738, %v723
        %v801 = vmul.f32 %v741, %v735
        %v802 = vadd.f32 %v800, %v801
        %v803 = vmul.f32 %v744, %v747
        %v804 = vadd.f32 %v802, %v803
        %v805 = vmul.f32 %v752, %v714
        %v806 = vmul.f32 %v757, %v726
        %v807 = vadd.f32 %v805, %v806
        %v808 = vmul.f32 %v762, %v738
        %v809 = vadd.f32 %v807, %v808
        %v810 = vmul.f32 %v752, %v717
        %v811 = vmul.f32 %v757, %v729
        %v812 = vadd.f32 %v810, %v811
        %v813 = vmul.f32 %v762, %v741
        %v814 = vadd.f32 %v812, %v813
        %v815 = vmul.f32 %v752, %v720
        %v816 = vmul.f32 %v757, %v732
        %v817 = vadd.f32 %v815, %v816
        %v818 = vmul.f32 %v762, %v744
        %v819 = vadd.f32 %v817, %v818
        %v820 = vmul.f32 %v752, %v723
        %v821 = vmul.f32 %v757, %v735
        %v822 = vadd.f32 %v820, %v821
        %v823 = vmul.f32 %v762, %v747
        %v824 = vadd.f32 %v822, %v823
        %v825 = vmul.f32 %v772, %v714
        %v826 = vmul.f32 %v776, %v726
        %v827 = vadd.f32 %v825, %v826
        %v828 = vmul.f32 %v781, %v738
        %v829 = vadd.f32 %v827, %v828
        %v830 = vmul.f32 %v772, %v717
        %v831 = vmul.f32 %v776, %v729
        %v832 = vadd.f32 %v830, %v831
        %v833 = vmul.f32 %v781, %v741
        %v834 = vadd.f32 %v832, %v833
        %v835 = vmul.f32 %v772, %v720
        %v836 = vmul.f32 %v776, %v732
        %v837 = vadd.f32 %v835, %v836
        %v838 = vmul.f32 %v781, %v744
        %v839 = vadd.f32 %v837, %v838
        %v840 = vmul.f32 %v772, %v723
        %v841 = vmul.f32 %v776, %v735
        %v842 = vadd.f32 %v840, %v841
        %v843 = vmul.f32 %v781, %v747
        %v844 = vadd.f32 %v842, %v843
        %v845 = vmul.f32 %v791, %v714
        %v846 = vmul.f32 %v796, %v726
        %v847 = vadd.f32 %v845, %v846
        %v848 = vmul.f32 %v799, %v738
        %v849 = vadd.f32 %v847, %v848
        %v850 = vmul.f32 %v791, %v717
        %v851 = vmul.f32 %v796, %v729
        %v852 = vadd.f32 %v850, %v851
        %v853 = vmul.f32 %v799, %v741
        %v854 = vadd.f32 %v852, %v853
        %v855 = vmul.f32 %v791, %v720
        %v856 = vmul.f32 %v796, %v732
        %v857 = vadd.f32 %v855, %v856
        %v858 = vmul.f32 %v799, %v744
        %v859 = vadd.f32 %v857, %v858
        %v860 = vmul.f32 %v791, %v723
        %v861 = vmul.f32 %v796, %v735
        %v862 = vadd.f32 %v860, %v861
        %v863 = vmul.f32 %v799, %v747
        %v864 = vadd.f32 %v862, %v863
        %v865 = vmul.f32 %v752, 0.5
        %v866 = vadd.f32 %v714, %v865
        %v867 = vmul.f32 %v809, 0.16666667
        %v868 = vadd.f32 %v866, %v867
        %v869 = vmul.f32 %v714, 0.008333334
        %v870 = vmul.f32 %v752, 0.0013888889
        %v871 = vadd.f32 %v869, %v870
        %v872 = vmul.f32 %v809, 0.0001984127
        %v873 = vadd.f32 %v871, %v872
        %v874 = vadd.f32 %v868, 1.0
        %v875 = vadd.f32 %v873, 0.041666668
        %v876 = vmul.f32 %v757, 0.5
        %v877 = vadd.f32 %v717, %v876
        %v878 = vmul.f32 %v814, 0.16666667
        %v879 = vadd.f32 %v877, %v878
        %v880 = vmul.f32 %v717, 0.008333334
        %v881 = vmul.f32 %v757, 0.0013888889
        %v882 = vadd.f32 %v880, %v881
        %v883 = vmul.f32 %v814, 0.0001984127
        %v884 = vadd.f32 %v882, %v883
        %v885 = vmul.f32 %v762, 0.5
        %v886 = vadd.f32 %v720, %v885
        %v887 = vmul.f32 %v819, 0.16666667
        %v888 = vadd.f32 %v886, %v887
        %v889 = vmul.f32 %v720, 0.008333334
        %v890 = vmul.f32 %v762, 0.0013888889
        %v891 = vadd.f32 %v889, %v890
        %v892 = vmul.f32 %v819, 0.0001984127
        %v893 = vadd.f32 %v891, %v892
        %v894 = vmul.f32 %v767, 0.5
        %v895 = vadd.f32 %v723, %v894
        %v896 = vmul.f32 %v824, 0.16666667
        %v897 = vadd.f32 %v895, %v896
        %v898 = vmul.f32 %v723, 0.008333334
        %v899 = vmul.f32 %v767, 0.0013888889
        %v900 = vadd.f32 %v898, %v899
        %v901 = vmul.f32 %v824, 0.0001984127
        %v902 = vadd.f32 %v900, %v901
        %v903 = vmul.f32 %v772, 0.5
        %v904 = vadd.f32 %v726, %v903
        %v905 = vmul.f32 %v829, 0.16666667
        %v906 = vadd.f32 %v904, %v905
        %v907 = vmul.f32 %v726, 0.008333334
        %v908 = vmul.f32 %v772, 0.0013888889
        %v909 = vadd.f32 %v907, %v908
        %v910 = vmul.f32 %v829, 0.0001984127
        %v911 = vadd.f32 %v909, %v910
        %v912 = vmul.f32 %v776, 0.5
        %v913 = vadd.f32 %v729, %v912
        %v914 = vmul.f32 %v834, 0.16666667
        %v915 = vadd.f32 %v913, %v914
        %v916 = vmul.f32 %v729, 0.008333334
        %v917 = vmul.f32 %v776, 0.0013888889
        %v918 = vadd.f32 %v916, %v917
        %v919 = vmul.f32 %v834, 0.0001984127
        %v920 = vadd.f32 %v918, %v919
        %v921 = vadd.f32 %v915, 1.0
        %v922 = vadd.f32 %v920, 0.041666668
        %v923 = vmul.f32 %v781, 0.5
        %v924 = vadd.f32 %v732, %v923
        %v925 = vmul.f32 %v839, 0.16666667
        %v926 = vadd.f32 %v924, %v925
        %v927 = vmul.f32 %v732, 0.008333334
        %v928 = vmul.f32 %v781, 0.0013888889
        %v929 = vadd.f32 %v927, %v928
        %v930 = vmul.f32 %v839, 0.0001984127
        %v931 = vadd.f32 %v929, %v930
        %v932 = vmul.f32 %v786, 0.5
        %v933 = vadd.f32 %v735, %v932
        %v934 = vmul.f32 %v844, 0.16666667
        %v935 = vadd.f32 %v933, %v934
        %v936 = vmul.f32 %v735, 0.008333334
        %v937 = vmul.f32 %v786, 0.0013888889
        %v938 = vadd.f32 %v936, %v937
        %v939 = vmul.f32 %v844, 0.0001984127
        %v940 = vadd.f32 %v938, %v939
        %v941 = vmul.f32 %v791, 0.5
        %v942 = vadd.f32 %v738, %v941
        %v943 = vmul.f32 %v849, 0.16666667
        %v944 = vadd.f32 %v942, %v943
        %v945 = vmul.f32 %v738, 0.008333334
        %v946 = vmul.f32 %v791, 0.0013888889
        %v947 = vadd.f32 %v945, %v946
        %v948 = vmul.f32 %v849, 0.0001984127
        %v949 = vadd.f32 %v947, %v948
        %v950 = vmul.f32 %v796, 0.5
        %v951 = vadd.f32 %v741, %v950
        %v952 = vmul.f32 %v854, 0.16666667
        %v953 = vadd.f32 %v951, %v952
        %v954 = vmul.f32 %v741, 0.008333334
        %v955 = vmul.f32 %v796, 0.0013888889
        %v956 = vadd.f32 %v954, %v955
        %v957 = vmul.f32 %v854, 0.0001984127
        %v958 = vadd.f32 %v956, %v957
        %v959 = vmul.f32 %v799, 0.5
        %v960 = vadd.f32 %v744, %v959
        %v961 = vmul.f32 %v859, 0.16666667
        %v962 = vadd.f32 %v960, %v961
        %v963 = vmul.f32 %v744, 0.008333334
        %v964 = vmul.f32 %v799, 0.0013888889
        %v965 = vadd.f32 %v963, %v964
        %v966 = vmul.f32 %v859, 0.0001984127
        %v967 = vadd.f32 %v965, %v966
        %v968 = vadd.f32 %v962, 1.0
        %v969 = vadd.f32 %v967, 0.041666668
        %v970 = vmul.f32 %v804, 0.5
        %v971 = vadd.f32 %v747, %v970
        %v972 = vmul.f32 %v864, 0.16666667
        %v973 = vadd.f32 %v971, %v972
        %v974 = vmul.f32 %v747, 0.008333334
        %v975 = vmul.f32 %v804, 0.0013888889
        %v976 = vadd.f32 %v974, %v975
        %v977 = vmul.f32 %v864, 0.0001984127
        %v978 = vadd.f32 %v976, %v977
        %v979 = vmul.f32 %v752, %v752
        %v980 = vmul.f32 %v757, %v772
        %v981 = vadd.f32 %v979, %v980
        %v982 = vmul.f32 %v762, %v791
        %v983 = vadd.f32 %v981, %v982
        %v984 = vmul.f32 %v752, %v757
        %v985 = vmul.f32 %v757, %v776
        %v986 = vadd.f32 %v984, %v985
        %v987 = vmul.f32 %v762, %v796
        %v988 = vadd.f32 %v986, %v987
        %v989 = vmul.f32 %v752, %v762
        %v990 = vmul.f32 %v757, %v781
        %v991 = vadd.f32 %v989, %v990
        %v992 = vmul.f32 %v762, %v799
        %v993 = vadd.f32 %v991, %v992
        %v994 = vmul.f32 %v752, %v767
        %v995 = vmul.f32 %v757, %v786
        %v996 = vadd.f32 %v994, %v995
        %v997 = vmul.f32 %v762, %v804
        %v998 = vadd.f32 %v996, %v997
        %v999 = vmul.f32 %v772, %v752
        %v1000 = vmul.f32 %v776, %v772
        %v1001 = vadd.f32 %v999, %v1000
        %v1002 = vmul.f32 %v781, %v791
        %v1003 = vadd.f32 %v1001, %v1002
        %v1004 = vmul.f32 %v776, %v776
        %v1005 = vadd.f32 %v980, %v1004
        %v1006 = vmul.f32 %v781, %v796
        %v1007 = vadd.f32 %v1005, %v1006
        %v1008 = vmul.f32 %v772, %v762
        %v1009 = vmul.f32 %v776, %v781
        %v1010 = vadd.f32 %v1008, %v1009
        %v1011 = vmul.f32 %v781, %v799
        %v1012 = vadd.f32 %v1010, %v1011
        %v1013 = vmul.f32 %v772, %v767
        %v1014 = vmul.f32 %v776, %v786
        %v1015 = vadd.f32 %v1013, %v1014
        %v1016 = vmul.f32 %v781, %v804
        %v1017 = vadd.f32 %v1015, %v1016
        %v1018 = vmul.f32 %v791, %v752
        %v1019 = vmul.f32 %v796, %v772
        %v1020 = vadd.f32 %v1018, %v1019
        %v1021 = vmul.f32 %v799, %v791
        %v1022 = vadd.f32 %v1020, %v1021
        %v1023 = vmul.f32 %v791, %v757
        %v1024 = vmul.f32 %v796, %v776
        %v1025 = vadd.f32 %v1023, %v1024
        %v1026 = vmul.f32 %v799, %v796
        %v1027 = vadd.f32 %v1025, %v1026
        %v1028 = vadd.f32 %v982, %v1006
        %v1029 = vmul.f32 %v799, %v799
        %v1030 = vadd.f32 %v1028, %v1029
        %v1031 = vmul.f32 %v791, %v767
        %v1032 = vmul.f32 %v796, %v786
        %v1033 = vadd.f32 %v1031, %v1032
        %v1034 = vmul.f32 %v799, %v804
        %v1035 = vadd.f32 %v1033, %v1034
        %v1036 = vmul.f32 %v983, 2.4801588e-05
        %v1037 = vadd.f32 %v875, %v1036
        %v1038 = vmul.f32 %v988, 2.4801588e-05
        %v1039 = vadd.f32 %v884, %v1038
        %v1040 = vmul.f32 %v993, 2.4801588e-05
        %v1041 = vadd.f32 %v893, %v1040
        %v1042 = vmul.f32 %v998, 2.4801588e-05
        %v1043 = vadd.f32 %v902, %v1042
        %v1044 = vmul.f32 %v1003, 2.4801588e-05
        %v1045 = vadd.f32 %v911, %v1044
        %v1046 = vmul.f32 %v1007, 2.4801588e-05
        %v1047 = vadd.f32 %v922, %v1046
        %v1048 = vmul.f32 %v1012, 2.4801588e-05
        %v1049 = vadd.f32 %v931, %v1048
        %v1050 = vmul.f32 %v1017, 2.4801588e-05
        %v1051 = vadd.f32 %v940, %v1050
        %v1052 = vmul.f32 %v1022, 2.4801588e-05
        %v1053 = vadd.f32 %v949, %v1052
        %v1054 = vmul.f32 %v1027, 2.4801588e-05
        %v1055 = vadd.f32 %v958, %v1054
        %v1056 = vmul.f32 %v1030, 2.4801588e-05
        %v1057 = vadd.f32 %v969, %v1056
        %v1058 = vmul.f32 %v1035, 2.4801588e-05
        %v1059 = vadd.f32 %v978, %v1058
        %v1060 = vmul.f32 %v983, %v1037
        %v1061 = vmul.f32 %v988, %v1045
        %v1062 = vadd.f32 %v1060, %v1061
        %v1063 = vmul.f32 %v993, %v1053
        %v1064 = vadd.f32 %v1062, %v1063
        %v1065 = vmul.f32 %v983, %v1039
        %v1066 = vmul.f32 %v988, %v1047
        %v1067 = vadd.f32 %v1065, %v1066
        %v1068 = vmul.f32 %v993, %v1055
        %v1069 = vadd.f32 %v1067, %v1068
        %v1070 = vmul.f32 %v983, %v1041
        %v1071 = vmul.f32 %v988, %v1049
        %v1072 = vadd.f32 %v1070, %v1071
        %v1073 = vmul.f32 %v993, %v1057
        %v1074 = vadd.f32 %v1072, %v1073
        %v1075 = vmul.f32 %v983, %v1043
        %v1076 = vmul.f32 %v988, %v1051
        %v1077 = vadd.f32 %v1075, %v1076
        %v1078 = vmul.f32 %v993, %v1059
        %v1079 = vadd.f32 %v1077, %v1078
        %v1080 = vmul.f32 %v998, 0.041666668
        %v1081 = vadd.f32 %v1079, %v1080
        %v1082 = vmul.f32 %v1003, %v1037
        %v1083 = vmul.f32 %v1007, %v1045
        %v1084 = vadd.f32 %v1082, %v1083
        %v1085 = vmul.f32 %v1012, %v1053
        %v1086 = vadd.f32 %v1084, %v1085
        %v1087 = vmul.f32 %v1003, %v1039
        %v1088 = vmul.f32 %v1007, %v1047
        %v1089 = vadd.f32 %v1087, %v1088
        %v1090 = vmul.f32 %v1012, %v1055
        %v1091 = vadd.f32 %v1089, %v1090
        %v1092 = vmul.f32 %v1003, %v1041
        %v1093 = vmul.f32 %v1007, %v1049
        %v1094 = vadd.f32 %v1092, %v1093
        %v1095 = vmul.f32 %v1012, %v1057
        %v1096 = vadd.f32 %v1094, %v1095
        %v1097 = vmul.f32 %v1003, %v1043
        %v1098 = vmul.f32 %v1007, %v1051
        %v1099 = vadd.f32 %v1097, %v1098
        %v1100 = vmul.f32 %v1012, %v1059
        %v1101 = vadd.f32 %v1099, %v1100
        %v1102 = vmul.f32 %v1017, 0.041666668
        %v1103 = vadd.f32 %v1101, %v1102
        %v1104 = vmul.f32 %v1022, %v1037
        %v1105 = vmul.f32 %v1027, %v1045
        %v1106 = vadd.f32 %v1104, %v1105
        %v1107 = vmul.f32 %v1030, %v1053
        %v1108 = vadd.f32 %v1106, %v1107
        %v1109 = vmul.f32 %v1022, %v1039
        %v1110 = vmul.f32 %v1027, %v1047
        %v1111 = vadd.f32 %v1109, %v1110
        %v1112 = vmul.f32 %v1030, %v1055
        %v1113 = vadd.f32 %v1111, %v1112
        %v1114 = vmul.f32 %v1022, %v1041
        %v1115 = vmul.f32 %v1027, %v1049
        %v1116 = vadd.f32 %v1114, %v1115
        %v1117 = vmul.f32 %v1030, %v1057
        %v1118 = vadd.f32 %v1116, %v1117
        %v1119 = vmul.f32 %v1022, %v1043
        %v1120 = vmul.f32 %v1027, %v1051
        %v1121 = vadd.f32 %v1119, %v1120
        %v1122 = vmul.f32 %v1030, %v1059
        %v1123 = vadd.f32 %v1121, %v1122
        %v1124 = vmul.f32 %v1035, 0.041666668
        %v1125 = vadd.f32 %v1123, %v1124
        %v1126 = vadd.f32 %v874, %v1064
        %v1127 = vadd.f32 %v879, %v1069
        %v1128 = vadd.f32 %v888, %v1074
        %v1129 = vadd.f32 %v897, %v1081
        %v1130 = vadd.f32 %v906, %v1086
        %v1131 = vadd.f32 %v921, %v1091
        %v1132 = vadd.f32 %v926, %v1096
        %v1133 = vadd.f32 %v935, %v1103
        %v1134 = vadd.f32 %v944, %v1108
        %v1135 = vadd.f32 %v953, %v1113
        %v1136 = vadd.f32 %v968, %v1118
        %v1137 = vadd.f32 %v973, %v1125
        %v1138 = vmul.f32 %v1126, %v1126
        %v1139 = vmul.f32 %v1127, %v1130
        %v1140 = vadd.f32 %v1138, %v1139
        %v1141 = vmul.f32 %v1128, %v1134
        %v1142 = vadd.f32 %v1140, %v1141
        %v1143 = vmul.f32 %v1126, %v1127
        %v1144 = vmul.f32 %v1127, %v1131
        %v1145 = vadd.f32 %v1143, %v1144
        %v1146 = vmul.f32 %v1128, %v1135
        %v1147 = vadd.f32 %v1145, %v1146
        %v1148 = vmul.f32 %v1126, %v1128
        %v1149 = vmul.f32 %v1127, %v1132
        %v1150 = vadd.f32 %v1148, %v1149
        %v1151 = vmul.f32 %v1128, %v1136
        %v1152 = vadd.f32 %v1150, %v1151
        %v1153 = vmul.f32 %v1126, %v1129
        %v1154 = vmul.f32 %v1127, %v1133
        %v1155 = vadd.f32 %v1153, %v1154
        %v1156 = vmul.f32 %v1128, %v1137
        %v1157 = vadd.f32 %v1155, %v1156
        %v1158 = vadd.f32 %v1157, %v1129
        %v1159 = vmul.f32 %v1130, %v1126
        %v1160 = vmul.f32 %v1131, %v1130
        %v1161 = vadd.f32 %v1159, %v1160
        %v1162 = vmul.f32 %v1132, %v1134
        %v1163 = vadd.f32 %v1161, %v1162
        %v1164 = vmul.f32 %v1131, %v1131
        %v1165 = vadd.f32 %v1139, %v1164
        %v1166 = vmul.f32 %v1132, %v1135
        %v1167 = vadd.f32 %v1165, %v1166
        %v1168 = vmul.f32 %v1130, %v1128
        %v1169 = vmul.f32 %v1131, %v1132
        %v1170 = vadd.f32 %v1168, %v1169
        %v1171 = vmul.f32 %v1132, %v1136
        %v1172 = vadd.f32 %v1170, %v1171
        %v1173 = vmul.f32 %v1130, %v1129
        %v1174 = vmul.f32 %v1131, %v1133
        %v1175 = vadd.f32 %v1173, %v1174
        %v1176 = vmul.f32 %v1132, %v1137
        %v1177 = vadd.f32 %v1175, %v1176
        %v1178 = vadd.f32 %v1177, %v1133
        %v1179 = vmul.f32 %v1134, %v1126
        %v1180 = vmul.f32 %v1135, %v1130
        %v1181 = vadd.f32 %v1179, %v1180
        %v1182 = vmul.f32 %v1136, %v1134
        %v1183 = vadd.f32 %v1181, %v1182
        %v1184 = vmul.f32 %v1134, %v1127
        %v1185 = vmul.f32 %v1135, %v1131
        %v1186 = vadd.f32 %v1184, %v1185
        %v1187 = vmul.f32 %v1136, %v1135
        %v1188 = vadd.f32 %v1186, %v1187
        %v1189 = vadd.f32 %v1141, %v1166
        %v1190 = vmul.f32 %v1136, %v1136
        %v1191 = vadd.f32 %v1189, %v1190
        %v1192 = vmul.f32 %v1134, %v1129
        %v1193 = vmul.f32 %v1135, %v1133
        %v1194 = vadd.f32 %v1192, %v1193
        %v1195 = vmul.f32 %v1136, %v1137
        %v1196 = vadd.f32 %v1194, %v1195
        %v1197 = vadd.f32 %v1196, %v1137
        %v1198 = vmul.f32 %v1142, %v1142
        %v1199 = vmul.f32 %v1147, %v1163
        %v1200 = vadd.f32 %v1198, %v1199
        %v1201 = vmul.f32 %v1152, %v1183
        %v1202 = vadd.f32 %v1200, %v1201
        %v1203 = vmul.f32 %v1142, %v1147
        %v1204 = vmul.f32 %v1147, %v1167
        %v1205 = vadd.f32 %v1203, %v1204
        %v1206 = vmul.f32 %v1152, %v1188
        %v1207 = vadd.f32 %v1205, %v1206
        %v1208 = vmul.f32 %v1142, %v1152
        %v1209 = vmul.f32 %v1147, %v1172
        %v1210 = vadd.f32 %v1208, %v1209
        %v1211 = vmul.f32 %v1152, %v1191
        %v1212 = vadd.f32 %v1210, %v1211
        %v1213 = vmul.f32 %v1142, %v1158
        %v1214 = vmul.f32 %v1147, %v1178
        %v1215 = vadd.f32 %v1213, %v1214
        %v1216 = vmul.f32 %v1152, %v1197
        %v1217 = vadd.f32 %v1215, %v1216
        %v1218 = vadd.f32 %v1217, %v1158
        %v1219 = vmul.f32 %v1163, %v1142
        %v1220 = vmul.f32 %v1167, %v1163
        %v1221 = vadd.f32 %v1219, %v1220
        %v1222 = vmul.f32 %v1172, %v1183
        %v1223 = vadd.f32 %v1221, %v1222
        %v1224 = vmul.f32 %v1167, %v1167
        %v1225 = vadd.f32 %v1199, %v1224
        %v1226 = vmul.f32 %v1172, %v1188
        %v1227 = vadd.f32 %v1225, %v1226
        %v1228 = vmul.f32 %v1163, %v1152
        %v1229 = vmul.f32 %v1167, %v1172
        %v1230 = vadd.f32 %v1228, %v1229
        %v1231 = vmul.f32 %v1172, %v1191
        %v1232 = vadd.f32 %v1230, %v1231
        %v1233 = vmul.f32 %v1163, %v1158
        %v1234 = vmul.f32 %v1167, %v1178
        %v1235 = vadd.f32 %v1233, %v1234
        %v1236 = vmul.f32 %v1172, %v1197
        %v1237 = vadd.f32 %v1235, %v1236
        %v1238 = vadd.f32 %v1237, %v1178
        %v1239 = vmul.f32 %v1183, %v1142
        %v1240 = vmul.f32 %v1188, %v1163
        %v1241 = vadd.f32 %v1239, %v1240
        %v1242 = vmul.f32 %v1191, %v1183
        %v1243 = vadd.f32 %v1241, %v1242
        %v1244 = vmul.f32 %v1183, %v1147
        %v1245 = vmul.f32 %v1188, %v1167
        %v1246 = vadd.f32 %v1244, %v1245
        %v1247 = vmul.f32 %v1191, %v1188
        %v1248 = vadd.f32 %v1246, %v1247
        %v1249 = vadd.f32 %v1201, %v1226
        %v1250 = vmul.f32 %v1191, %v1191
        %v1251 = vadd.f32 %v1249, %v1250
        %v1252 = vmul.f32 %v1183, %v1158
        %v1253 = vmul.f32 %v1188, %v1178
        %v1254 = vadd.f32 %v1252, %v1253
        %v1255 = vmul.f32 %v1191, %v1197
        %v1256 = vadd.f32 %v1254, %v1255
        %v1257 = vadd.f32 %v1256, %v1197
        %v1258 = vmul.f32 %v1202, %v1202
        %v1259 = vmul.f32 %v1207, %v1223
        %v1260 = vadd.f32 %v1258, %v1259
        %v1261 = vmul.f32 %v1212, %v1243
        %v1262 = vadd.f32 %v1260, %v1261
        %v1263 = vmul.f32 %v1202, %v1207
        %v1264 = vmul.f32 %v1207, %v1227
        %v1265 = vadd.f32 %v1263, %v1264
        %v1266 = vmul.f32 %v1212, %v1248
        %v1267 = vadd.f32 %v1265, %v1266
        %v1268 = vmul.f32 %v1202, %v1212
        %v1269 = vmul.f32 %v1207, %v1232
        %v1270 = vadd.f32 %v1268, %v1269
        %v1271 = vmul.f32 %v1212, %v1251
        %v1272 = vadd.f32 %v1270, %v1271
        %v1273 = vmul.f32 %v1202, %v1218
        %v1274 = vmul.f32 %v1207, %v1238
        %v1275 = vadd.f32 %v1273, %v1274
        %v1276 = vmul.f32 %v1212, %v1257
        %v1277 = vadd.f32 %v1275, %v1276
        %v1278 = vadd.f32 %v1277, %v1218
        %v1279 = vmul.f32 %v1223, %v1202
        %v1280 = vmul.f32 %v1227, %v1223
        %v1281 = vadd.f32 %v1279, %v1280
        %v1282 = vmul.f32 %v1232, %v1243
        %v1283 = vadd.f32 %v1281, %v1282
        %v1284 = vmul.f32 %v1227, %v1227
        %v1285 = vadd.f32 %v1259, %v1284
        %v1286 = vmul.f32 %v1232, %v1248
        %v1287 = vadd.f32 %v1285, %v1286
        %v1288 = vmul.f32 %v1223, %v1212
        %v1289 = vmul.f32 %v1227, %v1232
        %v1290 = vadd.f32 %v1288, %v1289
        %v1291 = vmul.f32 %v1232, %v1251
        %v1292 = vadd.f32 %v1290, %v1291
        %v1293 = vmul.f32 %v1223, %v1218
        %v1294 = vmul.f32 %v1227, %v1238
        %v1295 = vadd.f32 %v1293, %v1294
        %v1296 = vmul.f32 %v1232, %v1257
        %v1297 = vadd.f32 %v1295, %v1296
        %v1298 = vadd.f32 %v1297, %v1238
        %v1299 = vmul.f32 %v1243, %v1202
        %v1300 = vmul.f32 %v1248, %v1223
        %v1301 = vadd.f32 %v1299, %v1300
        %v1302 = vmul.f32 %v1251, %v1243
        %v1303 = vadd.f32 %v1301, %v1302
        %v1304 = vmul.f32 %v1243, %v1207
        %v1305 = vmul.f32 %v1248, %v1227
        %v1306 = vadd.f32 %v1304, %v1305
        %v1307 = vmul.f32 %v1251, %v1248
        %v1308 = vadd.f32 %v1306, %v1307
        %v1309 = vadd.f32 %v1261, %v1286
        %v1310 = vmul.f32 %v1251, %v1251
        %v1311 = vadd.f32 %v1309, %v1310
        %v1312 = vmul.f32 %v1243, %v1218
        %v1313 = vmul.f32 %v1248, %v1238
        %v1314 = vadd.f32 %v1312, %v1313
        %v1315 = vmul.f32 %v1251, %v1257
        %v1316 = vadd.f32 %v1314, %v1315
        %v1317 = vadd.f32 %v1316, %v1257
        %v1318 = vmul.f32 %v1262, %v1262
        %v1319 = vmul.f32 %v1267, %v1283
        %v1320 = vadd.f32 %v1318, %v1319
        %v1321 = vmul.f32 %v1272, %v1303
        %v1322 = vadd.f32 %v1320, %v1321
        %v1323 = vmul.f32 %v1262, %v1267
        %v1324 = vmul.f32 %v1267, %v1287
        %v1325 = vadd.f32 %v1323, %v1324
        %v1326 = vmul.f32 %v1272, %v1308
        %v1327 = vadd.f32 %v1325, %v1326
        %v1328 = vmul.f32 %v1262, %v1272
        %v1329 = vmul.f32 %v1267, %v1292
        %v1330 = vadd.f32 %v1328, %v1329
        %v1331 = vmul.f32 %v1272, %v1311
        %v1332 = vadd.f32 %v1330, %v1331
        %v1333 = vmul.f32 %v1262, %v1278
        %v1334 = vmul.f32 %v1267, %v1298
        %v1335 = vadd.f32 %v1333, %v1334
        %v1336 = vmul.f32 %v1272, %v1317
        %v1337 = vadd.f32 %v1335, %v1336
        %v1338 = vadd.f32 %v1337, %v1278
        %v1339 = vmul.f32 %v1283, %v1262
        %v1340 = vmul.f32 %v1287, %v1283
        %v1341 = vadd.f32 %v1339, %v1340
        %v1342 = vmul.f32 %v1292, %v1303
        %v1343 = vadd.f32 %v1341, %v1342
        %v1344 = vmul.f32 %v1287, %v1287
        %v1345 = vadd.f32 %v1319, %v1344
        %v1346 = vmul.f32 %v1292, %v1308
        %v1347 = vadd.f32 %v1345, %v1346
        %v1348 = vmul.f32 %v1283, %v1272
        %v1349 = vmul.f32 %v1287, %v1292
        %v1350 = vadd.f32 %v1348, %v1349
        %v1351 = vmul.f32 %v1292, %v1311
        %v1352 = vadd.f32 %v1350, %v1351
        %v1353 = vmul.f32 %v1283, %v1278
        %v1354 = vmul.f32 %v1287, %v1298
        %v1355 = vadd.f32 %v1353, %v1354
        %v1356 = vmul.f32 %v1292, %v1317
        %v1357 = vadd.f32 %v1355, %v1356
        %v1358 = vadd.f32 %v1357, %v1298
        %v1359 = vmul.f32 %v1303, %v1262
        %v1360 = vmul.f32 %v1308, %v1283
        %v1361 = vadd.f32 %v1359, %v1360
        %v1362 = vmul.f32 %v1311, %v1303
        %v1363 = vadd.f32 %v1361, %v1362
        %v1364 = vmul.f32 %v1303, %v1267
        %v1365 = vmul.f32 %v1308, %v1287
        %v1366 = vadd.f32 %v1364, %v1365
        %v1367 = vmul.f32 %v1311, %v1308
        %v1368 = vadd.f32 %v1366, %v1367
        %v1369 = vadd.f32 %v1321, %v1346
        %v1370 = vmul.f32 %v1311, %v1311
        %v1371 = vadd.f32 %v1369, %v1370
        %v1372 = vmul.f32 %v1303, %v1278
        %v1373 = vmul.f32 %v1308, %v1298
        %v1374 = vadd.f32 %v1372, %v1373
        %v1375 = vmul.f32 %v1311, %v1317
        %v1376 = vadd.f32 %v1374, %v1375
        %v1377 = vadd.f32 %v1376, %v1317
        %v1378 = vld [vmem:[%s326] sm:$0xff]
        %s1379 = scalar_lea.vmem %s326, %s475 [#allocation5]
        %v1380 = vld [vmem:[%s1379] sm:$0xff]
        %s1381 = scalar_lea.vmem %s326, %s514 [#allocation5]
        %v1382 = vld [vmem:[%s1381] sm:$0xff]
        %v1383 = vmul.f32 %v1322, %v1378
        %v1384 = vmul.f32 %v1327, %v1380
        %v1385 = vadd.f32 %v1383, %v1384
        %v1386 = vmul.f32 %v1332, %v1382
        %v1387 = vadd.f32 %v1385, %v1386
        %v1388 = vadd.f32 %v1387, %v1338
        %v1389 = vmul.f32 %v1343, %v1378
        %v1390 = vmul.f32 %v1347, %v1380
        %v1391 = vadd.f32 %v1389, %v1390
        %v1392 = vmul.f32 %v1352, %v1382
        %v1393 = vadd.f32 %v1391, %v1392
        %v1394 = vadd.f32 %v1393, %v1358
        %v1395 = vmul.f32 %v1363, %v1378
        %v1396 = vmul.f32 %v1368, %v1380
        %v1397 = vadd.f32 %v1395, %v1396
        %v1398 = vmul.f32 %v1371, %v1382
        %v1399 = vadd.f32 %v1397, %v1398
        %v1400 = vadd.f32 %v1399, %v1377
        %v1401 = vmul.f32 %v1400, 8.0
        %v1402 = vadd.f32 %v1401, 7.5
        %1403 = vst [vmem:[%s350] sm:$0xff] %v1402
        %v1404 = vmul.f32 %v1394, 8.0
        %v1405 = vadd.f32 %v1404, 7.5
        %s1406 = scalar_lea.vmem %s350, %s475 [#allocation6]
        %1407 = vst [vmem:[%s1406] sm:$0xff] %v1405
        %v1408 = vmul.f32 %v1388, 8.0
        %v1409 = vadd.f32 %v1408, 7.5
        %s1410 = scalar_lea.vmem %s350, %s514 [#allocation6]
        %1411 = vst [vmem:[%s1410] sm:$0xff] %v1409
        %s1412 = scalar_lea.vmem %s319, 8 [#allocation4]
        %v1413 = vld [vmem:[%s1412] sm:$0xff]
        %v1414 = vmul.f32 %v451, %v1413
        %v1415 = vmul.f32 %v453, %v1413
        %v1416 = vmul.f32 %v455, %v1413
        %v1417 = vmul.f32 %v457, %v1413
        %v1418 = vmul.f32 %v459, %v1413
        %v1419 = vmul.f32 %v461, %v1413
        %v1420 = vmul.f32 %v463, %v1413
        %v1421 = vmul.f32 %v465, %v1413
        %v1422 = vmul.f32 %v467, %v1413
        %v1423 = vmul.f32 %v469, %v1413
        %v1424 = vmul.f32 %v471, %v1413
        %v1425 = vmul.f32 %v473, %v1413
        %s1426 = sadd.s32 8, 16
        %s1427 = scalar_lea.vmem %s319, %s1426 [#allocation4]
        %v1428 = vld [vmem:[%s1427] sm:$0xff]
        %v1429 = vmul.f32 %v478, %v1428
        %v1430 = vadd.f32 %v1414, %v1429
        %v1431 = vmul.f32 %v481, %v1428
        %v1432 = vadd.f32 %v1415, %v1431
        %v1433 = vmul.f32 %v484, %v1428
        %v1434 = vadd.f32 %v1416, %v1433
        %v1435 = vmul.f32 %v487, %v1428
        %v1436 = vadd.f32 %v1417, %v1435
        %v1437 = vmul.f32 %v490, %v1428
        %v1438 = vadd.f32 %v1418, %v1437
        %v1439 = vmul.f32 %v493, %v1428
        %v1440 = vadd.f32 %v1419, %v1439
        %v1441 = vmul.f32 %v496, %v1428
        %v1442 = vadd.f32 %v1420, %v1441
        %v1443 = vmul.f32 %v499, %v1428
        %v1444 = vadd.f32 %v1421, %v1443
        %v1445 = vmul.f32 %v502, %v1428
        %v1446 = vadd.f32 %v1422, %v1445
        %v1447 = vmul.f32 %v505, %v1428
        %v1448 = vadd.f32 %v1423, %v1447
        %v1449 = vmul.f32 %v508, %v1428
        %v1450 = vadd.f32 %v1424, %v1449
        %v1451 = vmul.f32 %v511, %v1428
        %v1452 = vadd.f32 %v1425, %v1451
        %s1453 = sadd.s32 8, 32
        %s1454 = scalar_lea.vmem %s319, %s1453 [#allocation4]
        %v1455 = vld [vmem:[%s1454] sm:$0xff]
        %v1456 = vmul.f32 %v517, %v1455
        %v1457 = vadd.f32 %v1430, %v1456
        %v1458 = vmul.f32 %v520, %v1455
        %v1459 = vadd.f32 %v1432, %v1458
        %v1460 = vmul.f32 %v523, %v1455
        %v1461 = vadd.f32 %v1434, %v1460
        %v1462 = vmul.f32 %v526, %v1455
        %v1463 = vadd.f32 %v1436, %v1462
        %v1464 = vmul.f32 %v529, %v1455
        %v1465 = vadd.f32 %v1438, %v1464
        %v1466 = vmul.f32 %v532, %v1455
        %v1467 = vadd.f32 %v1440, %v1466
        %v1468 = vmul.f32 %v535, %v1455
        %v1469 = vadd.f32 %v1442, %v1468
        %v1470 = vmul.f32 %v538, %v1455
        %v1471 = vadd.f32 %v1444, %v1470
        %v1472 = vmul.f32 %v541, %v1455
        %v1473 = vadd.f32 %v1446, %v1472
        %v1474 = vmul.f32 %v544, %v1455
        %v1475 = vadd.f32 %v1448, %v1474
        %v1476 = vmul.f32 %v547, %v1455
        %v1477 = vadd.f32 %v1450, %v1476
        %v1478 = vmul.f32 %v550, %v1455
        %v1479 = vadd.f32 %v1452, %v1478
        %s1480 = sadd.s32 8, 48
        %s1481 = scalar_lea.vmem %s319, %s1480 [#allocation4]
        %v1482 = vld [vmem:[%s1481] sm:$0xff]
        %v1483 = vmul.f32 %v556, %v1482
        %v1484 = vadd.f32 %v1457, %v1483
        %v1485 = vmul.f32 %v559, %v1482
        %v1486 = vadd.f32 %v1459, %v1485
        %v1487 = vmul.f32 %v562, %v1482
        %v1488 = vadd.f32 %v1461, %v1487
        %v1489 = vmul.f32 %v565, %v1482
        %v1490 = vadd.f32 %v1463, %v1489
        %v1491 = vmul.f32 %v568, %v1482
        %v1492 = vadd.f32 %v1465, %v1491
        %v1493 = vmul.f32 %v571, %v1482
        %v1494 = vadd.f32 %v1467, %v1493
        %v1495 = vmul.f32 %v574, %v1482
        %v1496 = vadd.f32 %v1469, %v1495
        %v1497 = vmul.f32 %v577, %v1482
        %v1498 = vadd.f32 %v1471, %v1497
        %v1499 = vmul.f32 %v580, %v1482
        %v1500 = vadd.f32 %v1473, %v1499
        %v1501 = vmul.f32 %v583, %v1482
        %v1502 = vadd.f32 %v1475, %v1501
        %v1503 = vmul.f32 %v586, %v1482
        %v1504 = vadd.f32 %v1477, %v1503
        %v1505 = vmul.f32 %v589, %v1482
        %v1506 = vadd.f32 %v1479, %v1505
        %s1507 = sadd.s32 8, 64
        %s1508 = scalar_lea.vmem %s319, %s1507 [#allocation4]
        %v1509 = vld [vmem:[%s1508] sm:$0xff]
        %v1510 = vmul.f32 %v595, %v1509
        %v1511 = vadd.f32 %v1484, %v1510
        %v1512 = vmul.f32 %v598, %v1509
        %v1513 = vadd.f32 %v1486, %v1512
        %v1514 = vmul.f32 %v601, %v1509
        %v1515 = vadd.f32 %v1488, %v1514
        %v1516 = vmul.f32 %v604, %v1509
        %v1517 = vadd.f32 %v1490, %v1516
        %v1518 = vmul.f32 %v607, %v1509
        %v1519 = vadd.f32 %v1492, %v1518
        %v1520 = vmul.f32 %v610, %v1509
        %v1521 = vadd.f32 %v1494, %v1520
        %v1522 = vmul.f32 %v613, %v1509
        %v1523 = vadd.f32 %v1496, %v1522
        %v1524 = vmul.f32 %v616, %v1509
        %v1525 = vadd.f32 %v1498, %v1524
        %v1526 = vmul.f32 %v619, %v1509
        %v1527 = vadd.f32 %v1500, %v1526
        %v1528 = vmul.f32 %v622, %v1509
        %v1529 = vadd.f32 %v1502, %v1528
        %v1530 = vmul.f32 %v625, %v1509
        %v1531 = vadd.f32 %v1504, %v1530
        %v1532 = vmul.f32 %v628, %v1509
        %v1533 = vadd.f32 %v1506, %v1532
        %s1534 = sadd.s32 8, 80
        %s1535 = scalar_lea.vmem %s319, %s1534 [#allocation4]
        %v1536 = vld [vmem:[%s1535] sm:$0xff]
        %v1537 = vmul.f32 %v634, %v1536
        %v1538 = vadd.f32 %v1511, %v1537
        %v1539 = vmul.f32 %v637, %v1536
        %v1540 = vadd.f32 %v1513, %v1539
        %v1541 = vmul.f32 %v640, %v1536
        %v1542 = vadd.f32 %v1515, %v1541
        %v1543 = vmul.f32 %v643, %v1536
        %v1544 = vadd.f32 %v1517, %v1543
        %v1545 = vmul.f32 %v646, %v1536
        %v1546 = vadd.f32 %v1519, %v1545
        %v1547 = vmul.f32 %v649, %v1536
        %v1548 = vadd.f32 %v1521, %v1547
        %v1549 = vmul.f32 %v652, %v1536
        %v1550 = vadd.f32 %v1523, %v1549
        %v1551 = vmul.f32 %v655, %v1536
        %v1552 = vadd.f32 %v1525, %v1551
        %v1553 = vmul.f32 %v658, %v1536
        %v1554 = vadd.f32 %v1527, %v1553
        %v1555 = vmul.f32 %v661, %v1536
        %v1556 = vadd.f32 %v1529, %v1555
        %v1557 = vmul.f32 %v664, %v1536
        %v1558 = vadd.f32 %v1531, %v1557
        %v1559 = vmul.f32 %v667, %v1536
        %v1560 = vadd.f32 %v1533, %v1559
        %s1561 = sadd.s32 8, 96
        %s1562 = scalar_lea.vmem %s319, %s1561 [#allocation4]
        %v1563 = vld [vmem:[%s1562] sm:$0xff]
        %v1564 = vmul.f32 %v673, %v1563
        %v1565 = vadd.f32 %v1538, %v1564
        %v1566 = vmul.f32 %v676, %v1563
        %v1567 = vadd.f32 %v1540, %v1566
        %v1568 = vmul.f32 %v679, %v1563
        %v1569 = vadd.f32 %v1542, %v1568
        %v1570 = vmul.f32 %v682, %v1563
        %v1571 = vadd.f32 %v1544, %v1570
        %v1572 = vmul.f32 %v685, %v1563
        %v1573 = vadd.f32 %v1546, %v1572
        %v1574 = vmul.f32 %v688, %v1563
        %v1575 = vadd.f32 %v1548, %v1574
        %v1576 = vmul.f32 %v691, %v1563
        %v1577 = vadd.f32 %v1550, %v1576
        %v1578 = vmul.f32 %v694, %v1563
        %v1579 = vadd.f32 %v1552, %v1578
        %v1580 = vmul.f32 %v697, %v1563
        %v1581 = vadd.f32 %v1554, %v1580
        %v1582 = vmul.f32 %v700, %v1563
        %v1583 = vadd.f32 %v1556, %v1582
        %v1584 = vmul.f32 %v703, %v1563
        %v1585 = vadd.f32 %v1558, %v1584
        %v1586 = vmul.f32 %v706, %v1563
        %v1587 = vadd.f32 %v1560, %v1586
        %s1588 = sadd.s32 8, 112
        %s1589 = scalar_lea.vmem %s319, %s1588 [#allocation4]
        %v1590 = vld [vmem:[%s1589] sm:$0xff]
        %v1591 = vmul.f32 %v712, %v1590
        %v1592 = vadd.f32 %v1565, %v1591
        %v1593 = vmul.f32 %v715, %v1590
        %v1594 = vadd.f32 %v1567, %v1593
        %v1595 = vmul.f32 %v718, %v1590
        %v1596 = vadd.f32 %v1569, %v1595
        %v1597 = vmul.f32 %v721, %v1590
        %v1598 = vadd.f32 %v1571, %v1597
        %v1599 = vmul.f32 %v724, %v1590
        %v1600 = vadd.f32 %v1573, %v1599
        %v1601 = vmul.f32 %v727, %v1590
        %v1602 = vadd.f32 %v1575, %v1601
        %v1603 = vmul.f32 %v730, %v1590
        %v1604 = vadd.f32 %v1577, %v1603
        %v1605 = vmul.f32 %v733, %v1590
        %v1606 = vadd.f32 %v1579, %v1605
        %v1607 = vmul.f32 %v736, %v1590
        %v1608 = vadd.f32 %v1581, %v1607
        %v1609 = vmul.f32 %v739, %v1590
        %v1610 = vadd.f32 %v1583, %v1609
        %v1611 = vmul.f32 %v742, %v1590
        %v1612 = vadd.f32 %v1585, %v1611
        %v1613 = vmul.f32 %v745, %v1590
        %v1614 = vadd.f32 %v1587, %v1613
        %v1615 = vmul.f32 %v1592, %v1592
        %v1616 = vmul.f32 %v1594, %v1600
        %v1617 = vadd.f32 %v1615, %v1616
        %v1618 = vmul.f32 %v1596, %v1608
        %v1619 = vadd.f32 %v1617, %v1618
        %v1620 = vmul.f32 %v1592, %v1594
        %v1621 = vmul.f32 %v1594, %v1602
        %v1622 = vadd.f32 %v1620, %v1621
        %v1623 = vmul.f32 %v1596, %v1610
        %v1624 = vadd.f32 %v1622, %v1623
        %v1625 = vmul.f32 %v1592, %v1596
        %v1626 = vmul.f32 %v1594, %v1604
        %v1627 = vadd.f32 %v1625, %v1626
        %v1628 = vmul.f32 %v1596, %v1612
        %v1629 = vadd.f32 %v1627, %v1628
        %v1630 = vmul.f32 %v1592, %v1598
        %v1631 = vmul.f32 %v1594, %v1606
        %v1632 = vadd.f32 %v1630, %v1631
        %v1633 = vmul.f32 %v1596, %v1614
        %v1634 = vadd.f32 %v1632, %v1633
        %v1635 = vmul.f32 %v1600, %v1592
        %v1636 = vmul.f32 %v1602, %v1600
        %v1637 = vadd.f32 %v1635, %v1636
        %v1638 = vmul.f32 %v1604, %v1608
        %v1639 = vadd.f32 %v1637, %v1638
        %v1640 = vmul.f32 %v1602, %v1602
        %v1641 = vadd.f32 %v1616, %v1640
        %v1642 = vmul.f32 %v1604, %v1610
        %v1643 = vadd.f32 %v1641, %v1642
        %v1644 = vmul.f32 %v1600, %v1596
        %v1645 = vmul.f32 %v1602, %v1604
        %v1646 = vadd.f32 %v1644, %v1645
        %v1647 = vmul.f32 %v1604, %v1612
        %v1648 = vadd.f32 %v1646, %v1647
        %v1649 = vmul.f32 %v1600, %v1598
        %v1650 = vmul.f32 %v1602, %v1606
        %v1651 = vadd.f32 %v1649, %v1650
        %v1652 = vmul.f32 %v1604, %v1614
        %v1653 = vadd.f32 %v1651, %v1652
        %v1654 = vmul.f32 %v1608, %v1592
        %v1655 = vmul.f32 %v1610, %v1600
        %v1656 = vadd.f32 %v1654, %v1655
        %v1657 = vmul.f32 %v1612, %v1608
        %v1658 = vadd.f32 %v1656, %v1657
        %v1659 = vmul.f32 %v1608, %v1594
        %v1660 = vmul.f32 %v1610, %v1602
        %v1661 = vadd.f32 %v1659, %v1660
        %v1662 = vmul.f32 %v1612, %v1610
        %v1663 = vadd.f32 %v1661, %v1662
        %v1664 = vadd.f32 %v1618, %v1642
        %v1665 = vmul.f32 %v1612, %v1612
        %v1666 = vadd.f32 %v1664, %v1665
        %v1667 = vmul.f32 %v1608, %v1598
        %v1668 = vmul.f32 %v1610, %v1606
        %v1669 = vadd.f32 %v1667, %v1668
        %v1670 = vmul.f32 %v1612, %v1614
        %v1671 = vadd.f32 %v1669, %v1670
        %v1672 = vmul.f32 %v1619, %v1592
        %v1673 = vmul.f32 %v1624, %v1600
        %v1674 = vadd.f32 %v1672, %v1673
        %v1675 = vmul.f32 %v1629, %v1608
        %v1676 = vadd.f32 %v1674, %v1675
        %v1677 = vmul.f32 %v1619, %v1594
        %v1678 = vmul.f32 %v1624, %v1602
        %v1679 = vadd.f32 %v1677, %v1678
        %v1680 = vmul.f32 %v1629, %v1610
        %v1681 = vadd.f32 %v1679, %v1680
        %v1682 = vmul.f32 %v1619, %v1596
        %v1683 = vmul.f32 %v1624, %v1604
        %v1684 = vadd.f32 %v1682, %v1683
        %v1685 = vmul.f32 %v1629, %v1612
        %v1686 = vadd.f32 %v1684, %v1685
        %v1687 = vmul.f32 %v1619, %v1598
        %v1688 = vmul.f32 %v1624, %v1606
        %v1689 = vadd.f32 %v1687, %v1688
        %v1690 = vmul.f32 %v1629, %v1614
        %v1691 = vadd.f32 %v1689, %v1690
        %v1692 = vmul.f32 %v1639, %v1592
        %v1693 = vmul.f32 %v1643, %v1600
        %v1694 = vadd.f32 %v1692, %v1693
        %v1695 = vmul.f32 %v1648, %v1608
        %v1696 = vadd.f32 %v1694, %v1695
        %v1697 = vmul.f32 %v1639, %v1594
        %v1698 = vmul.f32 %v1643, %v1602
        %v1699 = vadd.f32 %v1697, %v1698
        %v1700 = vmul.f32 %v1648, %v1610
        %v1701 = vadd.f32 %v1699, %v1700
        %v1702 = vmul.f32 %v1639, %v1596
        %v1703 = vmul.f32 %v1643, %v1604
        %v1704 = vadd.f32 %v1702, %v1703
        %v1705 = vmul.f32 %v1648, %v1612
        %v1706 = vadd.f32 %v1704, %v1705
        %v1707 = vmul.f32 %v1639, %v1598
        %v1708 = vmul.f32 %v1643, %v1606
        %v1709 = vadd.f32 %v1707, %v1708
        %v1710 = vmul.f32 %v1648, %v1614
        %v1711 = vadd.f32 %v1709, %v1710
        %v1712 = vmul.f32 %v1658, %v1592
        %v1713 = vmul.f32 %v1663, %v1600
        %v1714 = vadd.f32 %v1712, %v1713
        %v1715 = vmul.f32 %v1666, %v1608
        %v1716 = vadd.f32 %v1714, %v1715
        %v1717 = vmul.f32 %v1658, %v1594
        %v1718 = vmul.f32 %v1663, %v1602
        %v1719 = vadd.f32 %v1717, %v1718
        %v1720 = vmul.f32 %v1666, %v1610
        %v1721 = vadd.f32 %v1719, %v1720
        %v1722 = vmul.f32 %v1658, %v1596
        %v1723 = vmul.f32 %v1663, %v1604
        %v1724 = vadd.f32 %v1722, %v1723
        %v1725 = vmul.f32 %v1666, %v1612
        %v1726 = vadd.f32 %v1724, %v1725
        %v1727 = vmul.f32 %v1658, %v1598
        %v1728 = vmul.f32 %v1663, %v1606
        %v1729 = vadd.f32 %v1727, %v1728
        %v1730 = vmul.f32 %v1666, %v1614
        %v1731 = vadd.f32 %v1729, %v1730
        %v1732 = vmul.f32 %v1619, 0.5
        %v1733 = vadd.f32 %v1592, %v1732
        %v1734 = vmul.f32 %v1676, 0.16666667
        %v1735 = vadd.f32 %v1733, %v1734
        %v1736 = vmul.f32 %v1592, 0.008333334
        %v1737 = vmul.f32 %v1619, 0.0013888889
        %v1738 = vadd.f32 %v1736, %v1737
        %v1739 = vmul.f32 %v1676, 0.0001984127
        %v1740 = vadd.f32 %v1738, %v1739
        %v1741 = vadd.f32 %v1735, 1.0
        %v1742 = vadd.f32 %v1740, 0.041666668
        %v1743 = vmul.f32 %v1624, 0.5
        %v1744 = vadd.f32 %v1594, %v1743
        %v1745 = vmul.f32 %v1681, 0.16666667
        %v1746 = vadd.f32 %v1744, %v1745
        %v1747 = vmul.f32 %v1594, 0.008333334
        %v1748 = vmul.f32 %v1624, 0.0013888889
        %v1749 = vadd.f32 %v1747, %v1748
        %v1750 = vmul.f32 %v1681, 0.0001984127
        %v1751 = vadd.f32 %v1749, %v1750
        %v1752 = vmul.f32 %v1629, 0.5
        %v1753 = vadd.f32 %v1596, %v1752
        %v1754 = vmul.f32 %v1686, 0.16666667
        %v1755 = vadd.f32 %v1753, %v1754
        %v1756 = vmul.f32 %v1596, 0.008333334
        %v1757 = vmul.f32 %v1629, 0.0013888889
        %v1758 = vadd.f32 %v1756, %v1757
        %v1759 = vmul.f32 %v1686, 0.0001984127
        %v1760 = vadd.f32 %v1758, %v1759
        %v1761 = vmul.f32 %v1634, 0.5
        %v1762 = vadd.f32 %v1598, %v1761
        %v1763 = vmul.f32 %v1691, 0.16666667
        %v1764 = vadd.f32 %v1762, %v1763
        %v1765 = vmul.f32 %v1598, 0.008333334
        %v1766 = vmul.f32 %v1634, 0.0013888889
        %v1767 = vadd.f32 %v1765, %v1766
        %v1768 = vmul.f32 %v1691, 0.0001984127
        %v1769 = vadd.f32 %v1767, %v1768
        %v1770 = vmul.f32 %v1639, 0.5
        %v1771 = vadd.f32 %v1600, %v1770
        %v1772 = vmul.f32 %v1696, 0.16666667
        %v1773 = vadd.f32 %v1771, %v1772
        %v1774 = vmul.f32 %v1600, 0.008333334
        %v1775 = vmul.f32 %v1639, 0.0013888889
        %v1776 = vadd.f32 %v1774, %v1775
        %v1777 = vmul.f32 %v1696, 0.0001984127
        %v1778 = vadd.f32 %v1776, %v1777
        %v1779 = vmul.f32 %v1643, 0.5
        %v1780 = vadd.f32 %v1602, %v1779
        %v1781 = vmul.f32 %v1701, 0.16666667
        %v1782 = vadd.f32 %v1780, %v1781
        %v1783 = vmul.f32 %v1602, 0.008333334
        %v1784 = vmul.f32 %v1643, 0.0013888889
        %v1785 = vadd.f32 %v1783, %v1784
        %v1786 = vmul.f32 %v1701, 0.0001984127
        %v1787 = vadd.f32 %v1785, %v1786
        %v1788 = vadd.f32 %v1782, 1.0
        %v1789 = vadd.f32 %v1787, 0.041666668
        %v1790 = vmul.f32 %v1648, 0.5
        %v1791 = vadd.f32 %v1604, %v1790
        %v1792 = vmul.f32 %v1706, 0.16666667
        %v1793 = vadd.f32 %v1791, %v1792
        %v1794 = vmul.f32 %v1604, 0.008333334
        %v1795 = vmul.f32 %v1648, 0.0013888889
        %v1796 = vadd.f32 %v1794, %v1795
        %v1797 = vmul.f32 %v1706, 0.0001984127
        %v1798 = vadd.f32 %v1796, %v1797
        %v1799 = vmul.f32 %v1653, 0.5
        %v1800 = vadd.f32 %v1606, %v1799
        %v1801 = vmul.f32 %v1711, 0.16666667
        %v1802 = vadd.f32 %v1800, %v1801
        %v1803 = vmul.f32 %v1606, 0.008333334
        %v1804 = vmul.f32 %v1653, 0.0013888889
        %v1805 = vadd.f32 %v1803, %v1804
        %v1806 = vmul.f32 %v1711, 0.0001984127
        %v1807 = vadd.f32 %v1805, %v1806
        %v1808 = vmul.f32 %v1658, 0.5
        %v1809 = vadd.f32 %v1608, %v1808
        %v1810 = vmul.f32 %v1716, 0.16666667
        %v1811 = vadd.f32 %v1809, %v1810
        %v1812 = vmul.f32 %v1608, 0.008333334
        %v1813 = vmul.f32 %v1658, 0.0013888889
        %v1814 = vadd.f32 %v1812, %v1813
        %v1815 = vmul.f32 %v1716, 0.0001984127
        %v1816 = vadd.f32 %v1814, %v1815
        %v1817 = vmul.f32 %v1663, 0.5
        %v1818 = vadd.f32 %v1610, %v1817
        %v1819 = vmul.f32 %v1721, 0.16666667
        %v1820 = vadd.f32 %v1818, %v1819
        %v1821 = vmul.f32 %v1610, 0.008333334
        %v1822 = vmul.f32 %v1663, 0.0013888889
        %v1823 = vadd.f32 %v1821, %v1822
        %v1824 = vmul.f32 %v1721, 0.0001984127
        %v1825 = vadd.f32 %v1823, %v1824
        %v1826 = vmul.f32 %v1666, 0.5
        %v1827 = vadd.f32 %v1612, %v1826
        %v1828 = vmul.f32 %v1726, 0.16666667
        %v1829 = vadd.f32 %v1827, %v1828
        %v1830 = vmul.f32 %v1612, 0.008333334
        %v1831 = vmul.f32 %v1666, 0.0013888889
        %v1832 = vadd.f32 %v1830, %v1831
        %v1833 = vmul.f32 %v1726, 0.0001984127
        %v1834 = vadd.f32 %v1832, %v1833
        %v1835 = vadd.f32 %v1829, 1.0
        %v1836 = vadd.f32 %v1834, 0.041666668
        %v1837 = vmul.f32 %v1671, 0.5
        %v1838 = vadd.f32 %v1614, %v1837
        %v1839 = vmul.f32 %v1731, 0.16666667
        %v1840 = vadd.f32 %v1838, %v1839
        %v1841 = vmul.f32 %v1614, 0.008333334
        %v1842 = vmul.f32 %v1671, 0.0013888889
        %v1843 = vadd.f32 %v1841, %v1842
        %v1844 = vmul.f32 %v1731, 0.0001984127
        %v1845 = vadd.f32 %v1843, %v1844
        %v1846 = vmul.f32 %v1619, %v1619
        %v1847 = vmul.f32 %v1624, %v1639
        %v1848 = vadd.f32 %v1846, %v1847
        %v1849 = vmul.f32 %v1629, %v1658
        %v1850 = vadd.f32 %v1848, %v1849
        %v1851 = vmul.f32 %v1619, %v1624
        %v1852 = vmul.f32 %v1624, %v1643
        %v1853 = vadd.f32 %v1851, %v1852
        %v1854 = vmul.f32 %v1629, %v1663
        %v1855 = vadd.f32 %v1853, %v1854
        %v1856 = vmul.f32 %v1619, %v1629
        %v1857 = vmul.f32 %v1624, %v1648
        %v1858 = vadd.f32 %v1856, %v1857
        %v1859 = vmul.f32 %v1629, %v1666
        %v1860 = vadd.f32 %v1858, %v1859
        %v1861 = vmul.f32 %v1619, %v1634
        %v1862 = vmul.f32 %v1624, %v1653
        %v1863 = vadd.f32 %v1861, %v1862
        %v1864 = vmul.f32 %v1629, %v1671
        %v1865 = vadd.f32 %v1863, %v1864
        %v1866 = vmul.f32 %v1639, %v1619
        %v1867 = vmul.f32 %v1643, %v1639
        %v1868 = vadd.f32 %v1866, %v1867
        %v1869 = vmul.f32 %v1648, %v1658
        %v1870 = vadd.f32 %v1868, %v1869
        %v1871 = vmul.f32 %v1643, %v1643
        %v1872 = vadd.f32 %v1847, %v1871
        %v1873 = vmul.f32 %v1648, %v1663
        %v1874 = vadd.f32 %v1872, %v1873
        %v1875 = vmul.f32 %v1639, %v1629
        %v1876 = vmul.f32 %v1643, %v1648
        %v1877 = vadd.f32 %v1875, %v1876
        %v1878 = vmul.f32 %v1648, %v1666
        %v1879 = vadd.f32 %v1877, %v1878
        %v1880 = vmul.f32 %v1639, %v1634
        %v1881 = vmul.f32 %v1643, %v1653
        %v1882 = vadd.f32 %v1880, %v1881
        %v1883 = vmul.f32 %v1648, %v1671
        %v1884 = vadd.f32 %v1882, %v1883
        %v1885 = vmul.f32 %v1658, %v1619
        %v1886 = vmul.f32 %v1663, %v1639
        %v1887 = vadd.f32 %v1885, %v1886
        %v1888 = vmul.f32 %v1666, %v1658
        %v1889 = vadd.f32 %v1887, %v1888
        %v1890 = vmul.f32 %v1658, %v1624
        %v1891 = vmul.f32 %v1663, %v1643
        %v1892 = vadd.f32 %v1890, %v1891
        %v1893 = vmul.f32 %v1666, %v1663
        %v1894 = vadd.f32 %v1892, %v1893
        %v1895 = vadd.f32 %v1849, %v1873
        %v1896 = vmul.f32 %v1666, %v1666
        %v1897 = vadd.f32 %v1895, %v1896
        %v1898 = vmul.f32 %v1658, %v1634
        %v1899 = vmul.f32 %v1663, %v1653
        %v1900 = vadd.f32 %v1898, %v1899
        %v1901 = vmul.f32 %v1666, %v1671
        %v1902 = vadd.f32 %v1900, %v1901
        %v1903 = vmul.f32 %v1850, 2.4801588e-05
        %v1904 = vadd.f32 %v1742, %v1903
        %v1905 = vmul.f32 %v1855, 2.4801588e-05
        %v1906 = vadd.f32 %v1751, %v1905
        %v1907 = vmul.f32 %v1860, 2.4801588e-05
        %v1908 = vadd.f32 %v1760, %v1907
        %v1909 = vmul.f32 %v1865, 2.4801588e-05
        %v1910 = vadd.f32 %v1769, %v1909
        %v1911 = vmul.f32 %v1870, 2.4801588e-05
        %v1912 = vadd.f32 %v1778, %v1911
        %v1913 = vmul.f32 %v1874, 2.4801588e-05
        %v1914 = vadd.f32 %v1789, %v1913
        %v1915 = vmul.f32 %v1879, 2.4801588e-05
        %v1916 = vadd.f32 %v1798, %v1915
        %v1917 = vmul.f32 %v1884, 2.4801588e-05
        %v1918 = vadd.f32 %v1807, %v1917
        %v1919 = vmul.f32 %v1889, 2.4801588e-05
        %v1920 = vadd.f32 %v1816, %v1919
        %v1921 = vmul.f32 %v1894, 2.4801588e-05
        %v1922 = vadd.f32 %v1825, %v1921
        %v1923 = vmul.f32 %v1897, 2.4801588e-05
        %v1924 = vadd.f32 %v1836, %v1923
        %v1925 = vmul.f32 %v1902, 2.4801588e-05
        %v1926 = vadd.f32 %v1845, %v1925
        %v1927 = vmul.f32 %v1850, %v1904
        %v1928 = vmul.f32 %v1855, %v1912
        %v1929 = vadd.f32 %v1927, %v1928
        %v1930 = vmul.f32 %v1860, %v1920
        %v1931 = vadd.f32 %v1929, %v1930
        %v1932 = vmul.f32 %v1850, %v1906
        %v1933 = vmul.f32 %v1855, %v1914
        %v1934 = vadd.f32 %v1932, %v1933
        %v1935 = vmul.f32 %v1860, %v1922
        %v1936 = vadd.f32 %v1934, %v1935
        %v1937 = vmul.f32 %v1850, %v1908
        %v1938 = vmul.f32 %v1855, %v1916
        %v1939 = vadd.f32 %v1937, %v1938
        %v1940 = vmul.f32 %v1860, %v1924
        %v1941 = vadd.f32 %v1939, %v1940
        %v1942 = vmul.f32 %v1850, %v1910
        %v1943 = vmul.f32 %v1855, %v1918
        %v1944 = vadd.f32 %v1942, %v1943
        %v1945 = vmul.f32 %v1860, %v1926
        %v1946 = vadd.f32 %v1944, %v1945
        %v1947 = vmul.f32 %v1865, 0.041666668
        %v1948 = vadd.f32 %v1946, %v1947
        %v1949 = vmul.f32 %v1870, %v1904
        %v1950 = vmul.f32 %v1874, %v1912
        %v1951 = vadd.f32 %v1949, %v1950
        %v1952 = vmul.f32 %v1879, %v1920
        %v1953 = vadd.f32 %v1951, %v1952
        %v1954 = vmul.f32 %v1870, %v1906
        %v1955 = vmul.f32 %v1874, %v1914
        %v1956 = vadd.f32 %v1954, %v1955
        %v1957 = vmul.f32 %v1879, %v1922
        %v1958 = vadd.f32 %v1956, %v1957
        %v1959 = vmul.f32 %v1870, %v1908
        %v1960 = vmul.f32 %v1874, %v1916
        %v1961 = vadd.f32 %v1959, %v1960
        %v1962 = vmul.f32 %v1879, %v1924
        %v1963 = vadd.f32 %v1961, %v1962
        %v1964 = vmul.f32 %v1870, %v1910
        %v1965 = vmul.f32 %v1874, %v1918
        %v1966 = vadd.f32 %v1964, %v1965
        %v1967 = vmul.f32 %v1879, %v1926
        %v1968 = vadd.f32 %v1966, %v1967
        %v1969 = vmul.f32 %v1884, 0.041666668
        %v1970 = vadd.f32 %v1968, %v1969
        %v1971 = vmul.f32 %v1889, %v1904
        %v1972 = vmul.f32 %v1894, %v1912
        %v1973 = vadd.f32 %v1971, %v1972
        %v1974 = vmul.f32 %v1897, %v1920
        %v1975 = vadd.f32 %v1973, %v1974
        %v1976 = vmul.f32 %v1889, %v1906
        %v1977 = vmul.f32 %v1894, %v1914
        %v1978 = vadd.f32 %v1976, %v1977
        %v1979 = vmul.f32 %v1897, %v1922
        %v1980 = vadd.f32 %v1978, %v1979
        %v1981 = vmul.f32 %v1889, %v1908
        %v1982 = vmul.f32 %v1894, %v1916
        %v1983 = vadd.f32 %v1981, %v1982
        %v1984 = vmul.f32 %v1897, %v1924
        %v1985 = vadd.f32 %v1983, %v1984
        %v1986 = vmul.f32 %v1889, %v1910
        %v1987 = vmul.f32 %v1894, %v1918
        %v1988 = vadd.f32 %v1986, %v1987
        %v1989 = vmul.f32 %v1897, %v1926
        %v1990 = vadd.f32 %v1988, %v1989
        %v1991 = vmul.f32 %v1902, 0.041666668
        %v1992 = vadd.f32 %v1990, %v1991
        %v1993 = vadd.f32 %v1741, %v1931
        %v1994 = vadd.f32 %v1746, %v1936
        %v1995 = vadd.f32 %v1755, %v1941
        %v1996 = vadd.f32 %v1764, %v1948
        %v1997 = vadd.f32 %v1773, %v1953
        %v1998 = vadd.f32 %v1788, %v1958
        %v1999 = vadd.f32 %v1793, %v1963
        %v2000 = vadd.f32 %v1802, %v1970
        %v2001 = vadd.f32 %v1811, %v1975
        %v2002 = vadd.f32 %v1820, %v1980
        %v2003 = vadd.f32 %v1835, %v1985
        %v2004 = vadd.f32 %v1840, %v1992
        %v2005 = vmul.f32 %v1993, %v1993
        %v2006 = vmul.f32 %v1994, %v1997
        %v2007 = vadd.f32 %v2005, %v2006
        %v2008 = vmul.f32 %v1995, %v2001
        %v2009 = vadd.f32 %v2007, %v2008
        %v2010 = vmul.f32 %v1993, %v1994
        %v2011 = vmul.f32 %v1994, %v1998
        %v2012 = vadd.f32 %v2010, %v2011
        %v2013 = vmul.f32 %v1995, %v2002
        %v2014 = vadd.f32 %v2012, %v2013
        %v2015 = vmul.f32 %v1993, %v1995
        %v2016 = vmul.f32 %v1994, %v1999
        %v2017 = vadd.f32 %v2015, %v2016
        %v2018 = vmul.f32 %v1995, %v2003
        %v2019 = vadd.f32 %v2017, %v2018
        %v2020 = vmul.f32 %v1993, %v1996
        %v2021 = vmul.f32 %v1994, %v2000
        %v2022 = vadd.f32 %v2020, %v2021
        %v2023 = vmul.f32 %v1995, %v2004
        %v2024 = vadd.f32 %v2022, %v2023
        %v2025 = vadd.f32 %v2024, %v1996
        %v2026 = vmul.f32 %v1997, %v1993
        %v2027 = vmul.f32 %v1998, %v1997
        %v2028 = vadd.f32 %v2026, %v2027
        %v2029 = vmul.f32 %v1999, %v2001
        %v2030 = vadd.f32 %v2028, %v2029
        %v2031 = vmul.f32 %v1998, %v1998
        %v2032 = vadd.f32 %v2006, %v2031
        %v2033 = vmul.f32 %v1999, %v2002
        %v2034 = vadd.f32 %v2032, %v2033
        %v2035 = vmul.f32 %v1997, %v1995
        %v2036 = vmul.f32 %v1998, %v1999
        %v2037 = vadd.f32 %v2035, %v2036
        %v2038 = vmul.f32 %v1999, %v2003
        %v2039 = vadd.f32 %v2037, %v2038
        %v2040 = vmul.f32 %v1997, %v1996
        %v2041 = vmul.f32 %v1998, %v2000
        %v2042 = vadd.f32 %v2040, %v2041
        %v2043 = vmul.f32 %v1999, %v2004
        %v2044 = vadd.f32 %v2042, %v2043
        %v2045 = vadd.f32 %v2044, %v2000
        %v2046 = vmul.f32 %v2001, %v1993
        %v2047 = vmul.f32 %v2002, %v1997
        %v2048 = vadd.f32 %v2046, %v2047
        %v2049 = vmul.f32 %v2003, %v2001
        %v2050 = vadd.f32 %v2048, %v2049
        %v2051 = vmul.f32 %v2001, %v1994
        %v2052 = vmul.f32 %v2002, %v1998
        %v2053 = vadd.f32 %v2051, %v2052
        %v2054 = vmul.f32 %v2003, %v2002
        %v2055 = vadd.f32 %v2053, %v2054
        %v2056 = vadd.f32 %v2008, %v2033
        %v2057 = vmul.f32 %v2003, %v2003
        %v2058 = vadd.f32 %v2056, %v2057
        %v2059 = vmul.f32 %v2001, %v1996
        %v2060 = vmul.f32 %v2002, %v2000
        %v2061 = vadd.f32 %v2059, %v2060
        %v2062 = vmul.f32 %v2003, %v2004
        %v2063 = vadd.f32 %v2061, %v2062
        %v2064 = vadd.f32 %v2063, %v2004
        %v2065 = vmul.f32 %v2009, %v2009
        %v2066 = vmul.f32 %v2014, %v2030
        %v2067 = vadd.f32 %v2065, %v2066
        %v2068 = vmul.f32 %v2019, %v2050
        %v2069 = vadd.f32 %v2067, %v2068
        %v2070 = vmul.f32 %v2009, %v2014
        %v2071 = vmul.f32 %v2014, %v2034
        %v2072 = vadd.f32 %v2070, %v2071
        %v2073 = vmul.f32 %v2019, %v2055
        %v2074 = vadd.f32 %v2072, %v2073
        %v2075 = vmul.f32 %v2009, %v2019
        %v2076 = vmul.f32 %v2014, %v2039
        %v2077 = vadd.f32 %v2075, %v2076
        %v2078 = vmul.f32 %v2019, %v2058
        %v2079 = vadd.f32 %v2077, %v2078
        %v2080 = vmul.f32 %v2009, %v2025
        %v2081 = vmul.f32 %v2014, %v2045
        %v2082 = vadd.f32 %v2080, %v2081
        %v2083 = vmul.f32 %v2019, %v2064
        %v2084 = vadd.f32 %v2082, %v2083
        %v2085 = vadd.f32 %v2084, %v2025
        %v2086 = vmul.f32 %v2030, %v2009
        %v2087 = vmul.f32 %v2034, %v2030
        %v2088 = vadd.f32 %v2086, %v2087
        %v2089 = vmul.f32 %v2039, %v2050
        %v2090 = vadd.f32 %v2088, %v2089
        %v2091 = vmul.f32 %v2034, %v2034
        %v2092 = vadd.f32 %v2066, %v2091
        %v2093 = vmul.f32 %v2039, %v2055
        %v2094 = vadd.f32 %v2092, %v2093
        %v2095 = vmul.f32 %v2030, %v2019
        %v2096 = vmul.f32 %v2034, %v2039
        %v2097 = vadd.f32 %v2095, %v2096
        %v2098 = vmul.f32 %v2039, %v2058
        %v2099 = vadd.f32 %v2097, %v2098
        %v2100 = vmul.f32 %v2030, %v2025
        %v2101 = vmul.f32 %v2034, %v2045
        %v2102 = vadd.f32 %v2100, %v2101
        %v2103 = vmul.f32 %v2039, %v2064
        %v2104 = vadd.f32 %v2102, %v2103
        %v2105 = vadd.f32 %v2104, %v2045
        %v2106 = vmul.f32 %v2050, %v2009
        %v2107 = vmul.f32 %v2055, %v2030
        %v2108 = vadd.f32 %v2106, %v2107
        %v2109 = vmul.f32 %v2058, %v2050
        %v2110 = vadd.f32 %v2108, %v2109
        %v2111 = vmul.f32 %v2050, %v2014
        %v2112 = vmul.f32 %v2055, %v2034
        %v2113 = vadd.f32 %v2111, %v2112
        %v2114 = vmul.f32 %v2058, %v2055
        %v2115 = vadd.f32 %v2113, %v2114
        %v2116 = vadd.f32 %v2068, %v2093
        %v2117 = vmul.f32 %v2058, %v2058
        %v2118 = vadd.f32 %v2116, %v2117
        %v2119 = vmul.f32 %v2050, %v2025
        %v2120 = vmul.f32 %v2055, %v2045
        %v2121 = vadd.f32 %v2119, %v2120
        %v2122 = vmul.f32 %v2058, %v2064
        %v2123 = vadd.f32 %v2121, %v2122
        %v2124 = vadd.f32 %v2123, %v2064
        %v2125 = vmul.f32 %v2069, %v2069
        %v2126 = vmul.f32 %v2074, %v2090
        %v2127 = vadd.f32 %v2125, %v2126
        %v2128 = vmul.f32 %v2079, %v2110
        %v2129 = vadd.f32 %v2127, %v2128
        %v2130 = vmul.f32 %v2069, %v2074
        %v2131 = vmul.f32 %v2074, %v2094
        %v2132 = vadd.f32 %v2130, %v2131
        %v2133 = vmul.f32 %v2079, %v2115
        %v2134 = vadd.f32 %v2132, %v2133
        %v2135 = vmul.f32 %v2069, %v2079
        %v2136 = vmul.f32 %v2074, %v2099
        %v2137 = vadd.f32 %v2135, %v2136
        %v2138 = vmul.f32 %v2079, %v2118
        %v2139 = vadd.f32 %v2137, %v2138
        %v2140 = vmul.f32 %v2069, %v2085
        %v2141 = vmul.f32 %v2074, %v2105
        %v2142 = vadd.f32 %v2140, %v2141
        %v2143 = vmul.f32 %v2079, %v2124
        %v2144 = vadd.f32 %v2142, %v2143
        %v2145 = vadd.f32 %v2144, %v2085
        %v2146 = vmul.f32 %v2090, %v2069
        %v2147 = vmul.f32 %v2094, %v2090
        %v2148 = vadd.f32 %v2146, %v2147
        %v2149 = vmul.f32 %v2099, %v2110
        %v2150 = vadd.f32 %v2148, %v2149
        %v2151 = vmul.f32 %v2094, %v2094
        %v2152 = vadd.f32 %v2126, %v2151
        %v2153 = vmul.f32 %v2099, %v2115
        %v2154 = vadd.f32 %v2152, %v2153
        %v2155 = vmul.f32 %v2090, %v2079
        %v2156 = vmul.f32 %v2094, %v2099
        %v2157 = vadd.f32 %v2155, %v2156
        %v2158 = vmul.f32 %v2099, %v2118
        %v2159 = vadd.f32 %v2157, %v2158
        %v2160 = vmul.f32 %v2090, %v2085
        %v2161 = vmul.f32 %v2094, %v2105
        %v2162 = vadd.f32 %v2160, %v2161
        %v2163 = vmul.f32 %v2099, %v2124
        %v2164 = vadd.f32 %v2162, %v2163
        %v2165 = vadd.f32 %v2164, %v2105
        %v2166 = vmul.f32 %v2110, %v2069
        %v2167 = vmul.f32 %v2115, %v2090
        %v2168 = vadd.f32 %v2166, %v2167
        %v2169 = vmul.f32 %v2118, %v2110
        %v2170 = vadd.f32 %v2168, %v2169
        %v2171 = vmul.f32 %v2110, %v2074
        %v2172 = vmul.f32 %v2115, %v2094
        %v2173 = vadd.f32 %v2171, %v2172
        %v2174 = vmul.f32 %v2118, %v2115
        %v2175 = vadd.f32 %v2173, %v2174
        %v2176 = vadd.f32 %v2128, %v2153
        %v2177 = vmul.f32 %v2118, %v2118
        %v2178 = vadd.f32 %v2176, %v2177
        %v2179 = vmul.f32 %v2110, %v2085
        %v2180 = vmul.f32 %v2115, %v2105
        %v2181 = vadd.f32 %v2179, %v2180
        %v2182 = vmul.f32 %v2118, %v2124
        %v2183 = vadd.f32 %v2181, %v2182
        %v2184 = vadd.f32 %v2183, %v2124
        %v2185 = vmul.f32 %v2129, %v2129
        %v2186 = vmul.f32 %v2134, %v2150
        %v2187 = vadd.f32 %v2185, %v2186
        %v2188 = vmul.f32 %v2139, %v2170
        %v2189 = vadd.f32 %v2187, %v2188
        %v2190 = vmul.f32 %v2129, %v2134
        %v2191 = vmul.f32 %v2134, %v2154
        %v2192 = vadd.f32 %v2190, %v2191
        %v2193 = vmul.f32 %v2139, %v2175
        %v2194 = vadd.f32 %v2192, %v2193
        %v2195 = vmul.f32 %v2129, %v2139
        %v2196 = vmul.f32 %v2134, %v2159
        %v2197 = vadd.f32 %v2195, %v2196
        %v2198 = vmul.f32 %v2139, %v2178
        %v2199 = vadd.f32 %v2197, %v2198
        %v2200 = vmul.f32 %v2129, %v2145
        %v2201 = vmul.f32 %v2134, %v2165
        %v2202 = vadd.f32 %v2200, %v2201
        %v2203 = vmul.f32 %v2139, %v2184
        %v2204 = vadd.f32 %v2202, %v2203
        %v2205 = vadd.f32 %v2204, %v2145
        %v2206 = vmul.f32 %v2150, %v2129
        %v2207 = vmul.f32 %v2154, %v2150
        %v2208 = vadd.f32 %v2206, %v2207
        %v2209 = vmul.f32 %v2159, %v2170
        %v2210 = vadd.f32 %v2208, %v2209
        %v2211 = vmul.f32 %v2154, %v2154
        %v2212 = vadd.f32 %v2186, %v2211
        %v2213 = vmul.f32 %v2159, %v2175
        %v2214 = vadd.f32 %v2212, %v2213
        %v2215 = vmul.f32 %v2150, %v2139
        %v2216 = vmul.f32 %v2154, %v2159
        %v2217 = vadd.f32 %v2215, %v2216
        %v2218 = vmul.f32 %v2159, %v2178
        %v2219 = vadd.f32 %v2217, %v2218
        %v2220 = vmul.f32 %v2150, %v2145
        %v2221 = vmul.f32 %v2154, %v2165
        %v2222 = vadd.f32 %v2220, %v2221
        %v2223 = vmul.f32 %v2159, %v2184
        %v2224 = vadd.f32 %v2222, %v2223
        %v2225 = vadd.f32 %v2224, %v2165
        %v2226 = vmul.f32 %v2170, %v2129
        %v2227 = vmul.f32 %v2175, %v2150
        %v2228 = vadd.f32 %v2226, %v2227
        %v2229 = vmul.f32 %v2178, %v2170
        %v2230 = vadd.f32 %v2228, %v2229
        %v2231 = vmul.f32 %v2170, %v2134
        %v2232 = vmul.f32 %v2175, %v2154
        %v2233 = vadd.f32 %v2231, %v2232
        %v2234 = vmul.f32 %v2178, %v2175
        %v2235 = vadd.f32 %v2233, %v2234
        %v2236 = vadd.f32 %v2188, %v2213
        %v2237 = vmul.f32 %v2178, %v2178
        %v2238 = vadd.f32 %v2236, %v2237
        %v2239 = vmul.f32 %v2170, %v2145
        %v2240 = vmul.f32 %v2175, %v2165
        %v2241 = vadd.f32 %v2239, %v2240
        %v2242 = vmul.f32 %v2178, %v2184
        %v2243 = vadd.f32 %v2241, %v2242
        %v2244 = vadd.f32 %v2243, %v2184
        %s2245 = scalar_lea.vmem %s326, 8 [#allocation5]
        %v2246 = vld [vmem:[%s2245] sm:$0xff]
        %s2247 = scalar_lea.vmem %s326, %s1426 [#allocation5]
        %v2248 = vld [vmem:[%s2247] sm:$0xff]
        %s2249 = scalar_lea.vmem %s326, %s1453 [#allocation5]
        %v2250 = vld [vmem:[%s2249] sm:$0xff]
        %v2251 = vmul.f32 %v2189, %v2246
        %v2252 = vmul.f32 %v2194, %v2248
        %v2253 = vadd.f32 %v2251, %v2252
        %v2254 = vmul.f32 %v2199, %v2250
        %v2255 = vadd.f32 %v2253, %v2254
        %v2256 = vadd.f32 %v2255, %v2205
        %v2257 = vmul.f32 %v2210, %v2246
        %v2258 = vmul.f32 %v2214, %v2248
        %v2259 = vadd.f32 %v2257, %v2258
        %v2260 = vmul.f32 %v2219, %v2250
        %v2261 = vadd.f32 %v2259, %v2260
        %v2262 = vadd.f32 %v2261, %v2225
        %v2263 = vmul.f32 %v2230, %v2246
        %v2264 = vmul.f32 %v2235, %v2248
        %v2265 = vadd.f32 %v2263, %v2264
        %v2266 = vmul.f32 %v2238, %v2250
        %v2267 = vadd.f32 %v2265, %v2266
        %v2268 = vadd.f32 %v2267, %v2244
        %v2269 = vmul.f32 %v2268, 8.0
        %v2270 = vadd.f32 %v2269, 7.5
        %s2271 = scalar_lea.vmem %s350, 8 [#allocation6]
        %2272 = vst [vmem:[%s2271] sm:$0xff] %v2270
        %v2273 = vmul.f32 %v2262, 8.0
        %v2274 = vadd.f32 %v2273, 7.5
        %s2275 = scalar_lea.vmem %s350, %s1426 [#allocation6]
        %2276 = vst [vmem:[%s2275] sm:$0xff] %v2274
        %v2277 = vmul.f32 %v2256, 8.0
        %v2278 = vadd.f32 %v2277, 7.5
        %s2279 = scalar_lea.vmem %s350, %s1453 [#allocation6]
        %2280 = vst [vmem:[%s2279] sm:$0xff] %v2278
        %s2281 = sand.u32 %s96, 1
        %s2282 = sand.u32 %s96, 1
        %s2283 = smul.addr %s2282, 48
        %s2284 = scalar_lea.vmem [#allocation6], %s2283
        // Predicated region
        $region113: #{polyrigid_forward.1} parent=99 // pred_check
          %p2285 = pneg %p106
        $region114: #{polyrigid_forward.1} parent=99 // pred_check_branch
          %2287 = sbr.rel (%p2285) target = $region116
        $region115: #{polyrigid_forward.1} parent=99 // pred_region
          %s2288 = smul.u32 2, %s15
          %s2289 = smul.addr %s2288, 8
          %s2290 = scalar_lea.vmem %s3, %s2289
          // Predicated region
          $region117: #{polyrigid_forward.1} parent=115 // pred_check
            _
          $region118: #{polyrigid_forward.1} parent=115 // pred_check_branch
            %2292 = sbr.rel (0) target = $region120
          $region119: #{polyrigid_forward.1} parent=115 // pred_region
            // Predicated region
            $region121: #{polyrigid_forward.1} parent=119 // pred_check
              _
            $region122: #{polyrigid_forward.1} parent=119 // pred_check_branch
              %2294 = sbr.rel (0) target = $region124
            $region123: #{polyrigid_forward.1} parent=119 // pred_region
              // Predicated region
              $region136: #{polyrigid_forward.1} parent=123 // pred_check
                _
              $region137: #{polyrigid_forward.1} parent=123 // pred_check_branch
                %2320 = sbr.rel (0) target = $region139
              $region138: #{polyrigid_forward.1} parent=123 // pred_region
                loop: start=0, step=1, limit=1
                $region140: #{polyrigid_forward.1} parent=138 // loop_pre_header
                  _
                $region141: #{polyrigid_forward.1} parent=138 // loop_header
                  %s2322 = sphi 0, %s2326
                  %p2323 = scmp.ge.s32.totalorder %s2322, 1
                  %s2327 = sphi %s2284, %s2284
                  %s2328 = sphi %s2290, %s2290
                $region142: #{polyrigid_forward.1} parent=138 // loop_header_branch
                  %2325 = sbr.rel (%p2323) target = $region146
                $region143: #{polyrigid_forward.1} parent=138 // loop_body
                  %v2329 = vld [vmem:[%s2327] sm:$0xff]
                  %2330 = vst [vmem:[%s2328] sm:$0xff] %v2329
                  %v2331 = vld [vmem:[%s2327 + $0x8] sm:$0xff]
                  %2332 = vst [vmem:[%s2328 + $0x8] sm:$0xff] %v2331
                  %v2333 = vld [vmem:[%s2327 + $0x10] sm:$0xff]
                  %2334 = vst [vmem:[%s2328 + $0x20] sm:$0xff] %v2333
                  %v2335 = vld [vmem:[%s2327 + $0x18] sm:$0xff]
                  %2336 = vst [vmem:[%s2328 + $0x28] sm:$0xff] %v2335
                  %v2337 = vld [vmem:[%s2327 + $0x20] sm:$0xff]
                  %2338 = vst [vmem:[%s2328 + $0x40] sm:$0xff] %v2337
                  %v2339 = vld [vmem:[%s2327 + $0x28] sm:$0xff]
                  %2340 = vst [vmem:[%s2328 + $0x48] sm:$0xff] %v2339
                $region144: #{polyrigid_forward.1} parent=138 // loop_footer
                  %s2326 = sadd.s32 1, %s2322
                $region145: #{polyrigid_forward.1} parent=138 // loop_footer_branch
                  %2321 = sbr.rel target = $region141
                $region146: #{polyrigid_forward.1} parent=138 // loop_exit
                  _
              $region139: #{polyrigid_forward.1} parent=123 // pred_fallthru
                _
              // Predicated region
              $region147: #{polyrigid_forward.1} parent=123 // pred_check
                _
              $region148: #{polyrigid_forward.1} parent=123 // pred_check_branch
                %2342 = sbr.rel target = $region150
              $region149: #{polyrigid_forward.1} parent=123 // pred_region
                _
              $region150: #{polyrigid_forward.1} parent=123 // pred_fallthru
                _
            $region124: #{polyrigid_forward.1} parent=119 // pred_fallthru
              _
            // Predicated region
            $region125: #{polyrigid_forward.1} parent=119 // pred_check
              _
            $region126: #{polyrigid_forward.1} parent=119 // pred_check_branch
              %2296 = sbr.rel target = $region128
            $region127: #{polyrigid_forward.1} parent=119 // pred_region
              %s2298 = ssub.s32 256, 1
              loop: start=0, step=1, limit=1
              $region129: #{polyrigid_forward.1} parent=127 // loop_pre_header
                _
              $region130: #{polyrigid_forward.1} parent=127 // loop_header
                %s2300 = sphi 0, %s2304
                %p2301 = scmp.ge.s32.totalorder %s2300, 1
                %s2305 = sphi %s2284, %s2284
                %s2306 = sphi %s2290, %s2290
              $region131: #{polyrigid_forward.1} parent=127 // loop_header_branch
                %2303 = sbr.rel (%p2301) target = $region135
              $region132: #{polyrigid_forward.1} parent=127 // loop_body
                %v2307 = vld [vmem:[%s2305] sm:%s2298]
                %2308 = vst [vmem:[%s2306] sm:%s2298] %v2307
                %v2309 = vld [vmem:[%s2305 + $0x8] sm:%s2298]
                %2310 = vst [vmem:[%s2306 + $0x8] sm:%s2298] %v2309
                %v2311 = vld [vmem:[%s2305 + $0x10] sm:%s2298]
                %2312 = vst [vmem:[%s2306 + $0x20] sm:%s2298] %v2311
                %v2313 = vld [vmem:[%s2305 + $0x18] sm:%s2298]
                %2314 = vst [vmem:[%s2306 + $0x28] sm:%s2298] %v2313
                %v2315 = vld [vmem:[%s2305 + $0x20] sm:%s2298]
                %2316 = vst [vmem:[%s2306 + $0x40] sm:%s2298] %v2315
                %v2317 = vld [vmem:[%s2305 + $0x28] sm:%s2298]
                %2318 = vst [vmem:[%s2306 + $0x48] sm:%s2298] %v2317
              $region133: #{polyrigid_forward.1} parent=127 // loop_footer
                %s2304 = sadd.s32 1, %s2300
              $region134: #{polyrigid_forward.1} parent=127 // loop_footer_branch
                %2299 = sbr.rel target = $region130
              $region135: #{polyrigid_forward.1} parent=127 // loop_exit
                _
            $region128: #{polyrigid_forward.1} parent=119 // pred_fallthru
              _
          $region120: #{polyrigid_forward.1} parent=115 // pred_fallthru
            _
          %2343 = vnop
        $region116: #{polyrigid_forward.1} parent=99 // pred_fallthru
          _
      $region100: #{polyrigid_forward.1} parent=5 // pred_fallthru
        _
      %p2344 = scmp.le.s32.totalorder 2, %s10
      // Predicated region
      $region151: #{polyrigid_forward.1} parent=5 // pred_check
        %p2345 = pneg %p2344
      $region152: #{polyrigid_forward.1} parent=5 // pred_check_branch
        %2347 = sbr.rel (%p2345) target = $region154
      $region153: #{polyrigid_forward.1} parent=5 // pred_region
        %s2348 = ssub.s32 %s10, 2
        // Predicated region
        $region155: #{polyrigid_forward.1} parent=153 // pred_check
          %p2349 = pneg %p112
        $region156: #{polyrigid_forward.1} parent=153 // pred_check_branch
          %2351 = sbr.rel (%p2349) target = $region158
        $region157: #{polyrigid_forward.1} parent=153 // pred_region
          %s2352 = sand.u32 %s97, 1
          %s2353 = sand.u32 %s97, 1
          %s2354 = smul.addr %s2353, 48
          %s2355 = scalar_lea.vmem [#allocation6], %s2354
        $region158: #{polyrigid_forward.1} parent=153 // pred_fallthru
          _
      $region154: #{polyrigid_forward.1} parent=5 // pred_fallthru
        _
    $region6: #{polyrigid_forward.1} parent=1 // loop_footer
      %s14 = sadd.s32 1, %s10
    $region7: #{polyrigid_forward.1} parent=1 // loop_footer_branch
      %9 = sbr.rel target = $region3
    $region8: #{polyrigid_forward.1} parent=1 // loop_exit
      _
    %2356 = vsyncpa [#allocation3], 1
    %s2357 = scalar_lea.sflag [#allocation3], 1
    %2358 = vsyncpa %s2357, 1

</llo_original>
